<compile_context>
chip_gen: v7x
topology: tpu7x:2x2x1
jax: 0.10.0
libtpu: 0.0.40
codegen_flags: <defaults>
</compile_context>

<pallas_src>
import jax
import jax.numpy as jnp
from jax.experimental import pallas as pl
from jax.experimental.pallas import tpu as pltpu


def _round_up(x, m):
    return ((x + m - 1) // m) * m


def _ceil_div(a, b):
    return -(-a // b)


# ---------------------------------------------------------------------------
# Kernel
# ---------------------------------------------------------------------------
def airl_discrim_kernel(
    s_ref,      # (S, TB)   states, transposed (batch on lanes)
    ns_ref,     # (S, TB)   next_states, transposed
    aux_ref,    # (2, TB)   row 0 = gamma*(1-dones), row 1 = log_pis
    w1_ref,     # (2H, S)   fused layer-1 weight (transposed)
    b1_ref,     # (2H, 1)
    w2_ref,     # (2H, 2H)  fused block-diagonal layer-2 weight (transposed)
    b2_ref,     # (2H, 1)
    w3_ref,     # (2, 2H)   row 0 -> g(x)-h(x), row 1 -> h(x)
    b3_ref,     # (2, 1)    row 0 = gb3-hb3,    row 1 = hb3
    out_ref,    # (1, TB)
):
    tb = s_ref.shape[-1]
    hp = jax.lax.Precision.HIGHEST

    # Single fused pass over [states | next_states] on the lane axis.
    x = jnp.concatenate([s_ref[...], ns_ref[...]], axis=1)            # (S, 2*TB)

    disc = aux_ref[0:1, :]        # gamma * (1 - dones)   (1, TB)
    log_pis = aux_ref[1:2, :]     # (1, TB)

    h1 = jnp.maximum(
        jnp.dot(w1_ref[...], x, preferred_element_type=jnp.float32,
                precision=hp) + b1_ref[...], 0.0)                     # (2H, 2*TB)
    h2 = jnp.maximum(
        jnp.dot(w2_ref[...], h1, preferred_element_type=jnp.float32,
                precision=hp) + b2_ref[...], 0.0)                     # (2H, 2*TB)
    out3 = jnp.dot(w3_ref[...], h2, preferred_element_type=jnp.float32,
                   precision=hp) + b3_ref[...]                        # (2, 2*TB)

    diff_s = out3[0:1, 0:tb]            # g(s) - h(s)          (1, TB)
    v_ns = out3[1:2, tb:2 * tb]         # h(next_states)       (1, TB)

    out_ref[...] = (diff_s + disc * v_ns - log_pis).astype(out_ref.dtype)


# ---------------------------------------------------------------------------
# Wrapper
# ---------------------------------------------------------------------------
def pack_airl_params(params):
    """Pack the 12 (g, h) weight/bias arrays into 6 fused, transposed arrays."""
    (gw1, gb1, gw2, gb2, gw3, gb3,
     hw1, hb1, hw2, hb2, hw3, hb3) = params
    f32 = jnp.float32
    H = gw2.shape[0]
    zeros = jnp.zeros((H, H), f32)

    w1T = jnp.concatenate([gw1, hw1], axis=1).T.astype(f32)          # (2H, S)
    b1T = jnp.concatenate([gb1, hb1], axis=1).T.astype(f32)          # (2H, 1)

    w2 = jnp.concatenate(
        [jnp.concatenate([gw2, zeros], axis=1),
         jnp.concatenate([zeros, hw2], axis=1)], axis=0)             # (2H, 2H) block-diag
    w2T = w2.T.astype(f32)
    b2T = jnp.concatenate([gb2, hb2], axis=1).T.astype(f32)          # (2H, 1)

    w3T = jnp.concatenate(
        [jnp.concatenate([gw3, -hw3], axis=0).T,                     # row 0: g - h
         jnp.concatenate([jnp.zeros_like(gw3), hw3], axis=0).T],     # row 1: h
        axis=0).astype(f32)                                          # (2, 2H)
    b3 = jnp.concatenate([gb3 - hb3, hb3], axis=1).T.astype(f32)     # (2, 1)
    return w1T, b1T, w2T, b2T, w3T, b3


def airl_discrim_forward(states, dones, log_pis, next_states, params, gamma,
                         *, batch_tile=2048):
    B, S = states.shape
    w1T, b1T, w2T, b2T, w3T, b3 = pack_airl_params(params)

    # ---- Tile / grid selection -------------------------------------------
    # * single tile whenever the (128-padded) batch fits batch_tile;
    # * otherwise an even number of balanced tiles (v7x: both TensorCores);
    # * adaptive tb keeps padding waste below 128 rows per tile.
    b128 = _round_up(max(B, 1), 128)
    max_tb = max(128, _round_up(batch_tile, 128))
    n_tiles = _ceil_div(b128, max_tb)
    if n_tiles > 1 and n_tiles % 2 == 1:
        n_tiles += 1
    tb = _round_up(_ceil_div(b128, n_tiles), 128)
    b_pad = tb * n_tiles

    # Layout plumbing: batch goes on the 128-lane axis.
    # TODO(synk): at very large B on v5e this transpose/pad pass is an extra
    # HBM round-trip; fuse into the upstream producer if it shows up.
    def pad_t(x):  # (B, F) -> (F, b_pad) float32
        xt = x.astype(jnp.float32).T
        if b_pad != B:
            xt = jnp.pad(xt, ((0, 0), (0, b_pad - B)))
        return xt

    sT = pad_t(states)
    nsT = pad_t(next_states)
    # aux row 0 = gamma*(1-dones) (epilogue multiply folded here), row 1 = log_pis.
    auxT = pad_t(jnp.concatenate(
        [float(gamma) * (1.0 - dones.astype(jnp.float32)),
         log_pis.astype(jnp.float32)], axis=1))                      # (2, b_pad)

    def batched(feat):
        return pl.BlockSpec((feat, tb), lambda i: (0, i))

    def resident(arr):
        return pl.BlockSpec(arr.shape, lambda i: (0, 0))

    out = pl.pallas_call(
        airl_discrim_kernel,
        out_shape=jax.ShapeDtypeStruct((1, b_pad), jnp.float32),
        grid_spec=pltpu.PrefetchScalarGridSpec(
            num_scalar_prefetch=0,
            grid=(n_tiles,),
            in_specs=[
                batched(S),        # states^T
                batched(S),        # next_states^T
                batched(2),        # [gamma*(1-dones); log_pis]^T
                resident(w1T), resident(b1T),
                resident(w2T), resident(b2T),
                resident(w3T), resident(b3),
            ],
            out_specs=pl.BlockSpec((1, tb), lambda i: (0, i)),
        ),
        compiler_params=pltpu.CompilerParams(
            dimension_semantics=("parallel",),
            vmem_limit_bytes=32 << 20),
    )(sT, nsT, auxT, w1T, b1T, w2T, b2T, w3T, b3)

    # Drop the padded tail and restore the PyTorch (B, 1) shape.
    return out[0, :B].reshape(B, 1)


# ---------------------------------------------------------------------------
# Reference & demo
# ---------------------------------------------------------------------------
def init_mlp_params(key, input_dim, hidden_units, output_dim):
    """Deterministic init mimicking PyTorch Linear default (uniform +-1/sqrt(fan_in))."""
    dims = [input_dim] + list(hidden_units) + [output_dim]
    params = []
    for i in range(len(dims) - 1):
        key, kw, kb = jax.random.split(key, 3)
        bound = 1.0 / jnp.sqrt(dims[i])
        w = jax.random.uniform(kw, (dims[i], dims[i + 1]), jnp.float32, -bound, bound)
        b = jax.random.uniform(kb, (1, dims[i + 1]), jnp.float32, -bound, bound)
        params += [w, b]
    return params, key


def reference_forward(states, dones, log_pis, next_states, params, gamma):
    (gw1, gb1, gw2, gb2, gw3, gb3,
     hw1, hb1, hw2, hb2, hw3, hb3) = params
    hp = jax.lax.Precision.HIGHEST

    def mlp(x, w1, b1, w2, b2, w3, b3):
        h1 = jnp.maximum(jnp.dot(x, w1, precision=hp) + b1, 0.0)
        h2 = jnp.maximum(jnp.dot(h1, w2, precision=hp) + b2, 0.0)
        return jnp.dot(h2, w3, precision=hp) + b3

    rs = mlp(states, gw1, gb1, gw2, gb2, gw3, gb3)
    vs = mlp(states, hw1, hb1, hw2, hb2, hw3, hb3)
    nvs = mlp(next_states, hw1, hb1, hw2, hb2, hw3, hb3)
    return rs + gamma * (1.0 - dones) * nvs - vs - log_pis


if __name__ == "__main__":
    key = jax.random.PRNGKey(0)

    batch = 200            # deliberately not a multiple of the tile (exercises padding)
    state_shape = 16       # state_dim
    hidden_units = (64, 64)
    gamma = 0.99

    g_params, key = init_mlp_params(key, state_shape, hidden_units, 1)
    h_params, key = init_mlp_params(key, state_shape, hidden_units, 1)
    params = tuple(g_params + h_params)

    key, k1, k2, k3, k4 = jax.random.split(key, 5)
    states = jax.random.normal(k1, (batch, state_shape), jnp.float32)
    next_states = jax.random.normal(k2, (batch, state_shape), jnp.float32)
    dones = (jax.random.uniform(k3, (batch, 1)) < 0.3).astype(jnp.float32)
    log_pis = jax.random.normal(k4, (batch, 1), jnp.float32)

    ref = reference_forward(states, dones, log_pis, next_states, params, gamma)

    # Multi-tile path (batch_tile=128 -> 2 grid steps, ragged tail padded).
    out_multi = airl_discrim_forward(states, dones, log_pis, next_states, params,
                                     gamma, batch_tile=128)
    out_multi = jax.block_until_ready(out_multi)
    assert out_multi.shape == (batch, 1)
    assert jnp.allclose(out_multi, ref, atol=1e-4, rtol=1e-4), "multi-tile mismatch"

    # Default single-tile path (whole padded batch in one grid step).
    out_single = airl_discrim_forward(states, dones, log_pis, next_states, params,
                                      gamma)
    out_single = jax.block_until_ready(out_single)
    assert out_single.shape == (batch, 1)
    assert jnp.allclose(out_single, ref, atol=1e-4, rtol=1e-4), "single-tile mismatch"

    print("KERNEL_OK")
</pallas_src>

<mosaic_0001>
module attributes {stable_mosaic.version = 11 : i64} {
  func.func @airl_discrim_kernel(%arg0: i32, %arg1: memref<16x128xf32, #tpu.memory_space<vmem>>, %arg2: memref<16x128xf32, #tpu.memory_space<vmem>>, %arg3: memref<2x128xf32, #tpu.memory_space<vmem>>, %arg4: memref<128x16xf32, #tpu.memory_space<vmem>>, %arg5: memref<128x1xf32, #tpu.memory_space<vmem>>, %arg6: memref<128x128xf32, #tpu.memory_space<vmem>>, %arg7: memref<128x1xf32, #tpu.memory_space<vmem>>, %arg8: memref<2x128xf32, #tpu.memory_space<vmem>>, %arg9: memref<2x1xf32, #tpu.memory_space<vmem>>, %arg10: memref<1x128xf32, #tpu.memory_space<vmem>>) attributes {dimension_semantics = [#tpu.dimension_semantics<parallel>], iteration_bounds = array<i64: 2>, scalar_prefetch = 0 : i64, scratch_operands = 0 : i64, tpu.core_type = #tpu.core_type<tc>, window_params = [{transform_indices = @transform_0, window_bounds = array<i64: 16, 128>}, {transform_indices = @transform_1, window_bounds = array<i64: 16, 128>}, {transform_indices = @transform_2, window_bounds = array<i64: 2, 128>}, {pipeline_mode = #tpu.pipeline_mode<synchronous>, transform_indices = @transform_3, window_bounds = array<i64: 128, 16>}, {pipeline_mode = #tpu.pipeline_mode<synchronous>, transform_indices = @transform_4, window_bounds = array<i64: 128, 1>}, {pipeline_mode = #tpu.pipeline_mode<synchronous>, transform_indices = @transform_5, window_bounds = array<i64: 128, 128>}, {pipeline_mode = #tpu.pipeline_mode<synchronous>, transform_indices = @transform_6, window_bounds = array<i64: 128, 1>}, {pipeline_mode = #tpu.pipeline_mode<synchronous>, transform_indices = @transform_7, window_bounds = array<i64: 2, 128>}, {pipeline_mode = #tpu.pipeline_mode<synchronous>, transform_indices = @transform_8, window_bounds = array<i64: 2, 1>}, {transform_indices = @transform_9, window_bounds = array<i64: 1, 128>}]} {
    %c0 = arith.constant 0 : index
    %c0_0 = arith.constant 0 : index
    %0 = vector.load %arg1[%c0, %c0_0] : memref<16x128xf32, #tpu.memory_space<vmem>>, vector<16x128xf32>
    %c0_1 = arith.constant 0 : index
    %c0_2 = arith.constant 0 : index
    %1 = vector.load %arg2[%c0_1, %c0_2] : memref<16x128xf32, #tpu.memory_space<vmem>>, vector<16x128xf32>
    %2 = tpu.concatenate %0, %1 in 1 : vector<16x128xf32>, vector<16x128xf32> -> vector<16x256xf32>
    %c0_3 = arith.constant 0 : index
    %c0_4 = arith.constant 0 : index
    %3 = vector.load %arg3[%c0_3, %c0_4] : memref<2x128xf32, #tpu.memory_space<vmem>>, vector<1x128xf32>
    %c1 = arith.constant 1 : index
    %c0_5 = arith.constant 0 : index
    %4 = vector.load %arg3[%c1, %c0_5] : memref<2x128xf32, #tpu.memory_space<vmem>>, vector<1x128xf32>
    %c0_6 = arith.constant 0 : index
    %c0_7 = arith.constant 0 : index
    %5 = vector.load %arg4[%c0_6, %c0_7] : memref<128x16xf32, #tpu.memory_space<vmem>>, vector<128x16xf32>
    %cst = arith.constant dense<0.000000e+00> : vector<128x256xf32>
    %6 = tpu.matmul %5, %2, %cst {dimension_numbers = #tpu.dot_dimension_numbers<[1], [0], [0], [1], [0, 0, 1, 1], [], []>, precision = #tpu.contract_precision<fp32>} : vector<128x16xf32>, vector<16x256xf32>, vector<128x256xf32> -> vector<128x256xf32>
    %c0_8 = arith.constant 0 : index
    %c0_9 = arith.constant 0 : index
    %7 = vector.load %arg5[%c0_8, %c0_9] : memref<128x1xf32, #tpu.memory_space<vmem>>, vector<128x1xf32>
    %8 = vector.broadcast %7 : vector<128x1xf32> to vector<128x256xf32>
    %9 = arith.addf %6, %8 : vector<128x256xf32>
    %cst_10 = arith.constant 0.000000e+00 : f32
    %10 = vector.broadcast %cst_10 : f32 to vector<128x256xf32>
    %11 = arith.maximumf %9, %10 : vector<128x256xf32>
    %c0_11 = arith.constant 0 : index
    %c0_12 = arith.constant 0 : index
    %12 = vector.load %arg6[%c0_11, %c0_12] : memref<128x128xf32, #tpu.memory_space<vmem>>, vector<128x128xf32>
    %cst_13 = arith.constant dense<0.000000e+00> : vector<128x256xf32>
    %13 = tpu.matmul %12, %11, %cst_13 {dimension_numbers = #tpu.dot_dimension_numbers<[1], [0], [0], [1], [0, 0, 1, 1], [], []>, precision = #tpu.contract_precision<fp32>} : vector<128x128xf32>, vector<128x256xf32>, vector<128x256xf32> -> vector<128x256xf32>
    %c0_14 = arith.constant 0 : index
    %c0_15 = arith.constant 0 : index
    %14 = vector.load %arg7[%c0_14, %c0_15] : memref<128x1xf32, #tpu.memory_space<vmem>>, vector<128x1xf32>
    %15 = vector.broadcast %14 : vector<128x1xf32> to vector<128x256xf32>
    %16 = arith.addf %13, %15 : vector<128x256xf32>
    %cst_16 = arith.constant 0.000000e+00 : f32
    %17 = vector.broadcast %cst_16 : f32 to vector<128x256xf32>
    %18 = arith.maximumf %16, %17 : vector<128x256xf32>
    %c0_17 = arith.constant 0 : index
    %c0_18 = arith.constant 0 : index
    %19 = vector.load %arg8[%c0_17, %c0_18] : memref<2x128xf32, #tpu.memory_space<vmem>>, vector<2x128xf32>
    %cst_19 = arith.constant dense<0.000000e+00> : vector<2x256xf32>
    %20 = tpu.matmul %19, %18, %cst_19 {dimension_numbers = #tpu.dot_dimension_numbers<[1], [0], [0], [1], [0, 0, 1, 1], [], []>, precision = #tpu.contract_precision<fp32>} : vector<2x128xf32>, vector<128x256xf32>, vector<2x256xf32> -> vector<2x256xf32>
    %c0_20 = arith.constant 0 : index
    %c0_21 = arith.constant 0 : index
    %21 = vector.load %arg9[%c0_20, %c0_21] : memref<2x1xf32, #tpu.memory_space<vmem>>, vector<2x1xf32>
    %22 = vector.broadcast %21 : vector<2x1xf32> to vector<2x256xf32>
    %23 = arith.addf %20, %22 : vector<2x256xf32>
    %24 = vector.extract_strided_slice %23 {offsets = [0, 0], sizes = [1, 128], strides = [1, 1]} : vector<2x256xf32> to vector<1x128xf32>
    %25 = vector.extract_strided_slice %23 {offsets = [1, 128], sizes = [1, 128], strides = [1, 1]} : vector<2x256xf32> to vector<1x128xf32>
    %26 = arith.mulf %3, %25 : vector<1x128xf32>
    %27 = arith.addf %24, %26 : vector<1x128xf32>
    %28 = arith.subf %27, %4 : vector<1x128xf32>
    %c0_22 = arith.constant 0 : index
    %c0_23 = arith.constant 0 : index
    %29 = vector.load %arg10[%c0_22, %c0_23] : memref<1x128xf32, #tpu.memory_space<vmem>>, vector<1x128xf32>
    tpu.vector_store %arg10[%c0_22, %c0_23], %28 {strides = array<i32>} : memref<1x128xf32, #tpu.memory_space<vmem>>, vector<1x128xf32>,
    return
  }
  func.func @transform_0(%arg0: i32) -> (i32, i32) {
    %c0_i32 = arith.constant 0 : i32
    %c0_i32_0 = arith.constant 0 : i32
    return %c0_i32, %arg0 : i32, i32
  }
  func.func @transform_1(%arg0: i32) -> (i32, i32) {
    %c0_i32 = arith.constant 0 : i32
    %c0_i32_0 = arith.constant 0 : i32
    return %c0_i32, %arg0 : i32, i32
  }
  func.func @transform_2(%arg0: i32) -> (i32, i32) {
    %c0_i32 = arith.constant 0 : i32
    %c0_i32_0 = arith.constant 0 : i32
    return %c0_i32, %arg0 : i32, i32
  }
  func.func @transform_3(%arg0: i32) -> (i32, i32) {
    %c0_i32 = arith.constant 0 : i32
    %c0_i32_0 = arith.constant 0 : i32
    %c0_i32_1 = arith.constant 0 : i32
    return %c0_i32, %c0_i32_0 : i32, i32
  }
  func.func @transform_4(%arg0: i32) -> (i32, i32) {
    %c0_i32 = arith.constant 0 : i32
    %c0_i32_0 = arith.constant 0 : i32
    %c0_i32_1 = arith.constant 0 : i32
    return %c0_i32, %c0_i32_0 : i32, i32
  }
  func.func @transform_5(%arg0: i32) -> (i32, i32) {
    %c0_i32 = arith.constant 0 : i32
    %c0_i32_0 = arith.constant 0 : i32
    %c0_i32_1 = arith.constant 0 : i32
    return %c0_i32, %c0_i32_0 : i32, i32
  }
  func.func @transform_6(%arg0: i32) -> (i32, i32) {
    %c0_i32 = arith.constant 0 : i32
    %c0_i32_0 = arith.constant 0 : i32
    %c0_i32_1 = arith.constant 0 : i32
    return %c0_i32, %c0_i32_0 : i32, i32
  }
  func.func @transform_7(%arg0: i32) -> (i32, i32) {
    %c0_i32 = arith.constant 0 : i32
    %c0_i32_0 = arith.constant 0 : i32
    %c0_i32_1 = arith.constant 0 : i32
    return %c0_i32, %c0_i32_0 : i32, i32
  }
  func.func @transform_8(%arg0: i32) -> (i32, i32) {
    %c0_i32 = arith.constant 0 : i32
    %c0_i32_0 = arith.constant 0 : i32
    %c0_i32_1 = arith.constant 0 : i32
    return %c0_i32, %c0_i32_0 : i32, i32
  }
  func.func @transform_9(%arg0: i32) -> (i32, i32) {
    %c0_i32 = arith.constant 0 : i32
    %c0_i32_0 = arith.constant 0 : i32
    return %c0_i32, %arg0 : i32, i32
  }
}

</mosaic_0001>

<llo_original>
// kernel: tpu_custom_call.1
$region0: #{tpu_custom_call.1}
  #allocation0 [shape = 'u32[]', space=smem, size = 0x4, offset = 0x4, fixed_abs, tag = 'smem constant byte address 0x4 - core index']
  #allocation1 [shape = 'u32[144,128]{1,0:T(1,128)}', space=vmem, size = 0x12000, scoped, tag = 'internal scratch']
  %s0 = inlined_call_operand.vmem [shape: f32[16,256], index: 0, kind: input, shape index: {}]
  %s1 = inlined_call_operand.vmem [shape: f32[16,256], index: 1, kind: input, shape index: {}]
  %s2 = inlined_call_operand.vmem [shape: f32[2,256], index: 2, kind: input, shape index: {}]
  %s3 = inlined_call_operand.vmem [shape: f32[128,16], index: 3, kind: input, shape index: {}]
  %s4 = inlined_call_operand.vmem [shape: f32[128,1], index: 4, kind: input, shape index: {}]
  %s5 = inlined_call_operand.vmem [shape: f32[128,128], index: 5, kind: input, shape index: {}]
  %s6 = inlined_call_operand.vmem [shape: f32[128,1], index: 6, kind: input, shape index: {}]
  %s7 = inlined_call_operand.vmem [shape: f32[2,128], index: 7, kind: input, shape index: {}]
  %s8 = inlined_call_operand.vmem [shape: f32[2,1], index: 8, kind: input, shape index: {}]
  %s9 = inlined_call_operand.hbm [shape: f32[1,256], index: 9, kind: output, shape index: {}]
  %s10 = sld [smem:[#allocation0]]
  $region145: #{tpu_custom_call.1} parent=0
    _
  %s12 = ssub.s32 1, %s10
  %s13 = scalar_select 0, %s12, %s10
  $region1: #{tpu_custom_call.1} parent=0
    #allocation2 [shape = 'u8[16384]{0}', space=vmem, size = 0x4000, scoped, tag = 'input window, operand 0']
    #allocation3 [shape = 'u8[16384]{0}', space=vmem, size = 0x4000, scoped, tag = 'input window, operand 1']
    #allocation4 [shape = 'u8[1024]{0}', space=vmem, size = 0x400, scoped, tag = 'output window, operand 0']
    #allocation5 [shape = 's32[2]{0}', space=sflag, size = 0x8, scoped, tag = 'scoped memory for tpu_custom_call.1']
    %14 = vsyncpa [#allocation5], 0
    %s15 = scalar_lea.sflag [#allocation5], 1
    %16 = vsyncpa %s15, 0
    loop: start=0, step=1, limit=4
    $region2: #{tpu_custom_call.1} parent=1 // loop_pre_header
      _
    $region3: #{tpu_custom_call.1} parent=1 // loop_header
      %s18 = sphi 0, %s22
      %p19 = scmp.ge.s32.totalorder %s18, 4
      %s28 = sphi 0, %s30
      %s31 = sphi 0, %s28
      %s32 = sphi 0, %s31
      %s48 = sphi 0, %s32
      %s54 = sphi 0, %s56
      %s57 = sphi 0, %s54
      %s58 = sphi 0, %s57
      %s74 = sphi 0, %s58
      %s80 = sphi 0, %s82
      %s83 = sphi 0, %s80
      %s84 = sphi 0, %s83
      %s100 = sphi 0, %s84
      %s104 = sphi 0, %s104
      %s106 = sphi 0, %s104
      %s107 = sphi 0, %s106
      %s121 = sphi 0, %s107
      %s125 = sphi 0, %s125
      %s127 = sphi 0, %s125
      %s128 = sphi 0, %s127
      %s142 = sphi 0, %s128
      %s146 = sphi 0, %s146
      %s148 = sphi 0, %s146
      %s149 = sphi 0, %s148
      %s163 = sphi 0, %s149
      %s167 = sphi 0, %s167
      %s169 = sphi 0, %s167
      %s170 = sphi 0, %s169
      %s184 = sphi 0, %s170
      %s188 = sphi 0, %s188
      %s190 = sphi 0, %s188
      %s191 = sphi 0, %s190
      %s205 = sphi 0, %s191
      %s209 = sphi 0, %s209
      %s211 = sphi 0, %s209
      %s212 = sphi 0, %s211
      %s226 = sphi 0, %s212
      %s232 = sphi 0, %s234
      %s235 = sphi 0, %s232
      %s236 = sphi 0, %s235
      %s252 = sphi 0, %s236
    $region4: #{tpu_custom_call.1} parent=1 // loop_header_branch
      %21 = sbr.rel (%p19) target = $region8
    $region5: #{tpu_custom_call.1} parent=1 // loop_body
      %s23 = ssub.s32 %s18, 1
      %s24 = ssub.s32 %s18, 2
      %s25 = sadd.s32 %s18, 1
      %s26 = ssub.s32 %s18, %s25
      %p27 = scmp.eq.s32.totalorder %s26, 0
      %s29 = sadd.s32 %s28, 1
      %s30 = scalar_select %p27, %s28, %s29
      %p33 = pneg %p27
      %p34 = scmp.eq.s32.totalorder %s18, 1
      %p35 = por %p33, %p34
      %p36 = scmp.ne.s32.totalorder %s28, %s31
      %p37 = scmp.eq.s32.totalorder %s18, 0
      %p38 = por %p36, %p37
      %p39 = scmp.ne.s32.totalorder %s28, %s31
      %p40 = scmp.eq.s32.totalorder %s23, 1
      %p41 = por %p39, %p40
      %p42 = scmp.ne.s32.totalorder %s31, %s32
      %p43 = scmp.eq.s32.totalorder %s23, 0
      %p44 = por %p42, %p43
      %p45 = scmp.ne.s32.totalorder %s31, %s32
      %p46 = scmp.eq.s32.totalorder %s24, 1
      %p47 = por %p45, %p46
      %p49 = scmp.ne.s32.totalorder %s32, %s48
      %p50 = scmp.eq.s32.totalorder %s24, 0
      %p51 = por %p49, %p50
      %s52 = ssub.s32 %s18, %s25
      %p53 = scmp.eq.s32.totalorder %s52, 0
      %s55 = sadd.s32 %s54, 1
      %s56 = scalar_select %p53, %s54, %s55
      %p59 = pneg %p53
      %p60 = scmp.eq.s32.totalorder %s18, 1
      %p61 = por %p59, %p60
      %p62 = scmp.ne.s32.totalorder %s54, %s57
      %p63 = scmp.eq.s32.totalorder %s18, 0
      %p64 = por %p62, %p63
      %p65 = scmp.ne.s32.totalorder %s54, %s57
      %p66 = scmp.eq.s32.totalorder %s23, 1
      %p67 = por %p65, %p66
      %p68 = scmp.ne.s32.totalorder %s57, %s58
      %p69 = scmp.eq.s32.totalorder %s23, 0
      %p70 = por %p68, %p69
      %p71 = scmp.ne.s32.totalorder %s57, %s58
      %p72 = scmp.eq.s32.totalorder %s24, 1
      %p73 = por %p71, %p72
      %p75 = scmp.ne.s32.totalorder %s58, %s74
      %p76 = scmp.eq.s32.totalorder %s24, 0
      %p77 = por %p75, %p76
      %s78 = ssub.s32 %s18, %s25
      %p79 = scmp.eq.s32.totalorder %s78, 0
      %s81 = sadd.s32 %s80, 1
      %s82 = scalar_select %p79, %s80, %s81
      %p85 = pneg %p79
      %p86 = scmp.eq.s32.totalorder %s18, 1
      %p87 = por %p85, %p86
      %p88 = scmp.ne.s32.totalorder %s80, %s83
      %p89 = scmp.eq.s32.totalorder %s18, 0
      %p90 = por %p88, %p89
      %p91 = scmp.ne.s32.totalorder %s80, %s83
      %p92 = scmp.eq.s32.totalorder %s23, 1
      %p93 = por %p91, %p92
      %p94 = scmp.ne.s32.totalorder %s83, %s84
      %p95 = scmp.eq.s32.totalorder %s23, 0
      %p96 = por %p94, %p95
      %p97 = scmp.ne.s32.totalorder %s83, %s84
      %p98 = scmp.eq.s32.totalorder %s24, 1
      %p99 = por %p97, %p98
      %p101 = scmp.ne.s32.totalorder %s84, %s100
      %p102 = scmp.eq.s32.totalorder %s24, 0
      %p103 = por %p101, %p102
      %s105 = sadd.s32 %s104, 1
      %p108 = scmp.eq.s32.totalorder %s18, 1
      %p109 = scmp.ne.s32.totalorder %s104, %s106
      %p110 = scmp.eq.s32.totalorder %s18, 0
      %p111 = por %p109, %p110
      %p112 = scmp.ne.s32.totalorder %s104, %s106
      %p113 = scmp.eq.s32.totalorder %s23, 1
      %p114 = por %p112, %p113
      %p115 = scmp.ne.s32.totalorder %s106, %s107
      %p116 = scmp.eq.s32.totalorder %s23, 0
      %p117 = por %p115, %p116
      %p118 = scmp.ne.s32.totalorder %s106, %s107
      %p119 = scmp.eq.s32.totalorder %s24, 1
      %p120 = por %p118, %p119
      %p122 = scmp.ne.s32.totalorder %s107, %s121
      %p123 = scmp.eq.s32.totalorder %s24, 0
      %p124 = por %p122, %p123
      %s126 = sadd.s32 %s125, 1
      %p129 = scmp.eq.s32.totalorder %s18, 1
      %p130 = scmp.ne.s32.totalorder %s125, %s127
      %p131 = scmp.eq.s32.totalorder %s18, 0
      %p132 = por %p130, %p131
      %p133 = scmp.ne.s32.totalorder %s125, %s127
      %p134 = scmp.eq.s32.totalorder %s23, 1
      %p135 = por %p133, %p134
      %p136 = scmp.ne.s32.totalorder %s127, %s128
      %p137 = scmp.eq.s32.totalorder %s23, 0
      %p138 = por %p136, %p137
      %p139 = scmp.ne.s32.totalorder %s127, %s128
      %p140 = scmp.eq.s32.totalorder %s24, 1
      %p141 = por %p139, %p140
      %p143 = scmp.ne.s32.totalorder %s128, %s142
      %p144 = scmp.eq.s32.totalorder %s24, 0
      %p145 = por %p143, %p144
      %s147 = sadd.s32 %s146, 1
      %p150 = scmp.eq.s32.totalorder %s18, 1
      %p151 = scmp.ne.s32.totalorder %s146, %s148
      %p152 = scmp.eq.s32.totalorder %s18, 0
      %p153 = por %p151, %p152
      %p154 = scmp.ne.s32.totalorder %s146, %s148
      %p155 = scmp.eq.s32.totalorder %s23, 1
      %p156 = por %p154, %p155
      %p157 = scmp.ne.s32.totalorder %s148, %s149
      %p158 = scmp.eq.s32.totalorder %s23, 0
      %p159 = por %p157, %p158
      %p160 = scmp.ne.s32.totalorder %s148, %s149
      %p161 = scmp.eq.s32.totalorder %s24, 1
      %p162 = por %p160, %p161
      %p164 = scmp.ne.s32.totalorder %s149, %s163
      %p165 = scmp.eq.s32.totalorder %s24, 0
      %p166 = por %p164, %p165
      %s168 = sadd.s32 %s167, 1
      %p171 = scmp.eq.s32.totalorder %s18, 1
      %p172 = scmp.ne.s32.totalorder %s167, %s169
      %p173 = scmp.eq.s32.totalorder %s18, 0
      %p174 = por %p172, %p173
      %p175 = scmp.ne.s32.totalorder %s167, %s169
      %p176 = scmp.eq.s32.totalorder %s23, 1
      %p177 = por %p175, %p176
      %p178 = scmp.ne.s32.totalorder %s169, %s170
      %p179 = scmp.eq.s32.totalorder %s23, 0
      %p180 = por %p178, %p179
      %p181 = scmp.ne.s32.totalorder %s169, %s170
      %p182 = scmp.eq.s32.totalorder %s24, 1
      %p183 = por %p181, %p182
      %p185 = scmp.ne.s32.totalorder %s170, %s184
      %p186 = scmp.eq.s32.totalorder %s24, 0
      %p187 = por %p185, %p186
      %s189 = sadd.s32 %s188, 1
      %p192 = scmp.eq.s32.totalorder %s18, 1
      %p193 = scmp.ne.s32.totalorder %s188, %s190
      %p194 = scmp.eq.s32.totalorder %s18, 0
      %p195 = por %p193, %p194
      %p196 = scmp.ne.s32.totalorder %s188, %s190
      %p197 = scmp.eq.s32.totalorder %s23, 1
      %p198 = por %p196, %p197
      %p199 = scmp.ne.s32.totalorder %s190, %s191
      %p200 = scmp.eq.s32.totalorder %s23, 0
      %p201 = por %p199, %p200
      %p202 = scmp.ne.s32.totalorder %s190, %s191
      %p203 = scmp.eq.s32.totalorder %s24, 1
      %p204 = por %p202, %p203
      %p206 = scmp.ne.s32.totalorder %s191, %s205
      %p207 = scmp.eq.s32.totalorder %s24, 0
      %p208 = por %p206, %p207
      %s210 = sadd.s32 %s209, 1
      %p213 = scmp.eq.s32.totalorder %s18, 1
      %p214 = scmp.ne.s32.totalorder %s209, %s211
      %p215 = scmp.eq.s32.totalorder %s18, 0
      %p216 = por %p214, %p215
      %p217 = scmp.ne.s32.totalorder %s209, %s211
      %p218 = scmp.eq.s32.totalorder %s23, 1
      %p219 = por %p217, %p218
      %p220 = scmp.ne.s32.totalorder %s211, %s212
      %p221 = scmp.eq.s32.totalorder %s23, 0
      %p222 = por %p220, %p221
      %p223 = scmp.ne.s32.totalorder %s211, %s212
      %p224 = scmp.eq.s32.totalorder %s24, 1
      %p225 = por %p223, %p224
      %p227 = scmp.ne.s32.totalorder %s212, %s226
      %p228 = scmp.eq.s32.totalorder %s24, 0
      %p229 = por %p227, %p228
      %s230 = ssub.s32 %s18, %s25
      %p231 = scmp.eq.s32.totalorder %s230, 0
      %s233 = sadd.s32 %s232, 1
      %s234 = scalar_select %p231, %s232, %s233
      %p237 = pneg %p231
      %p238 = scmp.eq.s32.totalorder %s18, 1
      %p239 = por %p237, %p238
      %p240 = scmp.ne.s32.totalorder %s232, %s235
      %p241 = scmp.eq.s32.totalorder %s18, 0
      %p242 = por %p240, %p241
      %p243 = scmp.ne.s32.totalorder %s232, %s235
      %p244 = scmp.eq.s32.totalorder %s23, 1
      %p245 = por %p243, %p244
      %p246 = scmp.ne.s32.totalorder %s235, %s236
      %p247 = scmp.eq.s32.totalorder %s23, 0
      %p248 = por %p246, %p247
      %p249 = scmp.ne.s32.totalorder %s235, %s236
      %p250 = scmp.eq.s32.totalorder %s24, 1
      %p251 = por %p249, %p250
      %p253 = scmp.ne.s32.totalorder %s236, %s252
      %p254 = scmp.eq.s32.totalorder %s24, 0
      %p255 = por %p253, %p254
      %p256 = scmp.le.s32.totalorder 1, %s18
      %p257 = scmp.lt.s32.totalorder %s18, 3
      %p258 = pnand %p256, %p257
      %p259 = pneg %p258
      // Predicated region
      $region9: #{tpu_custom_call.1} parent=5 // pred_check
        _
      $region10: #{tpu_custom_call.1} parent=5 // pred_check_branch
        %261 = sbr.rel (%p258) target = $region12
      $region11: #{tpu_custom_call.1} parent=5 // pred_region
        %s262 = ssub.s32 %s18, 1
        // Predicated region
        $region13: #{tpu_custom_call.1} parent=11 // pred_check
          %p263 = pneg %p117
        $region14: #{tpu_custom_call.1} parent=11 // pred_check_branch
          %265 = sbr.rel (%p263) target = $region16
        $region15: #{tpu_custom_call.1} parent=11 // pred_region
          _
        $region16: #{tpu_custom_call.1} parent=11 // pred_fallthru
          _
        // Predicated region
        $region17: #{tpu_custom_call.1} parent=11 // pred_check
          %p266 = pneg %p138
        $region18: #{tpu_custom_call.1} parent=11 // pred_check_branch
          %268 = sbr.rel (%p266) target = $region20
        $region19: #{tpu_custom_call.1} parent=11 // pred_region
          _
        $region20: #{tpu_custom_call.1} parent=11 // pred_fallthru
          _
        // Predicated region
        $region21: #{tpu_custom_call.1} parent=11 // pred_check
          %p269 = pneg %p159
        $region22: #{tpu_custom_call.1} parent=11 // pred_check_branch
          %271 = sbr.rel (%p269) target = $region24
        $region23: #{tpu_custom_call.1} parent=11 // pred_region
          _
        $region24: #{tpu_custom_call.1} parent=11 // pred_fallthru
          _
        // Predicated region
        $region25: #{tpu_custom_call.1} parent=11 // pred_check
          %p272 = pneg %p180
        $region26: #{tpu_custom_call.1} parent=11 // pred_check_branch
          %274 = sbr.rel (%p272) target = $region28
        $region27: #{tpu_custom_call.1} parent=11 // pred_region
          _
        $region28: #{tpu_custom_call.1} parent=11 // pred_fallthru
          _
        // Predicated region
        $region29: #{tpu_custom_call.1} parent=11 // pred_check
          %p275 = pneg %p201
        $region30: #{tpu_custom_call.1} parent=11 // pred_check_branch
          %277 = sbr.rel (%p275) target = $region32
        $region31: #{tpu_custom_call.1} parent=11 // pred_region
          _
        $region32: #{tpu_custom_call.1} parent=11 // pred_fallthru
          _
        // Predicated region
        $region33: #{tpu_custom_call.1} parent=11 // pred_check
          %p278 = pneg %p222
        $region34: #{tpu_custom_call.1} parent=11 // pred_check_branch
          %280 = sbr.rel (%p278) target = $region36
        $region35: #{tpu_custom_call.1} parent=11 // pred_region
          _
        $region36: #{tpu_custom_call.1} parent=11 // pred_fallthru
          _
      $region12: #{tpu_custom_call.1} parent=5 // pred_fallthru
        _
      %p281 = scmp.lt.s32.totalorder %s18, 2
      // Predicated region
      $region37: #{tpu_custom_call.1} parent=5 // pred_check
        %p282 = pneg %p281
      $region38: #{tpu_custom_call.1} parent=5 // pred_check_branch
        %284 = sbr.rel (%p282) target = $region40
      $region39: #{tpu_custom_call.1} parent=5 // pred_region
        // Predicated region
        $region41: #{tpu_custom_call.1} parent=39 // pred_check
          %p285 = pneg %p38
        $region42: #{tpu_custom_call.1} parent=39 // pred_check_branch
          %287 = sbr.rel (%p285) target = $region44
        $region43: #{tpu_custom_call.1} parent=39 // pred_region
          %s288 = sand.u32 %s28, 1
          %s289 = sand.u32 %s28, 1
          %s290 = smul.addr %s289, 16
          %s291 = scalar_lea.vmem [#allocation2], %s290
          %s292 = smul.addr %s18, 8
          %s293 = scalar_lea.vmem %s0, %s292
          // Predicated region
          $region45: #{tpu_custom_call.1} parent=43 // pred_check
            _
          $region46: #{tpu_custom_call.1} parent=43 // pred_check_branch
            %295 = sbr.rel (0) target = $region48
          $region47: #{tpu_custom_call.1} parent=43 // pred_region
            // Predicated region
            $region49: #{tpu_custom_call.1} parent=47 // pred_check
              _
            $region50: #{tpu_custom_call.1} parent=47 // pred_check_branch
              %297 = sbr.rel (0) target = $region52
            $region51: #{tpu_custom_call.1} parent=47 // pred_region
              // Predicated region
              $region64: #{tpu_custom_call.1} parent=51 // pred_check
                _
              $region65: #{tpu_custom_call.1} parent=51 // pred_check_branch
                %314 = sbr.rel (0) target = $region67
              $region66: #{tpu_custom_call.1} parent=51 // pred_region
                loop: start=0, step=1, limit=1
                $region68: #{tpu_custom_call.1} parent=66 // loop_pre_header
                  _
                $region69: #{tpu_custom_call.1} parent=66 // loop_header
                  %s316 = sphi 0, %s320
                  %p317 = scmp.ge.s32.totalorder %s316, 1
                  %s321 = sphi %s293, %s293
                  %s322 = sphi %s291, %s291
                $region70: #{tpu_custom_call.1} parent=66 // loop_header_branch
                  %319 = sbr.rel (%p317) target = $region74
                $region71: #{tpu_custom_call.1} parent=66 // loop_body
                  %v323 = vld [vmem:[%s321] sm:$0xff]
                  %324 = vst [vmem:[%s322] sm:$0xff] %v323
                  %v325 = vld [vmem:[%s321 + $0x10] sm:$0xff]
                  %326 = vst [vmem:[%s322 + $0x8] sm:$0xff] %v325
                $region72: #{tpu_custom_call.1} parent=66 // loop_footer
                  %s320 = sadd.s32 1, %s316
                $region73: #{tpu_custom_call.1} parent=66 // loop_footer_branch
                  %315 = sbr.rel target = $region69
                $region74: #{tpu_custom_call.1} parent=66 // loop_exit
                  _
              $region67: #{tpu_custom_call.1} parent=51 // pred_fallthru
                _
              // Predicated region
              $region75: #{tpu_custom_call.1} parent=51 // pred_check
                _
              $region76: #{tpu_custom_call.1} parent=51 // pred_check_branch
                %328 = sbr.rel target = $region78
              $region77: #{tpu_custom_call.1} parent=51 // pred_region
                _
              $region78: #{tpu_custom_call.1} parent=51 // pred_fallthru
                _
            $region52: #{tpu_custom_call.1} parent=47 // pred_fallthru
              _
            // Predicated region
            $region53: #{tpu_custom_call.1} parent=47 // pred_check
              _
            $region54: #{tpu_custom_call.1} parent=47 // pred_check_branch
              %299 = sbr.rel target = $region56
            $region55: #{tpu_custom_call.1} parent=47 // pred_region
              loop: start=0, step=1, limit=1
              $region57: #{tpu_custom_call.1} parent=55 // loop_pre_header
                _
              $region58: #{tpu_custom_call.1} parent=55 // loop_header
                %s302 = sphi 0, %s306
                %p303 = scmp.ge.s32.totalorder %s302, 1
                %s307 = sphi %s293, %s293
                %s308 = sphi %s291, %s291
              $region59: #{tpu_custom_call.1} parent=55 // loop_header_branch
                %305 = sbr.rel (%p303) target = $region63
              $region60: #{tpu_custom_call.1} parent=55 // loop_body
                %v309 = vld [vmem:[%s307] sm:$0xff]
                %310 = vst [vmem:[%s308] sm:$0xff] %v309
                %v311 = vld [vmem:[%s307 + $0x10] sm:$0xff]
                %312 = vst [vmem:[%s308 + $0x8] sm:$0xff] %v311
              $region61: #{tpu_custom_call.1} parent=55 // loop_footer
                %s306 = sadd.s32 1, %s302
              $region62: #{tpu_custom_call.1} parent=55 // loop_footer_branch
                %301 = sbr.rel target = $region58
              $region63: #{tpu_custom_call.1} parent=55 // loop_exit
                _
            $region56: #{tpu_custom_call.1} parent=47 // pred_fallthru
              _
          $region48: #{tpu_custom_call.1} parent=43 // pred_fallthru
            _
          %329 = vnop
        $region44: #{tpu_custom_call.1} parent=39 // pred_fallthru
          _
        // Predicated region
        $region79: #{tpu_custom_call.1} parent=39 // pred_check
          %p330 = pneg %p64
        $region80: #{tpu_custom_call.1} parent=39 // pred_check_branch
          %332 = sbr.rel (%p330) target = $region82
        $region81: #{tpu_custom_call.1} parent=39 // pred_region
          %s333 = sand.u32 %s54, 1
          %s334 = sand.u32 %s54, 1
          %s335 = smul.addr %s334, 16
          %s336 = scalar_lea.vmem [#allocation3], %s335
          %s337 = smul.addr %s18, 8
          %s338 = scalar_lea.vmem %s1, %s337
          // Predicated region
          $region83: #{tpu_custom_call.1} parent=81 // pred_check
            _
          $region84: #{tpu_custom_call.1} parent=81 // pred_check_branch
            %340 = sbr.rel (0) target = $region86
          $region85: #{tpu_custom_call.1} parent=81 // pred_region
            // Predicated region
            $region87: #{tpu_custom_call.1} parent=85 // pred_check
              _
            $region88: #{tpu_custom_call.1} parent=85 // pred_check_branch
              %342 = sbr.rel (0) target = $region90
            $region89: #{tpu_custom_call.1} parent=85 // pred_region
              // Predicated region
              $region102: #{tpu_custom_call.1} parent=89 // pred_check
                _
              $region103: #{tpu_custom_call.1} parent=89 // pred_check_branch
                %359 = sbr.rel (0) target = $region105
              $region104: #{tpu_custom_call.1} parent=89 // pred_region
                loop: start=0, step=1, limit=1
                $region106: #{tpu_custom_call.1} parent=104 // loop_pre_header
                  _
                $region107: #{tpu_custom_call.1} parent=104 // loop_header
                  %s361 = sphi 0, %s365
                  %p362 = scmp.ge.s32.totalorder %s361, 1
                  %s366 = sphi %s338, %s338
                  %s367 = sphi %s336, %s336
                $region108: #{tpu_custom_call.1} parent=104 // loop_header_branch
                  %364 = sbr.rel (%p362) target = $region112
                $region109: #{tpu_custom_call.1} parent=104 // loop_body
                  %v368 = vld [vmem:[%s366] sm:$0xff]
                  %369 = vst [vmem:[%s367] sm:$0xff] %v368
                  %v370 = vld [vmem:[%s366 + $0x10] sm:$0xff]
                  %371 = vst [vmem:[%s367 + $0x8] sm:$0xff] %v370
                $region110: #{tpu_custom_call.1} parent=104 // loop_footer
                  %s365 = sadd.s32 1, %s361
                $region111: #{tpu_custom_call.1} parent=104 // loop_footer_branch
                  %360 = sbr.rel target = $region107
                $region112: #{tpu_custom_call.1} parent=104 // loop_exit
                  _
              $region105: #{tpu_custom_call.1} parent=89 // pred_fallthru
                _
              // Predicated region
              $region113: #{tpu_custom_call.1} parent=89 // pred_check
                _
              $region114: #{tpu_custom_call.1} parent=89 // pred_check_branch
                %373 = sbr.rel target = $region116
              $region115: #{tpu_custom_call.1} parent=89 // pred_region
                _
              $region116: #{tpu_custom_call.1} parent=89 // pred_fallthru
                _
            $region90: #{tpu_custom_call.1} parent=85 // pred_fallthru
              _
            // Predicated region
            $region91: #{tpu_custom_call.1} parent=85 // pred_check
              _
            $region92: #{tpu_custom_call.1} parent=85 // pred_check_branch
              %344 = sbr.rel target = $region94
            $region93: #{tpu_custom_call.1} parent=85 // pred_region
              loop: start=0, step=1, limit=1
              $region95: #{tpu_custom_call.1} parent=93 // loop_pre_header
                _
              $region96: #{tpu_custom_call.1} parent=93 // loop_header
                %s347 = sphi 0, %s351
                %p348 = scmp.ge.s32.totalorder %s347, 1
                %s352 = sphi %s338, %s338
                %s353 = sphi %s336, %s336
              $region97: #{tpu_custom_call.1} parent=93 // loop_header_branch
                %350 = sbr.rel (%p348) target = $region101
              $region98: #{tpu_custom_call.1} parent=93 // loop_body
                %v354 = vld [vmem:[%s352] sm:$0xff]
                %355 = vst [vmem:[%s353] sm:$0xff] %v354
                %v356 = vld [vmem:[%s352 + $0x10] sm:$0xff]
                %357 = vst [vmem:[%s353 + $0x8] sm:$0xff] %v356
              $region99: #{tpu_custom_call.1} parent=93 // loop_footer
                %s351 = sadd.s32 1, %s347
              $region100: #{tpu_custom_call.1} parent=93 // loop_footer_branch
                %346 = sbr.rel target = $region96
              $region101: #{tpu_custom_call.1} parent=93 // loop_exit
                _
            $region94: #{tpu_custom_call.1} parent=85 // pred_fallthru
              _
          $region86: #{tpu_custom_call.1} parent=81 // pred_fallthru
            _
          %374 = vnop
        $region82: #{tpu_custom_call.1} parent=39 // pred_fallthru
          _
        // Predicated region
        $region117: #{tpu_custom_call.1} parent=39 // pred_check
          %p375 = pneg %p90
        $region118: #{tpu_custom_call.1} parent=39 // pred_check_branch
          %377 = sbr.rel (%p375) target = $region120
        $region119: #{tpu_custom_call.1} parent=39 // pred_region
          %p378 = scmp.lt.s32.totalorder %s18, 1
          %s379 = scalar_select %p378, %s18, 1
          %s380 = smul.addr %s379, 2
          %s381 = scalar_lea.vmem %s2, %s380
        $region120: #{tpu_custom_call.1} parent=39 // pred_fallthru
          _
      $region40: #{tpu_custom_call.1} parent=5 // pred_fallthru
        _
      %p382 = scmp.le.s32.totalorder 1, %s18
      %p383 = scmp.lt.s32.totalorder %s18, 3
      %p384 = pnand %p382, %p383
      %p385 = pneg %p384
      // Predicated region
      $region121: #{tpu_custom_call.1} parent=5 // pred_check
        _
      $region122: #{tpu_custom_call.1} parent=5 // pred_check_branch
        %387 = sbr.rel (%p384) target = $region124
      $region123: #{tpu_custom_call.1} parent=5 // pred_region
        %s388 = ssub.s32 %s18, 1
        %s389 = sand.u32 %s31, 1
        %s390 = sand.u32 %s31, 1
        %s391 = smul.addr %s390, 16
        %s392 = scalar_lea.vmem [#allocation2], %s391
        // Predicated region
        $region125: #{tpu_custom_call.1} parent=123 // pred_check
          %p393 = pneg %p44
        $region126: #{tpu_custom_call.1} parent=123 // pred_check_branch
          %395 = sbr.rel (%p393) target = $region128
        $region127: #{tpu_custom_call.1} parent=123 // pred_region
          _
        $region128: #{tpu_custom_call.1} parent=123 // pred_fallthru
          _
        %s396 = sand.u32 %s57, 1
        %s397 = sand.u32 %s57, 1
        %s398 = smul.addr %s397, 16
        %s399 = scalar_lea.vmem [#allocation3], %s398
        // Predicated region
        $region129: #{tpu_custom_call.1} parent=123 // pred_check
          %p400 = pneg %p70
        $region130: #{tpu_custom_call.1} parent=123 // pred_check_branch
          %402 = sbr.rel (%p400) target = $region132
        $region131: #{tpu_custom_call.1} parent=123 // pred_region
          _
        $region132: #{tpu_custom_call.1} parent=123 // pred_fallthru
          _
        %s403 = sand.u32 %s31, 1
        %s404 = sand.u32 %s31, 1
        %s405 = smul.addr %s404, 16
        %s406 = scalar_lea.vmem [#allocation2], %s405
        %p407 = pneg %p44
        %p408 = pneg %p41
        %s409 = sand.u32 %s57, 1
        %s410 = sand.u32 %s57, 1
        %s411 = smul.addr %s410, 16
        %s412 = scalar_lea.vmem [#allocation3], %s411
        %p413 = pneg %p70
        %p414 = pneg %p67
        %p415 = scmp.lt.s32.totalorder %s23, 1
        %s416 = scalar_select %p415, %s23, 1
        %s417 = smul.addr %s416, 2
        %s418 = scalar_lea.vmem %s2, %s417
        %p419 = pneg %p96
        %p420 = pneg %p93
        %p421 = pneg %p117
        %p422 = pneg %p114
        %p423 = pneg %p138
        %p424 = pneg %p135
        %p425 = pneg %p159
        %p426 = pneg %p156
        %p427 = pneg %p180
        %p428 = pneg %p177
        %p429 = pneg %p201
        %p430 = pneg %p198
        %p431 = pneg %p222
        %p432 = pneg %p219
        %p433 = pneg %p248
        %p434 = pneg %p245
        %s435 = sand.u32 %s235, 1
        %s436 = scalar_lea.sflag [#allocation5], %s435
        %s437 = sand.u32 %s235, 1
        %s438 = scalar_lea.vmem [#allocation4], %s437
        %p439 = scmp.lt.s32.totalorder %s23, 1
        %s440 = scalar_select %p439, %s23, 1
        %s441 = smul.addr %s440, 2
        %s442 = scalar_lea.vmem %s2, %s441
        %v443 = vld [vmem:[%s392] sm:$0xff]
        %v444 = vld [vmem:[%s392 + $0x8] sm:$0xff]
        %v445 = vld [vmem:[%s399] sm:$0xff]
        %v446 = vld [vmem:[%s399 + $0x8] sm:$0xff]
        %v447 = vld [vmem:[%s442] sm:$0x1]
        %v448 = vld [vmem:[%s442 + $0x1] sm:$0x1]
        %v449 = vld [vmem:[%s3] sm:$0xff]
        %v450 = vld [vmem:[%s3 + $0x8] sm:$0xff]
        %v451 = vld [vmem:[%s3 + $0x10] sm:$0xff]
        %v452 = vld [vmem:[%s3 + $0x18] sm:$0xff]
        %v453 = vld [vmem:[%s3 + $0x20] sm:$0xff]
        %v454 = vld [vmem:[%s3 + $0x28] sm:$0xff]
        %v455 = vld [vmem:[%s3 + $0x30] sm:$0xff]
        %v456 = vld [vmem:[%s3 + $0x38] sm:$0xff]
        %v457 = vld [vmem:[%s3 + $0x40] sm:$0xff]
        %v458 = vld [vmem:[%s3 + $0x48] sm:$0xff]
        %v459 = vld [vmem:[%s3 + $0x50] sm:$0xff]
        %v460 = vld [vmem:[%s3 + $0x58] sm:$0xff]
        %v461 = vld [vmem:[%s3 + $0x60] sm:$0xff]
        %v462 = vld [vmem:[%s3 + $0x68] sm:$0xff]
        %v463 = vld [vmem:[%s3 + $0x70] sm:$0xff]
        %v464 = vld [vmem:[%s3 + $0x78] sm:$0xff]
        %v465 = vld [vmem:[%s4] sm:$0xff]
        %v466 = vld [vmem:[%s4 + $0x8] sm:$0xff]
        %v467 = vld [vmem:[%s4 + $0x10] sm:$0xff]
        %v468 = vld [vmem:[%s4 + $0x18] sm:$0xff]
        %v469 = vld [vmem:[%s4 + $0x20] sm:$0xff]
        %v470 = vld [vmem:[%s4 + $0x28] sm:$0xff]
        %v471 = vld [vmem:[%s4 + $0x30] sm:$0xff]
        %v472 = vld [vmem:[%s4 + $0x38] sm:$0xff]
        %v473 = vld [vmem:[%s4 + $0x40] sm:$0xff]
        %v474 = vld [vmem:[%s4 + $0x48] sm:$0xff]
        %v475 = vld [vmem:[%s4 + $0x50] sm:$0xff]
        %v476 = vld [vmem:[%s4 + $0x58] sm:$0xff]
        %v477 = vld [vmem:[%s4 + $0x60] sm:$0xff]
        %v478 = vld [vmem:[%s4 + $0x68] sm:$0xff]
        %v479 = vld [vmem:[%s4 + $0x70] sm:$0xff]
        %v480 = vld [vmem:[%s4 + $0x78] sm:$0xff]
        %482 = vset.pattern.permute.xlu0 0
        %483 = vperm.xlu0 %482, %v465
        %v484 = vpop.permute.xlu0 %483
        %487 = vset.pattern.permute.xlu0 0
        %488 = vperm.xlu0 %487, %v466
        %v489 = vpop.permute.xlu0 %488
        %492 = vset.pattern.permute.xlu0 0
        %493 = vperm.xlu0 %492, %v467
        %v494 = vpop.permute.xlu0 %493
        %497 = vset.pattern.permute.xlu0 0
        %498 = vperm.xlu0 %497, %v468
        %v499 = vpop.permute.xlu0 %498
        %502 = vset.pattern.permute.xlu0 0
        %503 = vperm.xlu0 %502, %v469
        %v504 = vpop.permute.xlu0 %503
        %507 = vset.pattern.permute.xlu0 0
        %508 = vperm.xlu0 %507, %v470
        %v509 = vpop.permute.xlu0 %508
        %512 = vset.pattern.permute.xlu0 0
        %513 = vperm.xlu0 %512, %v471
        %v514 = vpop.permute.xlu0 %513
        %517 = vset.pattern.permute.xlu0 0
        %518 = vperm.xlu0 %517, %v472
        %v519 = vpop.permute.xlu0 %518
        %522 = vset.pattern.permute.xlu0 0
        %523 = vperm.xlu0 %522, %v473
        %v524 = vpop.permute.xlu0 %523
        %527 = vset.pattern.permute.xlu0 0
        %528 = vperm.xlu0 %527, %v474
        %v529 = vpop.permute.xlu0 %528
        %532 = vset.pattern.permute.xlu0 0
        %533 = vperm.xlu0 %532, %v475
        %v534 = vpop.permute.xlu0 %533
        %537 = vset.pattern.permute.xlu0 0
        %538 = vperm.xlu0 %537, %v476
        %v539 = vpop.permute.xlu0 %538
        %542 = vset.pattern.permute.xlu0 0
        %543 = vperm.xlu0 %542, %v477
        %v544 = vpop.permute.xlu0 %543
        %547 = vset.pattern.permute.xlu0 0
        %548 = vperm.xlu0 %547, %v478
        %v549 = vpop.permute.xlu0 %548
        %552 = vset.pattern.permute.xlu0 0
        %553 = vperm.xlu0 %552, %v479
        %v554 = vpop.permute.xlu0 %553
        %557 = vset.pattern.permute.xlu0 0
        %558 = vperm.xlu0 %557, %v480
        %v559 = vpop.permute.xlu0 %558
        %vm561 = vcmask 130048
        %v563 = vsel %vm561, %v449, 0
        %v566 = vsel %vm561, %v450, 0
        %v569 = vsel %vm561, %v451, 0
        %v572 = vsel %vm561, %v452, 0
        %v575 = vsel %vm561, %v453, 0
        %v578 = vsel %vm561, %v454, 0
        %v581 = vsel %vm561, %v455, 0
        %v584 = vsel %vm561, %v456, 0
        %v587 = vsel %vm561, %v457, 0
        %v590 = vsel %vm561, %v458, 0
        %v593 = vsel %vm561, %v459, 0
        %v596 = vsel %vm561, %v460, 0
        %v599 = vsel %vm561, %v461, 0
        %v602 = vsel %vm561, %v462, 0
        %v605 = vsel %vm561, %v463, 0
        %v608 = vsel %vm561, %v464, 0
        %v610 = vand.u32 %v445, 4294901760
        %611 = vmatprep.subr.mxu0 %v610
        %v612 = vand.u32 %v443, 4294901760
        %613 = vmatpush1.msra.mxu0 %v612
        %v614 = vand.u32 %v446, 4294901760
        %615 = vmatprep.subr.mxu0 %v614
        %v616 = vand.u32 %v444, 4294901760
        %617 = vmatpush1.msra.mxu0 %v616
        %618 = vmatprep.subr.mxu0 0.0
        %619 = vmatpush1.msra.mxu0 0.0
        %620 = vmatprep.subr.mxu0 0.0
        %621 = vmatpush1.msra.mxu0 0.0
        %622 = vmatprep.subr.mxu0 0.0
        %623 = vmatpush1.msra.mxu0 0.0
        %624 = vmatprep.subr.mxu0 0.0
        %625 = vmatpush1.msra.mxu0 0.0
        %626 = vmatprep.subr.mxu0 0.0
        %627 = vmatpush1.msra.mxu0 0.0
        %628 = vmatprep.subr.mxu0 0.0
        %629 = vmatpush1.msra.mxu0 0.0
        %630 = vmatprep.subr.mxu0 0.0
        %631 = vmatpush1.msra.mxu0 0.0
        %632 = vmatprep.subr.mxu0 0.0
        %633 = vmatpush1.msra.mxu0 0.0
        %634 = vmatprep.subr.mxu0 0.0
        %635 = vmatpush1.msra.mxu0 0.0
        %636 = vmatprep.subr.mxu0 0.0
        %637 = vmatpush1.msra.mxu0 0.0
        %638 = vmatprep.subr.mxu0 0.0
        %639 = vmatpush1.msra.mxu0 0.0
        %640 = vmatprep.subr.mxu0 0.0
        %641 = vmatpush1.msra.mxu0 0.0
        %642 = vmatprep.subr.mxu0 0.0
        %643 = vmatpush1.msra.mxu0 0.0
        %644 = vmatprep.subr.mxu0 0.0
        %645 = vmatpush1.msra.mxu0 0.0
        %646 = vmatprep.subr.mxu0 0.0
        %647 = vmatpush1.msra.mxu0 0.0
        %648 = vmatprep.subr.mxu0 0.0
        %649 = vmatpush1.msra.mxu0 0.0
        %650 = vmatprep.subr.mxu0 0.0
        %651 = vmatpush1.msra.mxu0 0.0
        %652 = vmatprep.subr.mxu0 0.0
        %653 = vmatpush1.msra.mxu0 0.0
        %654 = vmatprep.subr.mxu0 0.0
        %655 = vmatpush1.msra.mxu0 0.0
        %656 = vmatprep.subr.mxu0 0.0
        %657 = vmatpush1.msra.mxu0 0.0
        %658 = vmatprep.subr.mxu0 0.0
        %659 = vmatpush1.msra.mxu0 0.0
        %660 = vmatprep.subr.mxu0 0.0
        %661 = vmatpush1.msra.mxu0 0.0
        %662 = vmatprep.subr.mxu0 0.0
        %663 = vmatpush1.msra.mxu0 0.0
        %664 = vmatprep.subr.mxu0 0.0
        %665 = vmatpush1.msra.mxu0 0.0
        %666 = vmatprep.subr.mxu0 0.0
        %667 = vmatpush1.msra.mxu0 0.0
        %668 = vmatprep.subr.mxu0 0.0
        %669 = vmatpush1.msra.mxu0 0.0
        %670 = vmatprep.subr.mxu0 0.0
        %671 = vmatpush1.msra.mxu0 0.0
        %672 = vmatprep.subr.mxu0 0.0
        %673 = vmatpush1.msra.mxu0 0.0
        %674 = vmatprep.subr.mxu0 0.0
        %675 = vmatpush1.msra.mxu0 0.0
        %676 = vmatprep.subr.mxu0 0.0
        %677 = vmatpush1.msra.mxu0 0.0
        %678 = vmatprep.mubr.f32.mxu0 0.0
        %v679 = vand.u32 %v563, 4294901760
        %v680 = vsub.f32 %v563, %v679
        %v681 = vand.u32 %v680, 4294901760
        %v682 = vsub.f32 %v680, %v681
        %v683 = vand.u32 %v682, 4294901760
        %684 = vmatmul.mubr.f32.gmra.mrb[0].mxu0 %v683
        %v685 = vpop.f32.mrb[0].mxu0
        %v686 = vadd.f32 %v484, %v685
        %v687 = vpop.f32.mrb[0].mxu0
        %v688 = vadd.f32 %v484, %v687
        %689 = vmatprep.mubr.f32.mxu0 0.0
        %v690 = vand.u32 %v566, 4294901760
        %v691 = vsub.f32 %v566, %v690
        %v692 = vand.u32 %v691, 4294901760
        %v693 = vsub.f32 %v691, %v692
        %v694 = vand.u32 %v693, 4294901760
        %695 = vmatmul.mubr.f32.gmra.mrb[0].mxu0 %v694
        %v696 = vpop.f32.mrb[0].mxu0
        %v697 = vadd.f32 %v489, %v696
        %v698 = vpop.f32.mrb[0].mxu0
        %v699 = vadd.f32 %v489, %v698
        %700 = vmatprep.mubr.f32.mxu0 0.0
        %v701 = vand.u32 %v569, 4294901760
        %v702 = vsub.f32 %v569, %v701
        %v703 = vand.u32 %v702, 4294901760
        %v704 = vsub.f32 %v702, %v703
        %v705 = vand.u32 %v704, 4294901760
        %706 = vmatmul.mubr.f32.gmra.mrb[0].mxu0 %v705
        %v707 = vpop.f32.mrb[0].mxu0
        %v708 = vadd.f32 %v494, %v707
        %v709 = vpop.f32.mrb[0].mxu0
        %v710 = vadd.f32 %v494, %v709
        %711 = vmatprep.mubr.f32.mxu0 0.0
        %v712 = vand.u32 %v572, 4294901760
        %v713 = vsub.f32 %v572, %v712
        %v714 = vand.u32 %v713, 4294901760
        %v715 = vsub.f32 %v713, %v714
        %v716 = vand.u32 %v715, 4294901760
        %717 = vmatmul.mubr.f32.gmra.mrb[0].mxu0 %v716
        %v718 = vpop.f32.mrb[0].mxu0
        %v719 = vadd.f32 %v499, %v718
        %v720 = vpop.f32.mrb[0].mxu0
        %v721 = vadd.f32 %v499, %v720
        %722 = vmatprep.mubr.f32.mxu0 0.0
        %v723 = vand.u32 %v575, 4294901760
        %v724 = vsub.f32 %v575, %v723
        %v725 = vand.u32 %v724, 4294901760
        %v726 = vsub.f32 %v724, %v725
        %v727 = vand.u32 %v726, 4294901760
        %728 = vmatmul.mubr.f32.gmra.mrb[0].mxu0 %v727
        %v729 = vpop.f32.mrb[0].mxu0
        %v730 = vadd.f32 %v504, %v729
        %v731 = vpop.f32.mrb[0].mxu0
        %v732 = vadd.f32 %v504, %v731
        %733 = vmatprep.mubr.f32.mxu0 0.0
        %v734 = vand.u32 %v578, 4294901760
        %v735 = vsub.f32 %v578, %v734
        %v736 = vand.u32 %v735, 4294901760
        %v737 = vsub.f32 %v735, %v736
        %v738 = vand.u32 %v737, 4294901760
        %739 = vmatmul.mubr.f32.gmra.mrb[0].mxu0 %v738
        %v740 = vpop.f32.mrb[0].mxu0
        %v741 = vadd.f32 %v509, %v740
        %v742 = vpop.f32.mrb[0].mxu0
        %v743 = vadd.f32 %v509, %v742
        %744 = vmatprep.mubr.f32.mxu0 0.0
        %v745 = vand.u32 %v581, 4294901760
        %v746 = vsub.f32 %v581, %v745
        %v747 = vand.u32 %v746, 4294901760
        %v748 = vsub.f32 %v746, %v747
        %v749 = vand.u32 %v748, 4294901760
        %750 = vmatmul.mubr.f32.gmra.mrb[0].mxu0 %v749
        %v751 = vpop.f32.mrb[0].mxu0
        %v752 = vadd.f32 %v514, %v751
        %v753 = vpop.f32.mrb[0].mxu0
        %v754 = vadd.f32 %v514, %v753
        %755 = vmatprep.mubr.f32.mxu0 0.0
        %v756 = vand.u32 %v584, 4294901760
        %v757 = vsub.f32 %v584, %v756
        %v758 = vand.u32 %v757, 4294901760
        %v759 = vsub.f32 %v757, %v758
        %v760 = vand.u32 %v759, 4294901760
        %761 = vmatmul.mubr.f32.gmra.mrb[0].mxu0 %v760
        %v762 = vpop.f32.mrb[0].mxu0
        %v763 = vadd.f32 %v519, %v762
        %v764 = vpop.f32.mrb[0].mxu0
        %v765 = vadd.f32 %v519, %v764
        %766 = vmatprep.mubr.f32.mxu0 0.0
        %v767 = vand.u32 %v587, 4294901760
        %v768 = vsub.f32 %v587, %v767
        %v769 = vand.u32 %v768, 4294901760
        %v770 = vsub.f32 %v768, %v769
        %v771 = vand.u32 %v770, 4294901760
        %772 = vmatmul.mubr.f32.gmra.mrb[0].mxu0 %v771
        %v773 = vpop.f32.mrb[0].mxu0
        %v774 = vadd.f32 %v524, %v773
        %v775 = vpop.f32.mrb[0].mxu0
        %v776 = vadd.f32 %v524, %v775
        %777 = vmatprep.mubr.f32.mxu0 0.0
        %v778 = vand.u32 %v590, 4294901760
        %v779 = vsub.f32 %v590, %v778
        %v780 = vand.u32 %v779, 4294901760
        %v781 = vsub.f32 %v779, %v780
        %v782 = vand.u32 %v781, 4294901760
        %783 = vmatmul.mubr.f32.gmra.mrb[0].mxu0 %v782
        %v784 = vpop.f32.mrb[0].mxu0
        %v785 = vadd.f32 %v529, %v784
        %v786 = vpop.f32.mrb[0].mxu0
        %v787 = vadd.f32 %v529, %v786
        %788 = vmatprep.mubr.f32.mxu0 0.0
        %v789 = vand.u32 %v593, 4294901760
        %v790 = vsub.f32 %v593, %v789
        %v791 = vand.u32 %v790, 4294901760
        %v792 = vsub.f32 %v790, %v791
        %v793 = vand.u32 %v792, 4294901760
        %794 = vmatmul.mubr.f32.gmra.mrb[0].mxu0 %v793
        %v795 = vpop.f32.mrb[0].mxu0
        %v796 = vadd.f32 %v534, %v795
        %v797 = vpop.f32.mrb[0].mxu0
        %v798 = vadd.f32 %v534, %v797
        %799 = vmatprep.mubr.f32.mxu0 0.0
        %v800 = vand.u32 %v596, 4294901760
        %v801 = vsub.f32 %v596, %v800
        %v802 = vand.u32 %v801, 4294901760
        %v803 = vsub.f32 %v801, %v802
        %v804 = vand.u32 %v803, 4294901760
        %805 = vmatmul.mubr.f32.gmra.mrb[0].mxu0 %v804
        %v806 = vpop.f32.mrb[0].mxu0
        %v807 = vadd.f32 %v539, %v806
        %v808 = vpop.f32.mrb[0].mxu0
        %v809 = vadd.f32 %v539, %v808
        %810 = vmatprep.mubr.f32.mxu0 0.0
        %v811 = vand.u32 %v599, 4294901760
        %v812 = vsub.f32 %v599, %v811
        %v813 = vand.u32 %v812, 4294901760
        %v814 = vsub.f32 %v812, %v813
        %v815 = vand.u32 %v814, 4294901760
        %816 = vmatmul.mubr.f32.gmra.mrb[0].mxu0 %v815
        %v817 = vpop.f32.mrb[0].mxu0
        %v818 = vadd.f32 %v544, %v817
        %v819 = vpop.f32.mrb[0].mxu0
        %v820 = vadd.f32 %v544, %v819
        %821 = vmatprep.mubr.f32.mxu0 0.0
        %v822 = vand.u32 %v602, 4294901760
        %v823 = vsub.f32 %v602, %v822
        %v824 = vand.u32 %v823, 4294901760
        %v825 = vsub.f32 %v823, %v824
        %v826 = vand.u32 %v825, 4294901760
        %827 = vmatmul.mubr.f32.gmra.mrb[0].mxu0 %v826
        %v828 = vpop.f32.mrb[0].mxu0
        %v829 = vadd.f32 %v549, %v828
        %v830 = vpop.f32.mrb[0].mxu0
        %v831 = vadd.f32 %v549, %v830
        %832 = vmatprep.mubr.f32.mxu0 0.0
        %v833 = vand.u32 %v605, 4294901760
        %v834 = vsub.f32 %v605, %v833
        %v835 = vand.u32 %v834, 4294901760
        %v836 = vsub.f32 %v834, %v835
        %v837 = vand.u32 %v836, 4294901760
        %838 = vmatmul.mubr.f32.gmra.mrb[0].mxu0 %v837
        %v839 = vpop.f32.mrb[0].mxu0
        %v840 = vadd.f32 %v554, %v839
        %v841 = vpop.f32.mrb[0].mxu0
        %v842 = vadd.f32 %v554, %v841
        %843 = vmatprep.mubr.f32.mxu0 0.0
        %v844 = vand.u32 %v608, 4294901760
        %v845 = vsub.f32 %v608, %v844
        %v846 = vand.u32 %v845, 4294901760
        %v847 = vsub.f32 %v845, %v846
        %v848 = vand.u32 %v847, 4294901760
        %849 = vmatmul.mubr.f32.gmra.mrb[0].mxu0 %v848
        %v850 = vpop.f32.mrb[0].mxu0
        %v851 = vadd.f32 %v559, %v850
        %v852 = vpop.f32.mrb[0].mxu0
        %v853 = vadd.f32 %v559, %v852
        %854 = vdwg.mxu0
        %v855 = vand.u32 %v445, 4294901760
        %v856 = vsub.f32 %v445, %v855
        %v857 = vand.u32 %v856, 4294901760
        %v858 = vsub.f32 %v856, %v857
        %v859 = vand.u32 %v858, 4294901760
        %860 = vmatprep.subr.mxu0 %v859
        %v861 = vand.u32 %v443, 4294901760
        %v862 = vsub.f32 %v443, %v861
        %v863 = vand.u32 %v862, 4294901760
        %v864 = vsub.f32 %v862, %v863
        %v865 = vand.u32 %v864, 4294901760
        %866 = vmatpush1.msra.mxu0 %v865
        %v867 = vand.u32 %v446, 4294901760
        %v868 = vsub.f32 %v446, %v867
        %v869 = vand.u32 %v868, 4294901760
        %v870 = vsub.f32 %v868, %v869
        %v871 = vand.u32 %v870, 4294901760
        %872 = vmatprep.subr.mxu0 %v871
        %v873 = vand.u32 %v444, 4294901760
        %v874 = vsub.f32 %v444, %v873
        %v875 = vand.u32 %v874, 4294901760
        %v876 = vsub.f32 %v874, %v875
        %v877 = vand.u32 %v876, 4294901760
        %878 = vmatpush1.msra.mxu0 %v877
        %879 = vmatprep.subr.mxu0 0.0
        %880 = vmatpush1.msra.mxu0 0.0
        %881 = vmatprep.subr.mxu0 0.0
        %882 = vmatpush1.msra.mxu0 0.0
        %883 = vmatprep.subr.mxu0 0.0
        %884 = vmatpush1.msra.mxu0 0.0
        %885 = vmatprep.subr.mxu0 0.0
        %886 = vmatpush1.msra.mxu0 0.0
        %887 = vmatprep.subr.mxu0 0.0
        %888 = vmatpush1.msra.mxu0 0.0
        %889 = vmatprep.subr.mxu0 0.0
        %890 = vmatpush1.msra.mxu0 0.0
        %891 = vmatprep.subr.mxu0 0.0
        %892 = vmatpush1.msra.mxu0 0.0
        %893 = vmatprep.subr.mxu0 0.0
        %894 = vmatpush1.msra.mxu0 0.0
        %895 = vmatprep.subr.mxu0 0.0
        %896 = vmatpush1.msra.mxu0 0.0
        %897 = vmatprep.subr.mxu0 0.0
        %898 = vmatpush1.msra.mxu0 0.0
        %899 = vmatprep.subr.mxu0 0.0
        %900 = vmatpush1.msra.mxu0 0.0
        %901 = vmatprep.subr.mxu0 0.0
        %902 = vmatpush1.msra.mxu0 0.0
        %903 = vmatprep.subr.mxu0 0.0
        %904 = vmatpush1.msra.mxu0 0.0
        %905 = vmatprep.subr.mxu0 0.0
        %906 = vmatpush1.msra.mxu0 0.0
        %907 = vmatprep.subr.mxu0 0.0
        %908 = vmatpush1.msra.mxu0 0.0
        %909 = vmatprep.subr.mxu0 0.0
        %910 = vmatpush1.msra.mxu0 0.0
        %911 = vmatprep.subr.mxu0 0.0
        %912 = vmatpush1.msra.mxu0 0.0
        %913 = vmatprep.subr.mxu0 0.0
        %914 = vmatpush1.msra.mxu0 0.0
        %915 = vmatprep.subr.mxu0 0.0
        %916 = vmatpush1.msra.mxu0 0.0
        %917 = vmatprep.subr.mxu0 0.0
        %918 = vmatpush1.msra.mxu0 0.0
        %919 = vmatprep.subr.mxu0 0.0
        %920 = vmatpush1.msra.mxu0 0.0
        %921 = vmatprep.subr.mxu0 0.0
        %922 = vmatpush1.msra.mxu0 0.0
        %923 = vmatprep.subr.mxu0 0.0
        %924 = vmatpush1.msra.mxu0 0.0
        %925 = vmatprep.subr.mxu0 0.0
        %926 = vmatpush1.msra.mxu0 0.0
        %927 = vmatprep.subr.mxu0 0.0
        %928 = vmatpush1.msra.mxu0 0.0
        %929 = vmatprep.subr.mxu0 0.0
        %930 = vmatpush1.msra.mxu0 0.0
        %931 = vmatprep.subr.mxu0 0.0
        %932 = vmatpush1.msra.mxu0 0.0
        %933 = vmatprep.subr.mxu0 0.0
        %934 = vmatpush1.msra.mxu0 0.0
        %935 = vmatprep.subr.mxu0 0.0
        %936 = vmatpush1.msra.mxu0 0.0
        %937 = vmatprep.subr.mxu0 0.0
        %938 = vmatpush1.msra.mxu0 0.0
        %939 = vmatprep.mubr.f32.mxu0 0.0
        %v940 = vand.u32 %v563, 4294901760
        %941 = vmatmul.mubr.f32.gmra.mrb[0].mxu0 %v940
        %v942 = vpop.f32.mrb[0].mxu0
        %v943 = vadd.f32 %v686, %v942
        %v944 = vpop.f32.mrb[0].mxu0
        %v945 = vadd.f32 %v688, %v944
        %946 = vmatprep.mubr.f32.mxu0 0.0
        %v947 = vand.u32 %v566, 4294901760
        %948 = vmatmul.mubr.f32.gmra.mrb[0].mxu0 %v947
        %v949 = vpop.f32.mrb[0].mxu0
        %v950 = vadd.f32 %v697, %v949
        %v951 = vpop.f32.mrb[0].mxu0
        %v952 = vadd.f32 %v699, %v951
        %953 = vmatprep.mubr.f32.mxu0 0.0
        %v954 = vand.u32 %v569, 4294901760
        %955 = vmatmul.mubr.f32.gmra.mrb[0].mxu0 %v954
        %v956 = vpop.f32.mrb[0].mxu0
        %v957 = vadd.f32 %v708, %v956
        %v958 = vpop.f32.mrb[0].mxu0
        %v959 = vadd.f32 %v710, %v958
        %960 = vmatprep.mubr.f32.mxu0 0.0
        %v961 = vand.u32 %v572, 4294901760
        %962 = vmatmul.mubr.f32.gmra.mrb[0].mxu0 %v961
        %v963 = vpop.f32.mrb[0].mxu0
        %v964 = vadd.f32 %v719, %v963
        %v965 = vpop.f32.mrb[0].mxu0
        %v966 = vadd.f32 %v721, %v965
        %967 = vmatprep.mubr.f32.mxu0 0.0
        %v968 = vand.u32 %v575, 4294901760
        %969 = vmatmul.mubr.f32.gmra.mrb[0].mxu0 %v968
        %v970 = vpop.f32.mrb[0].mxu0
        %v971 = vadd.f32 %v730, %v970
        %v972 = vpop.f32.mrb[0].mxu0
        %v973 = vadd.f32 %v732, %v972
        %974 = vmatprep.mubr.f32.mxu0 0.0
        %v975 = vand.u32 %v578, 4294901760
        %976 = vmatmul.mubr.f32.gmra.mrb[0].mxu0 %v975
        %v977 = vpop.f32.mrb[0].mxu0
        %v978 = vadd.f32 %v741, %v977
        %v979 = vpop.f32.mrb[0].mxu0
        %v980 = vadd.f32 %v743, %v979
        %981 = vmatprep.mubr.f32.mxu0 0.0
        %v982 = vand.u32 %v581, 4294901760
        %983 = vmatmul.mubr.f32.gmra.mrb[0].mxu0 %v982
        %v984 = vpop.f32.mrb[0].mxu0
        %v985 = vadd.f32 %v752, %v984
        %v986 = vpop.f32.mrb[0].mxu0
        %v987 = vadd.f32 %v754, %v986
        %988 = vmatprep.mubr.f32.mxu0 0.0
        %v989 = vand.u32 %v584, 4294901760
        %990 = vmatmul.mubr.f32.gmra.mrb[0].mxu0 %v989
        %v991 = vpop.f32.mrb[0].mxu0
        %v992 = vadd.f32 %v763, %v991
        %v993 = vpop.f32.mrb[0].mxu0
        %v994 = vadd.f32 %v765, %v993
        %995 = vmatprep.mubr.f32.mxu0 0.0
        %v996 = vand.u32 %v587, 4294901760
        %997 = vmatmul.mubr.f32.gmra.mrb[0].mxu0 %v996
        %v998 = vpop.f32.mrb[0].mxu0
        %v999 = vadd.f32 %v774, %v998
        %v1000 = vpop.f32.mrb[0].mxu0
        %v1001 = vadd.f32 %v776, %v1000
        %1002 = vmatprep.mubr.f32.mxu0 0.0
        %v1003 = vand.u32 %v590, 4294901760
        %1004 = vmatmul.mubr.f32.gmra.mrb[0].mxu0 %v1003
        %v1005 = vpop.f32.mrb[0].mxu0
        %v1006 = vadd.f32 %v785, %v1005
        %v1007 = vpop.f32.mrb[0].mxu0
        %v1008 = vadd.f32 %v787, %v1007
        %1009 = vmatprep.mubr.f32.mxu0 0.0
        %v1010 = vand.u32 %v593, 4294901760
        %1011 = vmatmul.mubr.f32.gmra.mrb[0].mxu0 %v1010
        %v1012 = vpop.f32.mrb[0].mxu0
        %v1013 = vadd.f32 %v796, %v1012
        %v1014 = vpop.f32.mrb[0].mxu0
        %v1015 = vadd.f32 %v798, %v1014
        %1016 = vmatprep.mubr.f32.mxu0 0.0
        %v1017 = vand.u32 %v596, 4294901760
        %1018 = vmatmul.mubr.f32.gmra.mrb[0].mxu0 %v1017
        %v1019 = vpop.f32.mrb[0].mxu0
        %v1020 = vadd.f32 %v807, %v1019
        %v1021 = vpop.f32.mrb[0].mxu0
        %v1022 = vadd.f32 %v809, %v1021
        %1023 = vmatprep.mubr.f32.mxu0 0.0
        %v1024 = vand.u32 %v599, 4294901760
        %1025 = vmatmul.mubr.f32.gmra.mrb[0].mxu0 %v1024
        %v1026 = vpop.f32.mrb[0].mxu0
        %v1027 = vadd.f32 %v818, %v1026
        %v1028 = vpop.f32.mrb[0].mxu0
        %v1029 = vadd.f32 %v820, %v1028
        %1030 = vmatprep.mubr.f32.mxu0 0.0
        %v1031 = vand.u32 %v602, 4294901760
        %1032 = vmatmul.mubr.f32.gmra.mrb[0].mxu0 %v1031
        %v1033 = vpop.f32.mrb[0].mxu0
        %v1034 = vadd.f32 %v829, %v1033
        %v1035 = vpop.f32.mrb[0].mxu0
        %v1036 = vadd.f32 %v831, %v1035
        %1037 = vmatprep.mubr.f32.mxu0 0.0
        %v1038 = vand.u32 %v605, 4294901760
        %1039 = vmatmul.mubr.f32.gmra.mrb[0].mxu0 %v1038
        %v1040 = vpop.f32.mrb[0].mxu0
        %v1041 = vadd.f32 %v840, %v1040
        %v1042 = vpop.f32.mrb[0].mxu0
        %v1043 = vadd.f32 %v842, %v1042
        %1044 = vmatprep.mubr.f32.mxu0 0.0
        %v1045 = vand.u32 %v608, 4294901760
        %1046 = vmatmul.mubr.f32.gmra.mrb[0].mxu0 %v1045
        %v1047 = vpop.f32.mrb[0].mxu0
        %v1048 = vadd.f32 %v851, %v1047
        %v1049 = vpop.f32.mrb[0].mxu0
        %v1050 = vadd.f32 %v853, %v1049
        %1051 = vdwg.mxu0
        %v1052 = vand.u32 %v445, 4294901760
        %v1053 = vsub.f32 %v445, %v1052
        %1054 = vmatprep.subr.mxu0 %v1053
        %v1055 = vand.u32 %v443, 4294901760
        %v1056 = vsub.f32 %v443, %v1055
        %1057 = vmatpush1.msra.mxu0 %v1056
        %v1058 = vand.u32 %v446, 4294901760
        %v1059 = vsub.f32 %v446, %v1058
        %1060 = vmatprep.subr.mxu0 %v1059
        %v1061 = vand.u32 %v444, 4294901760
        %v1062 = vsub.f32 %v444, %v1061
        %1063 = vmatpush1.msra.mxu0 %v1062
        %1064 = vmatprep.subr.mxu0 0.0
        %1065 = vmatpush1.msra.mxu0 0.0
        %1066 = vmatprep.subr.mxu0 0.0
        %1067 = vmatpush1.msra.mxu0 0.0
        %1068 = vmatprep.subr.mxu0 0.0
        %1069 = vmatpush1.msra.mxu0 0.0
        %1070 = vmatprep.subr.mxu0 0.0
        %1071 = vmatpush1.msra.mxu0 0.0
        %1072 = vmatprep.subr.mxu0 0.0
        %1073 = vmatpush1.msra.mxu0 0.0
        %1074 = vmatprep.subr.mxu0 0.0
        %1075 = vmatpush1.msra.mxu0 0.0
        %1076 = vmatprep.subr.mxu0 0.0
        %1077 = vmatpush1.msra.mxu0 0.0
        %1078 = vmatprep.subr.mxu0 0.0
        %1079 = vmatpush1.msra.mxu0 0.0
        %1080 = vmatprep.subr.mxu0 0.0
        %1081 = vmatpush1.msra.mxu0 0.0
        %1082 = vmatprep.subr.mxu0 0.0
        %1083 = vmatpush1.msra.mxu0 0.0
        %1084 = vmatprep.subr.mxu0 0.0
        %1085 = vmatpush1.msra.mxu0 0.0
        %1086 = vmatprep.subr.mxu0 0.0
        %1087 = vmatpush1.msra.mxu0 0.0
        %1088 = vmatprep.subr.mxu0 0.0
        %1089 = vmatpush1.msra.mxu0 0.0
        %1090 = vmatprep.subr.mxu0 0.0
        %1091 = vmatpush1.msra.mxu0 0.0
        %1092 = vmatprep.subr.mxu0 0.0
        %1093 = vmatpush1.msra.mxu0 0.0
        %1094 = vmatprep.subr.mxu0 0.0
        %1095 = vmatpush1.msra.mxu0 0.0
        %1096 = vmatprep.subr.mxu0 0.0
        %1097 = vmatpush1.msra.mxu0 0.0
        %1098 = vmatprep.subr.mxu0 0.0
        %1099 = vmatpush1.msra.mxu0 0.0
        %1100 = vmatprep.subr.mxu0 0.0
        %1101 = vmatpush1.msra.mxu0 0.0
        %1102 = vmatprep.subr.mxu0 0.0
        %1103 = vmatpush1.msra.mxu0 0.0
        %1104 = vmatprep.subr.mxu0 0.0
        %1105 = vmatpush1.msra.mxu0 0.0
        %1106 = vmatprep.subr.mxu0 0.0
        %1107 = vmatpush1.msra.mxu0 0.0
        %1108 = vmatprep.subr.mxu0 0.0
        %1109 = vmatpush1.msra.mxu0 0.0
        %1110 = vmatprep.subr.mxu0 0.0
        %1111 = vmatpush1.msra.mxu0 0.0
        %1112 = vmatprep.subr.mxu0 0.0
        %1113 = vmatpush1.msra.mxu0 0.0
        %1114 = vmatprep.subr.mxu0 0.0
        %1115 = vmatpush1.msra.mxu0 0.0
        %1116 = vmatprep.subr.mxu0 0.0
        %1117 = vmatpush1.msra.mxu0 0.0
        %1118 = vmatprep.subr.mxu0 0.0
        %1119 = vmatpush1.msra.mxu0 0.0
        %1120 = vmatprep.subr.mxu0 0.0
        %1121 = vmatpush1.msra.mxu0 0.0
        %1122 = vmatprep.subr.mxu0 0.0
        %1123 = vmatpush1.msra.mxu0 0.0
        %1124 = vmatprep.mubr.f32.mxu0 0.0
        %v1125 = vand.u32 %v563, 4294901760
        %v1126 = vsub.f32 %v563, %v1125
        %1127 = vmatmul.mubr.f32.gmra.mrb[0].mxu0 %v1126
        %v1128 = vpop.f32.mrb[0].mxu0
        %v1129 = vadd.f32 %v943, %v1128
        %v1130 = vpop.f32.mrb[0].mxu0
        %v1131 = vadd.f32 %v945, %v1130
        %1132 = vmatprep.mubr.f32.mxu0 0.0
        %v1133 = vand.u32 %v566, 4294901760
        %v1134 = vsub.f32 %v566, %v1133
        %1135 = vmatmul.mubr.f32.gmra.mrb[0].mxu0 %v1134
        %v1136 = vpop.f32.mrb[0].mxu0
        %v1137 = vadd.f32 %v950, %v1136
        %v1138 = vpop.f32.mrb[0].mxu0
        %v1139 = vadd.f32 %v952, %v1138
        %1140 = vmatprep.mubr.f32.mxu0 0.0
        %v1141 = vand.u32 %v569, 4294901760
        %v1142 = vsub.f32 %v569, %v1141
        %1143 = vmatmul.mubr.f32.gmra.mrb[0].mxu0 %v1142
        %v1144 = vpop.f32.mrb[0].mxu0
        %v1145 = vadd.f32 %v957, %v1144
        %v1146 = vpop.f32.mrb[0].mxu0
        %v1147 = vadd.f32 %v959, %v1146
        %1148 = vmatprep.mubr.f32.mxu0 0.0
        %v1149 = vand.u32 %v572, 4294901760
        %v1150 = vsub.f32 %v572, %v1149
        %1151 = vmatmul.mubr.f32.gmra.mrb[0].mxu0 %v1150
        %v1152 = vpop.f32.mrb[0].mxu0
        %v1153 = vadd.f32 %v964, %v1152
        %v1154 = vpop.f32.mrb[0].mxu0
        %v1155 = vadd.f32 %v966, %v1154
        %1156 = vmatprep.mubr.f32.mxu0 0.0
        %v1157 = vand.u32 %v575, 4294901760
        %v1158 = vsub.f32 %v575, %v1157
        %1159 = vmatmul.mubr.f32.gmra.mrb[0].mxu0 %v1158
        %v1160 = vpop.f32.mrb[0].mxu0
        %v1161 = vadd.f32 %v971, %v1160
        %v1162 = vpop.f32.mrb[0].mxu0
        %v1163 = vadd.f32 %v973, %v1162
        %1164 = vmatprep.mubr.f32.mxu0 0.0
        %v1165 = vand.u32 %v578, 4294901760
        %v1166 = vsub.f32 %v578, %v1165
        %1167 = vmatmul.mubr.f32.gmra.mrb[0].mxu0 %v1166
        %v1168 = vpop.f32.mrb[0].mxu0
        %v1169 = vadd.f32 %v978, %v1168
        %v1170 = vpop.f32.mrb[0].mxu0
        %v1171 = vadd.f32 %v980, %v1170
        %1172 = vmatprep.mubr.f32.mxu0 0.0
        %v1173 = vand.u32 %v581, 4294901760
        %v1174 = vsub.f32 %v581, %v1173
        %1175 = vmatmul.mubr.f32.gmra.mrb[0].mxu0 %v1174
        %v1176 = vpop.f32.mrb[0].mxu0
        %v1177 = vadd.f32 %v985, %v1176
        %v1178 = vpop.f32.mrb[0].mxu0
        %v1179 = vadd.f32 %v987, %v1178
        %1180 = vmatprep.mubr.f32.mxu0 0.0
        %v1181 = vand.u32 %v584, 4294901760
        %v1182 = vsub.f32 %v584, %v1181
        %1183 = vmatmul.mubr.f32.gmra.mrb[0].mxu0 %v1182
        %v1184 = vpop.f32.mrb[0].mxu0
        %v1185 = vadd.f32 %v992, %v1184
        %v1186 = vpop.f32.mrb[0].mxu0
        %v1187 = vadd.f32 %v994, %v1186
        %1188 = vmatprep.mubr.f32.mxu0 0.0
        %v1189 = vand.u32 %v587, 4294901760
        %v1190 = vsub.f32 %v587, %v1189
        %1191 = vmatmul.mubr.f32.gmra.mrb[0].mxu0 %v1190
        %v1192 = vpop.f32.mrb[0].mxu0
        %v1193 = vadd.f32 %v999, %v1192
        %v1194 = vpop.f32.mrb[0].mxu0
        %v1195 = vadd.f32 %v1001, %v1194
        %1196 = vmatprep.mubr.f32.mxu0 0.0
        %v1197 = vand.u32 %v590, 4294901760
        %v1198 = vsub.f32 %v590, %v1197
        %1199 = vmatmul.mubr.f32.gmra.mrb[0].mxu0 %v1198
        %v1200 = vpop.f32.mrb[0].mxu0
        %v1201 = vadd.f32 %v1006, %v1200
        %v1202 = vpop.f32.mrb[0].mxu0
        %v1203 = vadd.f32 %v1008, %v1202
        %1204 = vmatprep.mubr.f32.mxu0 0.0
        %v1205 = vand.u32 %v593, 4294901760
        %v1206 = vsub.f32 %v593, %v1205
        %1207 = vmatmul.mubr.f32.gmra.mrb[0].mxu0 %v1206
        %v1208 = vpop.f32.mrb[0].mxu0
        %v1209 = vadd.f32 %v1013, %v1208
        %v1210 = vpop.f32.mrb[0].mxu0
        %v1211 = vadd.f32 %v1015, %v1210
        %1212 = vmatprep.mubr.f32.mxu0 0.0
        %v1213 = vand.u32 %v596, 4294901760
        %v1214 = vsub.f32 %v596, %v1213
        %1215 = vmatmul.mubr.f32.gmra.mrb[0].mxu0 %v1214
        %v1216 = vpop.f32.mrb[0].mxu0
        %v1217 = vadd.f32 %v1020, %v1216
        %v1218 = vpop.f32.mrb[0].mxu0
        %v1219 = vadd.f32 %v1022, %v1218
        %1220 = vmatprep.mubr.f32.mxu0 0.0
        %v1221 = vand.u32 %v599, 4294901760
        %v1222 = vsub.f32 %v599, %v1221
        %1223 = vmatmul.mubr.f32.gmra.mrb[0].mxu0 %v1222
        %v1224 = vpop.f32.mrb[0].mxu0
        %v1225 = vadd.f32 %v1027, %v1224
        %v1226 = vpop.f32.mrb[0].mxu0
        %v1227 = vadd.f32 %v1029, %v1226
        %1228 = vmatprep.mubr.f32.mxu0 0.0
        %v1229 = vand.u32 %v602, 4294901760
        %v1230 = vsub.f32 %v602, %v1229
        %1231 = vmatmul.mubr.f32.gmra.mrb[0].mxu0 %v1230
        %v1232 = vpop.f32.mrb[0].mxu0
        %v1233 = vadd.f32 %v1034, %v1232
        %v1234 = vpop.f32.mrb[0].mxu0
        %v1235 = vadd.f32 %v1036, %v1234
        %1236 = vmatprep.mubr.f32.mxu0 0.0
        %v1237 = vand.u32 %v605, 4294901760
        %v1238 = vsub.f32 %v605, %v1237
        %1239 = vmatmul.mubr.f32.gmra.mrb[0].mxu0 %v1238
        %v1240 = vpop.f32.mrb[0].mxu0
        %v1241 = vadd.f32 %v1041, %v1240
        %v1242 = vpop.f32.mrb[0].mxu0
        %v1243 = vadd.f32 %v1043, %v1242
        %1244 = vmatprep.mubr.f32.mxu0 0.0
        %v1245 = vand.u32 %v608, 4294901760
        %v1246 = vsub.f32 %v608, %v1245
        %1247 = vmatmul.mubr.f32.gmra.mrb[0].mxu0 %v1246
        %v1248 = vpop.f32.mrb[0].mxu0
        %v1249 = vadd.f32 %v1048, %v1248
        %v1250 = vpop.f32.mrb[0].mxu0
        %v1251 = vadd.f32 %v1050, %v1250
        %1252 = vdwg.mxu0
        %v1253 = vand.u32 %v445, 4294901760
        %1254 = vmatprep.subr.mxu0 %v1253
        %v1255 = vand.u32 %v443, 4294901760
        %1256 = vmatpush1.msra.mxu0 %v1255
        %v1257 = vand.u32 %v446, 4294901760
        %1258 = vmatprep.subr.mxu0 %v1257
        %v1259 = vand.u32 %v444, 4294901760
        %1260 = vmatpush1.msra.mxu0 %v1259
        %1261 = vmatprep.subr.mxu0 0.0
        %1262 = vmatpush1.msra.mxu0 0.0
        %1263 = vmatprep.subr.mxu0 0.0
        %1264 = vmatpush1.msra.mxu0 0.0
        %1265 = vmatprep.subr.mxu0 0.0
        %1266 = vmatpush1.msra.mxu0 0.0
        %1267 = vmatprep.subr.mxu0 0.0
        %1268 = vmatpush1.msra.mxu0 0.0
        %1269 = vmatprep.subr.mxu0 0.0
        %1270 = vmatpush1.msra.mxu0 0.0
        %1271 = vmatprep.subr.mxu0 0.0
        %1272 = vmatpush1.msra.mxu0 0.0
        %1273 = vmatprep.subr.mxu0 0.0
        %1274 = vmatpush1.msra.mxu0 0.0
        %1275 = vmatprep.subr.mxu0 0.0
        %1276 = vmatpush1.msra.mxu0 0.0
        %1277 = vmatprep.subr.mxu0 0.0
        %1278 = vmatpush1.msra.mxu0 0.0
        %1279 = vmatprep.subr.mxu0 0.0
        %1280 = vmatpush1.msra.mxu0 0.0
        %1281 = vmatprep.subr.mxu0 0.0
        %1282 = vmatpush1.msra.mxu0 0.0
        %1283 = vmatprep.subr.mxu0 0.0
        %1284 = vmatpush1.msra.mxu0 0.0
        %1285 = vmatprep.subr.mxu0 0.0
        %1286 = vmatpush1.msra.mxu0 0.0
        %1287 = vmatprep.subr.mxu0 0.0
        %1288 = vmatpush1.msra.mxu0 0.0
        %1289 = vmatprep.subr.mxu0 0.0
        %1290 = vmatpush1.msra.mxu0 0.0
        %1291 = vmatprep.subr.mxu0 0.0
        %1292 = vmatpush1.msra.mxu0 0.0
        %1293 = vmatprep.subr.mxu0 0.0
        %1294 = vmatpush1.msra.mxu0 0.0
        %1295 = vmatprep.subr.mxu0 0.0
        %1296 = vmatpush1.msra.mxu0 0.0
        %1297 = vmatprep.subr.mxu0 0.0
        %1298 = vmatpush1.msra.mxu0 0.0
        %1299 = vmatprep.subr.mxu0 0.0
        %1300 = vmatpush1.msra.mxu0 0.0
        %1301 = vmatprep.subr.mxu0 0.0
        %1302 = vmatpush1.msra.mxu0 0.0
        %1303 = vmatprep.subr.mxu0 0.0
        %1304 = vmatpush1.msra.mxu0 0.0
        %1305 = vmatprep.subr.mxu0 0.0
        %1306 = vmatpush1.msra.mxu0 0.0
        %1307 = vmatprep.subr.mxu0 0.0
        %1308 = vmatpush1.msra.mxu0 0.0
        %1309 = vmatprep.subr.mxu0 0.0
        %1310 = vmatpush1.msra.mxu0 0.0
        %1311 = vmatprep.subr.mxu0 0.0
        %1312 = vmatpush1.msra.mxu0 0.0
        %1313 = vmatprep.subr.mxu0 0.0
        %1314 = vmatpush1.msra.mxu0 0.0
        %1315 = vmatprep.subr.mxu0 0.0
        %1316 = vmatpush1.msra.mxu0 0.0
        %1317 = vmatprep.subr.mxu0 0.0
        %1318 = vmatpush1.msra.mxu0 0.0
        %1319 = vmatprep.subr.mxu0 0.0
        %1320 = vmatpush1.msra.mxu0 0.0
        %1321 = vmatprep.mubr.f32.mxu0 0.0
        %v1322 = vand.u32 %v563, 4294901760
        %v1323 = vsub.f32 %v563, %v1322
        %v1324 = vand.u32 %v1323, 4294901760
        %1325 = vmatmul.mubr.f32.gmra.mrb[0].mxu0 %v1324
        %v1326 = vpop.f32.mrb[0].mxu0
        %v1327 = vadd.f32 %v1129, %v1326
        %v1328 = vpop.f32.mrb[0].mxu0
        %v1329 = vadd.f32 %v1131, %v1328
        %1330 = vmatprep.mubr.f32.mxu0 0.0
        %v1331 = vand.u32 %v566, 4294901760
        %v1332 = vsub.f32 %v566, %v1331
        %v1333 = vand.u32 %v1332, 4294901760
        %1334 = vmatmul.mubr.f32.gmra.mrb[0].mxu0 %v1333
        %v1335 = vpop.f32.mrb[0].mxu0
        %v1336 = vadd.f32 %v1137, %v1335
        %v1337 = vpop.f32.mrb[0].mxu0
        %v1338 = vadd.f32 %v1139, %v1337
        %1339 = vmatprep.mubr.f32.mxu0 0.0
        %v1340 = vand.u32 %v569, 4294901760
        %v1341 = vsub.f32 %v569, %v1340
        %v1342 = vand.u32 %v1341, 4294901760
        %1343 = vmatmul.mubr.f32.gmra.mrb[0].mxu0 %v1342
        %v1344 = vpop.f32.mrb[0].mxu0
        %v1345 = vadd.f32 %v1145, %v1344
        %v1346 = vpop.f32.mrb[0].mxu0
        %v1347 = vadd.f32 %v1147, %v1346
        %1348 = vmatprep.mubr.f32.mxu0 0.0
        %v1349 = vand.u32 %v572, 4294901760
        %v1350 = vsub.f32 %v572, %v1349
        %v1351 = vand.u32 %v1350, 4294901760
        %1352 = vmatmul.mubr.f32.gmra.mrb[0].mxu0 %v1351
        %v1353 = vpop.f32.mrb[0].mxu0
        %v1354 = vadd.f32 %v1153, %v1353
        %v1355 = vpop.f32.mrb[0].mxu0
        %v1356 = vadd.f32 %v1155, %v1355
        %1357 = vmatprep.mubr.f32.mxu0 0.0
        %v1358 = vand.u32 %v575, 4294901760
        %v1359 = vsub.f32 %v575, %v1358
        %v1360 = vand.u32 %v1359, 4294901760
        %1361 = vmatmul.mubr.f32.gmra.mrb[0].mxu0 %v1360
        %v1362 = vpop.f32.mrb[0].mxu0
        %v1363 = vadd.f32 %v1161, %v1362
        %v1364 = vpop.f32.mrb[0].mxu0
        %v1365 = vadd.f32 %v1163, %v1364
        %1366 = vmatprep.mubr.f32.mxu0 0.0
        %v1367 = vand.u32 %v578, 4294901760
        %v1368 = vsub.f32 %v578, %v1367
        %v1369 = vand.u32 %v1368, 4294901760
        %1370 = vmatmul.mubr.f32.gmra.mrb[0].mxu0 %v1369
        %v1371 = vpop.f32.mrb[0].mxu0
        %v1372 = vadd.f32 %v1169, %v1371
        %v1373 = vpop.f32.mrb[0].mxu0
        %v1374 = vadd.f32 %v1171, %v1373
        %1375 = vmatprep.mubr.f32.mxu0 0.0
        %v1376 = vand.u32 %v581, 4294901760
        %v1377 = vsub.f32 %v581, %v1376
        %v1378 = vand.u32 %v1377, 4294901760
        %1379 = vmatmul.mubr.f32.gmra.mrb[0].mxu0 %v1378
        %v1380 = vpop.f32.mrb[0].mxu0
        %v1381 = vadd.f32 %v1177, %v1380
        %v1382 = vpop.f32.mrb[0].mxu0
        %v1383 = vadd.f32 %v1179, %v1382
        %1384 = vmatprep.mubr.f32.mxu0 0.0
        %v1385 = vand.u32 %v584, 4294901760
        %v1386 = vsub.f32 %v584, %v1385
        %v1387 = vand.u32 %v1386, 4294901760
        %1388 = vmatmul.mubr.f32.gmra.mrb[0].mxu0 %v1387
        %v1389 = vpop.f32.mrb[0].mxu0
        %v1390 = vadd.f32 %v1185, %v1389
        %v1391 = vpop.f32.mrb[0].mxu0
        %v1392 = vadd.f32 %v1187, %v1391
        %1393 = vmatprep.mubr.f32.mxu0 0.0
        %v1394 = vand.u32 %v587, 4294901760
        %v1395 = vsub.f32 %v587, %v1394
        %v1396 = vand.u32 %v1395, 4294901760
        %1397 = vmatmul.mubr.f32.gmra.mrb[0].mxu0 %v1396
        %v1398 = vpop.f32.mrb[0].mxu0
        %v1399 = vadd.f32 %v1193, %v1398
        %v1400 = vpop.f32.mrb[0].mxu0
        %v1401 = vadd.f32 %v1195, %v1400
        %1402 = vmatprep.mubr.f32.mxu0 0.0
        %v1403 = vand.u32 %v590, 4294901760
        %v1404 = vsub.f32 %v590, %v1403
        %v1405 = vand.u32 %v1404, 4294901760
        %1406 = vmatmul.mubr.f32.gmra.mrb[0].mxu0 %v1405
        %v1407 = vpop.f32.mrb[0].mxu0
        %v1408 = vadd.f32 %v1201, %v1407
        %v1409 = vpop.f32.mrb[0].mxu0
        %v1410 = vadd.f32 %v1203, %v1409
        %1411 = vmatprep.mubr.f32.mxu0 0.0
        %v1412 = vand.u32 %v593, 4294901760
        %v1413 = vsub.f32 %v593, %v1412
        %v1414 = vand.u32 %v1413, 4294901760
        %1415 = vmatmul.mubr.f32.gmra.mrb[0].mxu0 %v1414
        %v1416 = vpop.f32.mrb[0].mxu0
        %v1417 = vadd.f32 %v1209, %v1416
        %v1418 = vpop.f32.mrb[0].mxu0
        %v1419 = vadd.f32 %v1211, %v1418
        %1420 = vmatprep.mubr.f32.mxu0 0.0
        %v1421 = vand.u32 %v596, 4294901760
        %v1422 = vsub.f32 %v596, %v1421
        %v1423 = vand.u32 %v1422, 4294901760
        %1424 = vmatmul.mubr.f32.gmra.mrb[0].mxu0 %v1423
        %v1425 = vpop.f32.mrb[0].mxu0
        %v1426 = vadd.f32 %v1217, %v1425
        %v1427 = vpop.f32.mrb[0].mxu0
        %v1428 = vadd.f32 %v1219, %v1427
        %1429 = vmatprep.mubr.f32.mxu0 0.0
        %v1430 = vand.u32 %v599, 4294901760
        %v1431 = vsub.f32 %v599, %v1430
        %v1432 = vand.u32 %v1431, 4294901760
        %1433 = vmatmul.mubr.f32.gmra.mrb[0].mxu0 %v1432
        %v1434 = vpop.f32.mrb[0].mxu0
        %v1435 = vadd.f32 %v1225, %v1434
        %v1436 = vpop.f32.mrb[0].mxu0
        %v1437 = vadd.f32 %v1227, %v1436
        %1438 = vmatprep.mubr.f32.mxu0 0.0
        %v1439 = vand.u32 %v602, 4294901760
        %v1440 = vsub.f32 %v602, %v1439
        %v1441 = vand.u32 %v1440, 4294901760
        %1442 = vmatmul.mubr.f32.gmra.mrb[0].mxu0 %v1441
        %v1443 = vpop.f32.mrb[0].mxu0
        %v1444 = vadd.f32 %v1233, %v1443
        %v1445 = vpop.f32.mrb[0].mxu0
        %v1446 = vadd.f32 %v1235, %v1445
        %1447 = vmatprep.mubr.f32.mxu0 0.0
        %v1448 = vand.u32 %v605, 4294901760
        %v1449 = vsub.f32 %v605, %v1448
        %v1450 = vand.u32 %v1449, 4294901760
        %1451 = vmatmul.mubr.f32.gmra.mrb[0].mxu0 %v1450
        %v1452 = vpop.f32.mrb[0].mxu0
        %v1453 = vadd.f32 %v1241, %v1452
        %v1454 = vpop.f32.mrb[0].mxu0
        %v1455 = vadd.f32 %v1243, %v1454
        %1456 = vmatprep.mubr.f32.mxu0 0.0
        %v1457 = vand.u32 %v608, 4294901760
        %v1458 = vsub.f32 %v608, %v1457
        %v1459 = vand.u32 %v1458, 4294901760
        %1460 = vmatmul.mubr.f32.gmra.mrb[0].mxu0 %v1459
        %v1461 = vpop.f32.mrb[0].mxu0
        %v1462 = vadd.f32 %v1249, %v1461
        %v1463 = vpop.f32.mrb[0].mxu0
        %v1464 = vadd.f32 %v1251, %v1463
        %1465 = vdwg.mxu0
        %v1466 = vand.u32 %v445, 4294901760
        %v1467 = vsub.f32 %v445, %v1466
        %v1468 = vand.u32 %v1467, 4294901760
        %1469 = vmatprep.subr.mxu0 %v1468
        %v1470 = vand.u32 %v443, 4294901760
        %v1471 = vsub.f32 %v443, %v1470
        %v1472 = vand.u32 %v1471, 4294901760
        %1473 = vmatpush1.msra.mxu0 %v1472
        %v1474 = vand.u32 %v446, 4294901760
        %v1475 = vsub.f32 %v446, %v1474
        %v1476 = vand.u32 %v1475, 4294901760
        %1477 = vmatprep.subr.mxu0 %v1476
        %v1478 = vand.u32 %v444, 4294901760
        %v1479 = vsub.f32 %v444, %v1478
        %v1480 = vand.u32 %v1479, 4294901760
        %1481 = vmatpush1.msra.mxu0 %v1480
        %1482 = vmatprep.subr.mxu0 0.0
        %1483 = vmatpush1.msra.mxu0 0.0
        %1484 = vmatprep.subr.mxu0 0.0
        %1485 = vmatpush1.msra.mxu0 0.0
        %1486 = vmatprep.subr.mxu0 0.0
        %1487 = vmatpush1.msra.mxu0 0.0
        %1488 = vmatprep.subr.mxu0 0.0
        %1489 = vmatpush1.msra.mxu0 0.0
        %1490 = vmatprep.subr.mxu0 0.0
        %1491 = vmatpush1.msra.mxu0 0.0
        %1492 = vmatprep.subr.mxu0 0.0
        %1493 = vmatpush1.msra.mxu0 0.0
        %1494 = vmatprep.subr.mxu0 0.0
        %1495 = vmatpush1.msra.mxu0 0.0
        %1496 = vmatprep.subr.mxu0 0.0
        %1497 = vmatpush1.msra.mxu0 0.0
        %1498 = vmatprep.subr.mxu0 0.0
        %1499 = vmatpush1.msra.mxu0 0.0
        %1500 = vmatprep.subr.mxu0 0.0
        %1501 = vmatpush1.msra.mxu0 0.0
        %1502 = vmatprep.subr.mxu0 0.0
        %1503 = vmatpush1.msra.mxu0 0.0
        %1504 = vmatprep.subr.mxu0 0.0
        %1505 = vmatpush1.msra.mxu0 0.0
        %1506 = vmatprep.subr.mxu0 0.0
        %1507 = vmatpush1.msra.mxu0 0.0
        %1508 = vmatprep.subr.mxu0 0.0
        %1509 = vmatpush1.msra.mxu0 0.0
        %1510 = vmatprep.subr.mxu0 0.0
        %1511 = vmatpush1.msra.mxu0 0.0
        %1512 = vmatprep.subr.mxu0 0.0
        %1513 = vmatpush1.msra.mxu0 0.0
        %1514 = vmatprep.subr.mxu0 0.0
        %1515 = vmatpush1.msra.mxu0 0.0
        %1516 = vmatprep.subr.mxu0 0.0
        %1517 = vmatpush1.msra.mxu0 0.0
        %1518 = vmatprep.subr.mxu0 0.0
        %1519 = vmatpush1.msra.mxu0 0.0
        %1520 = vmatprep.subr.mxu0 0.0
        %1521 = vmatpush1.msra.mxu0 0.0
        %1522 = vmatprep.subr.mxu0 0.0
        %1523 = vmatpush1.msra.mxu0 0.0
        %1524 = vmatprep.subr.mxu0 0.0
        %1525 = vmatpush1.msra.mxu0 0.0
        %1526 = vmatprep.subr.mxu0 0.0
        %1527 = vmatpush1.msra.mxu0 0.0
        %1528 = vmatprep.subr.mxu0 0.0
        %1529 = vmatpush1.msra.mxu0 0.0
        %1530 = vmatprep.subr.mxu0 0.0
        %1531 = vmatpush1.msra.mxu0 0.0
        %1532 = vmatprep.subr.mxu0 0.0
        %1533 = vmatpush1.msra.mxu0 0.0
        %1534 = vmatprep.subr.mxu0 0.0
        %1535 = vmatpush1.msra.mxu0 0.0
        %1536 = vmatprep.subr.mxu0 0.0
        %1537 = vmatpush1.msra.mxu0 0.0
        %1538 = vmatprep.subr.mxu0 0.0
        %1539 = vmatpush1.msra.mxu0 0.0
        %1540 = vmatprep.subr.mxu0 0.0
        %1541 = vmatpush1.msra.mxu0 0.0
        %1542 = vmatprep.mubr.f32.mxu0 0.0
        %v1543 = vand.u32 %v563, 4294901760
        %1544 = vmatmul.mubr.f32.gmra.mrb[0].mxu0 %v1543
        %v1545 = vpop.f32.mrb[0].mxu0
        %v1546 = vadd.f32 %v1327, %v1545
        %v1547 = vpop.f32.mrb[0].mxu0
        %v1548 = vadd.f32 %v1329, %v1547
        %1549 = vmatprep.mubr.f32.mxu0 0.0
        %v1550 = vand.u32 %v566, 4294901760
        %1551 = vmatmul.mubr.f32.gmra.mrb[0].mxu0 %v1550
        %v1552 = vpop.f32.mrb[0].mxu0
        %v1553 = vadd.f32 %v1336, %v1552
        %v1554 = vpop.f32.mrb[0].mxu0
        %v1555 = vadd.f32 %v1338, %v1554
        %1556 = vmatprep.mubr.f32.mxu0 0.0
        %v1557 = vand.u32 %v569, 4294901760
        %1558 = vmatmul.mubr.f32.gmra.mrb[0].mxu0 %v1557
        %v1559 = vpop.f32.mrb[0].mxu0
        %v1560 = vadd.f32 %v1345, %v1559
        %v1561 = vpop.f32.mrb[0].mxu0
        %v1562 = vadd.f32 %v1347, %v1561
        %1563 = vmatprep.mubr.f32.mxu0 0.0
        %v1564 = vand.u32 %v572, 4294901760
        %1565 = vmatmul.mubr.f32.gmra.mrb[0].mxu0 %v1564
        %v1566 = vpop.f32.mrb[0].mxu0
        %v1567 = vadd.f32 %v1354, %v1566
        %v1568 = vpop.f32.mrb[0].mxu0
        %v1569 = vadd.f32 %v1356, %v1568
        %1570 = vmatprep.mubr.f32.mxu0 0.0
        %v1571 = vand.u32 %v575, 4294901760
        %1572 = vmatmul.mubr.f32.gmra.mrb[0].mxu0 %v1571
        %v1573 = vpop.f32.mrb[0].mxu0
        %v1574 = vadd.f32 %v1363, %v1573
        %v1575 = vpop.f32.mrb[0].mxu0
        %v1576 = vadd.f32 %v1365, %v1575
        %1577 = vmatprep.mubr.f32.mxu0 0.0
        %v1578 = vand.u32 %v578, 4294901760
        %1579 = vmatmul.mubr.f32.gmra.mrb[0].mxu0 %v1578
        %v1580 = vpop.f32.mrb[0].mxu0
        %v1581 = vadd.f32 %v1372, %v1580
        %v1582 = vpop.f32.mrb[0].mxu0
        %v1583 = vadd.f32 %v1374, %v1582
        %1584 = vmatprep.mubr.f32.mxu0 0.0
        %v1585 = vand.u32 %v581, 4294901760
        %1586 = vmatmul.mubr.f32.gmra.mrb[0].mxu0 %v1585
        %v1587 = vpop.f32.mrb[0].mxu0
        %v1588 = vadd.f32 %v1381, %v1587
        %v1589 = vpop.f32.mrb[0].mxu0
        %v1590 = vadd.f32 %v1383, %v1589
        %1591 = vmatprep.mubr.f32.mxu0 0.0
        %v1592 = vand.u32 %v584, 4294901760
        %1593 = vmatmul.mubr.f32.gmra.mrb[0].mxu0 %v1592
        %v1594 = vpop.f32.mrb[0].mxu0
        %v1595 = vadd.f32 %v1390, %v1594
        %v1596 = vpop.f32.mrb[0].mxu0
        %v1597 = vadd.f32 %v1392, %v1596
        %1598 = vmatprep.mubr.f32.mxu0 0.0
        %v1599 = vand.u32 %v587, 4294901760
        %1600 = vmatmul.mubr.f32.gmra.mrb[0].mxu0 %v1599
        %v1601 = vpop.f32.mrb[0].mxu0
        %v1602 = vadd.f32 %v1399, %v1601
        %v1603 = vpop.f32.mrb[0].mxu0
        %v1604 = vadd.f32 %v1401, %v1603
        %1605 = vmatprep.mubr.f32.mxu0 0.0
        %v1606 = vand.u32 %v590, 4294901760
        %1607 = vmatmul.mubr.f32.gmra.mrb[0].mxu0 %v1606
        %v1608 = vpop.f32.mrb[0].mxu0
        %v1609 = vadd.f32 %v1408, %v1608
        %v1610 = vpop.f32.mrb[0].mxu0
        %v1611 = vadd.f32 %v1410, %v1610
        %1612 = vmatprep.mubr.f32.mxu0 0.0
        %v1613 = vand.u32 %v593, 4294901760
        %1614 = vmatmul.mubr.f32.gmra.mrb[0].mxu0 %v1613
        %v1615 = vpop.f32.mrb[0].mxu0
        %v1616 = vadd.f32 %v1417, %v1615
        %v1617 = vpop.f32.mrb[0].mxu0
        %v1618 = vadd.f32 %v1419, %v1617
        %1619 = vmatprep.mubr.f32.mxu0 0.0
        %v1620 = vand.u32 %v596, 4294901760
        %1621 = vmatmul.mubr.f32.gmra.mrb[0].mxu0 %v1620
        %v1622 = vpop.f32.mrb[0].mxu0
        %v1623 = vadd.f32 %v1426, %v1622
        %v1624 = vpop.f32.mrb[0].mxu0
        %v1625 = vadd.f32 %v1428, %v1624
        %1626 = vmatprep.mubr.f32.mxu0 0.0
        %v1627 = vand.u32 %v599, 4294901760
        %1628 = vmatmul.mubr.f32.gmra.mrb[0].mxu0 %v1627
        %v1629 = vpop.f32.mrb[0].mxu0
        %v1630 = vadd.f32 %v1435, %v1629
        %v1631 = vpop.f32.mrb[0].mxu0
        %v1632 = vadd.f32 %v1437, %v1631
        %1633 = vmatprep.mubr.f32.mxu0 0.0
        %v1634 = vand.u32 %v602, 4294901760
        %1635 = vmatmul.mubr.f32.gmra.mrb[0].mxu0 %v1634
        %v1636 = vpop.f32.mrb[0].mxu0
        %v1637 = vadd.f32 %v1444, %v1636
        %v1638 = vpop.f32.mrb[0].mxu0
        %v1639 = vadd.f32 %v1446, %v1638
        %1640 = vmatprep.mubr.f32.mxu0 0.0
        %v1641 = vand.u32 %v605, 4294901760
        %1642 = vmatmul.mubr.f32.gmra.mrb[0].mxu0 %v1641
        %v1643 = vpop.f32.mrb[0].mxu0
        %v1644 = vadd.f32 %v1453, %v1643
        %v1645 = vpop.f32.mrb[0].mxu0
        %v1646 = vadd.f32 %v1455, %v1645
        %1647 = vmatprep.mubr.f32.mxu0 0.0
        %v1648 = vand.u32 %v608, 4294901760
        %1649 = vmatmul.mubr.f32.gmra.mrb[0].mxu0 %v1648
        %v1650 = vpop.f32.mrb[0].mxu0
        %v1651 = vadd.f32 %v1462, %v1650
        %v1652 = vpop.f32.mrb[0].mxu0
        %v1653 = vadd.f32 %v1464, %v1652
        %1654 = vdwg.mxu0
        %v1655 = vand.u32 %v445, 4294901760
        %1656 = vmatprep.subr.mxu0 %v1655
        %v1657 = vand.u32 %v443, 4294901760
        %1658 = vmatpush1.msra.mxu0 %v1657
        %v1659 = vand.u32 %v446, 4294901760
        %1660 = vmatprep.subr.mxu0 %v1659
        %v1661 = vand.u32 %v444, 4294901760
        %1662 = vmatpush1.msra.mxu0 %v1661
        %1663 = vmatprep.subr.mxu0 0.0
        %1664 = vmatpush1.msra.mxu0 0.0
        %1665 = vmatprep.subr.mxu0 0.0
        %1666 = vmatpush1.msra.mxu0 0.0
        %1667 = vmatprep.subr.mxu0 0.0
        %1668 = vmatpush1.msra.mxu0 0.0
        %1669 = vmatprep.subr.mxu0 0.0
        %1670 = vmatpush1.msra.mxu0 0.0
        %1671 = vmatprep.subr.mxu0 0.0
        %1672 = vmatpush1.msra.mxu0 0.0
        %1673 = vmatprep.subr.mxu0 0.0
        %1674 = vmatpush1.msra.mxu0 0.0
        %1675 = vmatprep.subr.mxu0 0.0
        %1676 = vmatpush1.msra.mxu0 0.0
        %1677 = vmatprep.subr.mxu0 0.0
        %1678 = vmatpush1.msra.mxu0 0.0
        %1679 = vmatprep.subr.mxu0 0.0
        %1680 = vmatpush1.msra.mxu0 0.0
        %1681 = vmatprep.subr.mxu0 0.0
        %1682 = vmatpush1.msra.mxu0 0.0
        %1683 = vmatprep.subr.mxu0 0.0
        %1684 = vmatpush1.msra.mxu0 0.0
        %1685 = vmatprep.subr.mxu0 0.0
        %1686 = vmatpush1.msra.mxu0 0.0
        %1687 = vmatprep.subr.mxu0 0.0
        %1688 = vmatpush1.msra.mxu0 0.0
        %1689 = vmatprep.subr.mxu0 0.0
        %1690 = vmatpush1.msra.mxu0 0.0
        %1691 = vmatprep.subr.mxu0 0.0
        %1692 = vmatpush1.msra.mxu0 0.0
        %1693 = vmatprep.subr.mxu0 0.0
        %1694 = vmatpush1.msra.mxu0 0.0
        %1695 = vmatprep.subr.mxu0 0.0
        %1696 = vmatpush1.msra.mxu0 0.0
        %1697 = vmatprep.subr.mxu0 0.0
        %1698 = vmatpush1.msra.mxu0 0.0
        %1699 = vmatprep.subr.mxu0 0.0
        %1700 = vmatpush1.msra.mxu0 0.0
        %1701 = vmatprep.subr.mxu0 0.0
        %1702 = vmatpush1.msra.mxu0 0.0
        %1703 = vmatprep.subr.mxu0 0.0
        %1704 = vmatpush1.msra.mxu0 0.0
        %1705 = vmatprep.subr.mxu0 0.0
        %1706 = vmatpush1.msra.mxu0 0.0
        %1707 = vmatprep.subr.mxu0 0.0
        %1708 = vmatpush1.msra.mxu0 0.0
        %1709 = vmatprep.subr.mxu0 0.0
        %1710 = vmatpush1.msra.mxu0 0.0
        %1711 = vmatprep.subr.mxu0 0.0
        %1712 = vmatpush1.msra.mxu0 0.0
        %1713 = vmatprep.subr.mxu0 0.0
        %1714 = vmatpush1.msra.mxu0 0.0
        %1715 = vmatprep.subr.mxu0 0.0
        %1716 = vmatpush1.msra.mxu0 0.0
        %1717 = vmatprep.subr.mxu0 0.0
        %1718 = vmatpush1.msra.mxu0 0.0
        %1719 = vmatprep.subr.mxu0 0.0
        %1720 = vmatpush1.msra.mxu0 0.0
        %1721 = vmatprep.subr.mxu0 0.0
        %1722 = vmatpush1.msra.mxu0 0.0
        %1723 = vmatprep.mubr.f32.mxu0 0.0
        %v1724 = vand.u32 %v563, 4294901760
        %1725 = vmatmul.mubr.f32.gmra.mrb[0].mxu0 %v1724
        %v1726 = vpop.f32.mrb[0].mxu0
        %v1727 = vadd.f32 %v1546, %v1726
        %v1728 = vpop.f32.mrb[0].mxu0
        %v1729 = vadd.f32 %v1548, %v1728
        %1730 = vmatprep.mubr.f32.mxu0 0.0
        %v1731 = vand.u32 %v566, 4294901760
        %1732 = vmatmul.mubr.f32.gmra.mrb[0].mxu0 %v1731
        %v1733 = vpop.f32.mrb[0].mxu0
        %v1734 = vadd.f32 %v1553, %v1733
        %v1735 = vpop.f32.mrb[0].mxu0
        %v1736 = vadd.f32 %v1555, %v1735
        %1737 = vmatprep.mubr.f32.mxu0 0.0
        %v1738 = vand.u32 %v569, 4294901760
        %1739 = vmatmul.mubr.f32.gmra.mrb[0].mxu0 %v1738
        %v1740 = vpop.f32.mrb[0].mxu0
        %v1741 = vadd.f32 %v1560, %v1740
        %v1742 = vpop.f32.mrb[0].mxu0
        %v1743 = vadd.f32 %v1562, %v1742
        %1744 = vmatprep.mubr.f32.mxu0 0.0
        %v1745 = vand.u32 %v572, 4294901760
        %1746 = vmatmul.mubr.f32.gmra.mrb[0].mxu0 %v1745
        %v1747 = vpop.f32.mrb[0].mxu0
        %v1748 = vadd.f32 %v1567, %v1747
        %v1749 = vpop.f32.mrb[0].mxu0
        %v1750 = vadd.f32 %v1569, %v1749
        %1751 = vmatprep.mubr.f32.mxu0 0.0
        %v1752 = vand.u32 %v575, 4294901760
        %1753 = vmatmul.mubr.f32.gmra.mrb[0].mxu0 %v1752
        %v1754 = vpop.f32.mrb[0].mxu0
        %v1755 = vadd.f32 %v1574, %v1754
        %v1756 = vpop.f32.mrb[0].mxu0
        %v1757 = vadd.f32 %v1576, %v1756
        %1758 = vmatprep.mubr.f32.mxu0 0.0
        %v1759 = vand.u32 %v578, 4294901760
        %1760 = vmatmul.mubr.f32.gmra.mrb[0].mxu0 %v1759
        %v1761 = vpop.f32.mrb[0].mxu0
        %v1762 = vadd.f32 %v1581, %v1761
        %v1763 = vpop.f32.mrb[0].mxu0
        %v1764 = vadd.f32 %v1583, %v1763
        %1765 = vmatprep.mubr.f32.mxu0 0.0
        %v1766 = vand.u32 %v581, 4294901760
        %1767 = vmatmul.mubr.f32.gmra.mrb[0].mxu0 %v1766
        %v1768 = vpop.f32.mrb[0].mxu0
        %v1769 = vadd.f32 %v1588, %v1768
        %v1770 = vpop.f32.mrb[0].mxu0
        %v1771 = vadd.f32 %v1590, %v1770
        %1772 = vmatprep.mubr.f32.mxu0 0.0
        %v1773 = vand.u32 %v584, 4294901760
        %1774 = vmatmul.mubr.f32.gmra.mrb[0].mxu0 %v1773
        %v1775 = vpop.f32.mrb[0].mxu0
        %v1776 = vadd.f32 %v1595, %v1775
        %v1777 = vpop.f32.mrb[0].mxu0
        %v1778 = vadd.f32 %v1597, %v1777
        %1779 = vmatprep.mubr.f32.mxu0 0.0
        %v1780 = vand.u32 %v587, 4294901760
        %1781 = vmatmul.mubr.f32.gmra.mrb[0].mxu0 %v1780
        %v1782 = vpop.f32.mrb[0].mxu0
        %v1783 = vadd.f32 %v1602, %v1782
        %v1784 = vpop.f32.mrb[0].mxu0
        %v1785 = vadd.f32 %v1604, %v1784
        %1786 = vmatprep.mubr.f32.mxu0 0.0
        %v1787 = vand.u32 %v590, 4294901760
        %1788 = vmatmul.mubr.f32.gmra.mrb[0].mxu0 %v1787
        %v1789 = vpop.f32.mrb[0].mxu0
        %v1790 = vadd.f32 %v1609, %v1789
        %v1791 = vpop.f32.mrb[0].mxu0
        %v1792 = vadd.f32 %v1611, %v1791
        %1793 = vmatprep.mubr.f32.mxu0 0.0
        %v1794 = vand.u32 %v593, 4294901760
        %1795 = vmatmul.mubr.f32.gmra.mrb[0].mxu0 %v1794
        %v1796 = vpop.f32.mrb[0].mxu0
        %v1797 = vadd.f32 %v1616, %v1796
        %v1798 = vpop.f32.mrb[0].mxu0
        %v1799 = vadd.f32 %v1618, %v1798
        %1800 = vmatprep.mubr.f32.mxu0 0.0
        %v1801 = vand.u32 %v596, 4294901760
        %1802 = vmatmul.mubr.f32.gmra.mrb[0].mxu0 %v1801
        %v1803 = vpop.f32.mrb[0].mxu0
        %v1804 = vadd.f32 %v1623, %v1803
        %v1805 = vpop.f32.mrb[0].mxu0
        %v1806 = vadd.f32 %v1625, %v1805
        %1807 = vmatprep.mubr.f32.mxu0 0.0
        %v1808 = vand.u32 %v599, 4294901760
        %1809 = vmatmul.mubr.f32.gmra.mrb[0].mxu0 %v1808
        %v1810 = vpop.f32.mrb[0].mxu0
        %v1811 = vadd.f32 %v1630, %v1810
        %v1812 = vpop.f32.mrb[0].mxu0
        %v1813 = vadd.f32 %v1632, %v1812
        %1814 = vmatprep.mubr.f32.mxu0 0.0
        %v1815 = vand.u32 %v602, 4294901760
        %1816 = vmatmul.mubr.f32.gmra.mrb[0].mxu0 %v1815
        %v1817 = vpop.f32.mrb[0].mxu0
        %v1818 = vadd.f32 %v1637, %v1817
        %v1819 = vpop.f32.mrb[0].mxu0
        %v1820 = vadd.f32 %v1639, %v1819
        %1821 = vmatprep.mubr.f32.mxu0 0.0
        %v1822 = vand.u32 %v605, 4294901760
        %1823 = vmatmul.mubr.f32.gmra.mrb[0].mxu0 %v1822
        %v1824 = vpop.f32.mrb[0].mxu0
        %v1825 = vadd.f32 %v1644, %v1824
        %v1826 = vpop.f32.mrb[0].mxu0
        %v1827 = vadd.f32 %v1646, %v1826
        %1828 = vmatprep.mubr.f32.mxu0 0.0
        %v1829 = vand.u32 %v608, 4294901760
        %1830 = vmatmul.mubr.f32.gmra.mrb[0].mxu0 %v1829
        %v1831 = vpop.f32.mrb[0].mxu0
        %v1832 = vadd.f32 %v1651, %v1831
        %v1833 = vpop.f32.mrb[0].mxu0
        %v1834 = vadd.f32 %v1653, %v1833
        %1835 = vdwg.mxu0
        %v1836 = vmax.f32 %v1727, 0.0
        %v1837 = vmax.f32 %v1729, 0.0
        %v1838 = vmax.f32 %v1734, 0.0
        %v1839 = vmax.f32 %v1736, 0.0
        %v1840 = vmax.f32 %v1741, 0.0
        %v1841 = vmax.f32 %v1743, 0.0
        %v1842 = vmax.f32 %v1748, 0.0
        %v1843 = vmax.f32 %v1750, 0.0
        %v1844 = vmax.f32 %v1755, 0.0
        %v1845 = vmax.f32 %v1757, 0.0
        %v1846 = vmax.f32 %v1762, 0.0
        %v1847 = vmax.f32 %v1764, 0.0
        %v1848 = vmax.f32 %v1769, 0.0
        %v1849 = vmax.f32 %v1771, 0.0
        %v1850 = vmax.f32 %v1776, 0.0
        %v1851 = vmax.f32 %v1778, 0.0
        %v1852 = vmax.f32 %v1783, 0.0
        %v1853 = vmax.f32 %v1785, 0.0
        %v1854 = vmax.f32 %v1790, 0.0
        %v1855 = vmax.f32 %v1792, 0.0
        %v1856 = vmax.f32 %v1797, 0.0
        %v1857 = vmax.f32 %v1799, 0.0
        %v1858 = vmax.f32 %v1804, 0.0
        %v1859 = vmax.f32 %v1806, 0.0
        %v1860 = vmax.f32 %v1811, 0.0
        %v1861 = vmax.f32 %v1813, 0.0
        %v1862 = vmax.f32 %v1818, 0.0
        %v1863 = vmax.f32 %v1820, 0.0
        %v1864 = vmax.f32 %v1825, 0.0
        %v1865 = vmax.f32 %v1827, 0.0
        %v1866 = vmax.f32 %v1832, 0.0
        %v1867 = vmax.f32 %v1834, 0.0
        %v1868 = vld [vmem:[%s5] sm:$0xff]
        %v1869 = vld [vmem:[%s5 + $0x8] sm:$0xff]
        %v1870 = vld [vmem:[%s5 + $0x10] sm:$0xff]
        %v1871 = vld [vmem:[%s5 + $0x18] sm:$0xff]
        %v1872 = vld [vmem:[%s5 + $0x20] sm:$0xff]
        %v1873 = vld [vmem:[%s5 + $0x28] sm:$0xff]
        %v1874 = vld [vmem:[%s5 + $0x30] sm:$0xff]
        %v1875 = vld [vmem:[%s5 + $0x38] sm:$0xff]
        %v1876 = vld [vmem:[%s5 + $0x40] sm:$0xff]
        %v1877 = vld [vmem:[%s5 + $0x48] sm:$0xff]
        %v1878 = vld [vmem:[%s5 + $0x50] sm:$0xff]
        %v1879 = vld [vmem:[%s5 + $0x58] sm:$0xff]
        %v1880 = vld [vmem:[%s5 + $0x60] sm:$0xff]
        %v1881 = vld [vmem:[%s5 + $0x68] sm:$0xff]
        %v1882 = vld [vmem:[%s5 + $0x70] sm:$0xff]
        %v1883 = vld [vmem:[%s5 + $0x78] sm:$0xff]
        %v1884 = vld [vmem:[%s6] sm:$0xff]
        %v1885 = vld [vmem:[%s6 + $0x8] sm:$0xff]
        %v1886 = vld [vmem:[%s6 + $0x10] sm:$0xff]
        %v1887 = vld [vmem:[%s6 + $0x18] sm:$0xff]
        %v1888 = vld [vmem:[%s6 + $0x20] sm:$0xff]
        %v1889 = vld [vmem:[%s6 + $0x28] sm:$0xff]
        %v1890 = vld [vmem:[%s6 + $0x30] sm:$0xff]
        %v1891 = vld [vmem:[%s6 + $0x38] sm:$0xff]
        %v1892 = vld [vmem:[%s6 + $0x40] sm:$0xff]
        %v1893 = vld [vmem:[%s6 + $0x48] sm:$0xff]
        %v1894 = vld [vmem:[%s6 + $0x50] sm:$0xff]
        %v1895 = vld [vmem:[%s6 + $0x58] sm:$0xff]
        %v1896 = vld [vmem:[%s6 + $0x60] sm:$0xff]
        %v1897 = vld [vmem:[%s6 + $0x68] sm:$0xff]
        %v1898 = vld [vmem:[%s6 + $0x70] sm:$0xff]
        %v1899 = vld [vmem:[%s6 + $0x78] sm:$0xff]
        %1901 = vset.pattern.permute.xlu0 0
        %1902 = vperm.xlu0 %1901, %v1884
        %v1903 = vpop.permute.xlu0 %1902
        %1906 = vset.pattern.permute.xlu0 0
        %1907 = vperm.xlu0 %1906, %v1885
        %v1908 = vpop.permute.xlu0 %1907
        %1911 = vset.pattern.permute.xlu0 0
        %1912 = vperm.xlu0 %1911, %v1886
        %v1913 = vpop.permute.xlu0 %1912
        %1916 = vset.pattern.permute.xlu0 0
        %1917 = vperm.xlu0 %1916, %v1887
        %v1918 = vpop.permute.xlu0 %1917
        %1921 = vset.pattern.permute.xlu0 0
        %1922 = vperm.xlu0 %1921, %v1888
        %v1923 = vpop.permute.xlu0 %1922
        %1926 = vset.pattern.permute.xlu0 0
        %1927 = vperm.xlu0 %1926, %v1889
        %v1928 = vpop.permute.xlu0 %1927
        %1931 = vset.pattern.permute.xlu0 0
        %1932 = vperm.xlu0 %1931, %v1890
        %v1933 = vpop.permute.xlu0 %1932
        %1936 = vset.pattern.permute.xlu0 0
        %1937 = vperm.xlu0 %1936, %v1891
        %v1938 = vpop.permute.xlu0 %1937
        %1941 = vset.pattern.permute.xlu0 0
        %1942 = vperm.xlu0 %1941, %v1892
        %v1943 = vpop.permute.xlu0 %1942
        %1946 = vset.pattern.permute.xlu0 0
        %1947 = vperm.xlu0 %1946, %v1893
        %v1948 = vpop.permute.xlu0 %1947
        %1951 = vset.pattern.permute.xlu0 0
        %1952 = vperm.xlu0 %1951, %v1894
        %v1953 = vpop.permute.xlu0 %1952
        %1956 = vset.pattern.permute.xlu0 0
        %1957 = vperm.xlu0 %1956, %v1895
        %v1958 = vpop.permute.xlu0 %1957
        %1961 = vset.pattern.permute.xlu0 0
        %1962 = vperm.xlu0 %1961, %v1896
        %v1963 = vpop.permute.xlu0 %1962
        %1966 = vset.pattern.permute.xlu0 0
        %1967 = vperm.xlu0 %1966, %v1897
        %v1968 = vpop.permute.xlu0 %1967
        %1971 = vset.pattern.permute.xlu0 0
        %1972 = vperm.xlu0 %1971, %v1898
        %v1973 = vpop.permute.xlu0 %1972
        %1976 = vset.pattern.permute.xlu0 0
        %1977 = vperm.xlu0 %1976, %v1899
        %v1978 = vpop.permute.xlu0 %1977
        %v1980 = vand.u32 %v1837, 4294901760
        %1981 = vmatprep.subr.mxu0 %v1980
        %v1982 = vand.u32 %v1836, 4294901760
        %1983 = vmatpush1.msra.mxu0 %v1982
        %v1984 = vand.u32 %v1839, 4294901760
        %1985 = vmatprep.subr.mxu0 %v1984
        %v1986 = vand.u32 %v1838, 4294901760
        %1987 = vmatpush1.msra.mxu0 %v1986
        %v1988 = vand.u32 %v1841, 4294901760
        %1989 = vmatprep.subr.mxu0 %v1988
        %v1990 = vand.u32 %v1840, 4294901760
        %1991 = vmatpush1.msra.mxu0 %v1990
        %v1992 = vand.u32 %v1843, 4294901760
        %1993 = vmatprep.subr.mxu0 %v1992
        %v1994 = vand.u32 %v1842, 4294901760
        %1995 = vmatpush1.msra.mxu0 %v1994
        %v1996 = vand.u32 %v1845, 4294901760
        %1997 = vmatprep.subr.mxu0 %v1996
        %v1998 = vand.u32 %v1844, 4294901760
        %1999 = vmatpush1.msra.mxu0 %v1998
        %v2000 = vand.u32 %v1847, 4294901760
        %2001 = vmatprep.subr.mxu0 %v2000
        %v2002 = vand.u32 %v1846, 4294901760
        %2003 = vmatpush1.msra.mxu0 %v2002
        %v2004 = vand.u32 %v1849, 4294901760
        %2005 = vmatprep.subr.mxu0 %v2004
        %v2006 = vand.u32 %v1848, 4294901760
        %2007 = vmatpush1.msra.mxu0 %v2006
        %v2008 = vand.u32 %v1851, 4294901760
        %2009 = vmatprep.subr.mxu0 %v2008
        %v2010 = vand.u32 %v1850, 4294901760
        %2011 = vmatpush1.msra.mxu0 %v2010
        %v2012 = vand.u32 %v1853, 4294901760
        %2013 = vmatprep.subr.mxu0 %v2012
        %v2014 = vand.u32 %v1852, 4294901760
        %2015 = vmatpush1.msra.mxu0 %v2014
        %v2016 = vand.u32 %v1855, 4294901760
        %2017 = vmatprep.subr.mxu0 %v2016
        %v2018 = vand.u32 %v1854, 4294901760
        %2019 = vmatpush1.msra.mxu0 %v2018
        %v2020 = vand.u32 %v1857, 4294901760
        %2021 = vmatprep.subr.mxu0 %v2020
        %v2022 = vand.u32 %v1856, 4294901760
        %2023 = vmatpush1.msra.mxu0 %v2022
        %v2024 = vand.u32 %v1859, 4294901760
        %2025 = vmatprep.subr.mxu0 %v2024
        %v2026 = vand.u32 %v1858, 4294901760
        %2027 = vmatpush1.msra.mxu0 %v2026
        %v2028 = vand.u32 %v1861, 4294901760
        %2029 = vmatprep.subr.mxu0 %v2028
        %v2030 = vand.u32 %v1860, 4294901760
        %2031 = vmatpush1.msra.mxu0 %v2030
        %v2032 = vand.u32 %v1863, 4294901760
        %2033 = vmatprep.subr.mxu0 %v2032
        %v2034 = vand.u32 %v1862, 4294901760
        %2035 = vmatpush1.msra.mxu0 %v2034
        %v2036 = vand.u32 %v1865, 4294901760
        %2037 = vmatprep.subr.mxu0 %v2036
        %v2038 = vand.u32 %v1864, 4294901760
        %2039 = vmatpush1.msra.mxu0 %v2038
        %v2040 = vand.u32 %v1867, 4294901760
        %2041 = vmatprep.subr.mxu0 %v2040
        %v2042 = vand.u32 %v1866, 4294901760
        %2043 = vmatpush1.msra.mxu0 %v2042
        %2044 = vmatprep.subr.mxu0 0.0
        %2045 = vmatpush1.msra.mxu0 0.0
        %2046 = vmatprep.subr.mxu0 0.0
        %2047 = vmatpush1.msra.mxu0 0.0
        %2048 = vmatprep.subr.mxu0 0.0
        %2049 = vmatpush1.msra.mxu0 0.0
        %2050 = vmatprep.subr.mxu0 0.0
        %2051 = vmatpush1.msra.mxu0 0.0
        %2052 = vmatprep.subr.mxu0 0.0
        %2053 = vmatpush1.msra.mxu0 0.0
        %2054 = vmatprep.subr.mxu0 0.0
        %2055 = vmatpush1.msra.mxu0 0.0
        %2056 = vmatprep.subr.mxu0 0.0
        %2057 = vmatpush1.msra.mxu0 0.0
        %2058 = vmatprep.subr.mxu0 0.0
        %2059 = vmatpush1.msra.mxu0 0.0
        %2060 = vmatprep.subr.mxu0 0.0
        %2061 = vmatpush1.msra.mxu0 0.0
        %2062 = vmatprep.subr.mxu0 0.0
        %2063 = vmatpush1.msra.mxu0 0.0
        %2064 = vmatprep.subr.mxu0 0.0
        %2065 = vmatpush1.msra.mxu0 0.0
        %2066 = vmatprep.subr.mxu0 0.0
        %2067 = vmatpush1.msra.mxu0 0.0
        %2068 = vmatprep.subr.mxu0 0.0
        %2069 = vmatpush1.msra.mxu0 0.0
        %2070 = vmatprep.subr.mxu0 0.0
        %2071 = vmatpush1.msra.mxu0 0.0
        %2072 = vmatprep.subr.mxu0 0.0
        %2073 = vmatpush1.msra.mxu0 0.0
        %2074 = vmatprep.subr.mxu0 0.0
        %2075 = vmatpush1.msra.mxu0 0.0
        %2076 = vmatprep.mubr.f32.mxu0 0.0
        %v2077 = vand.u32 %v1868, 4294901760
        %v2078 = vsub.f32 %v1868, %v2077
        %v2079 = vand.u32 %v2078, 4294901760
        %v2080 = vsub.f32 %v2078, %v2079
        %v2081 = vand.u32 %v2080, 4294901760
        %2082 = vmatmul.mubr.f32.gmra.mrb[0].mxu0 %v2081
        %v2083 = vpop.f32.mrb[0].mxu0
        %v2084 = vadd.f32 %v1903, %v2083
        %v2085 = vpop.f32.mrb[0].mxu0
        %v2086 = vadd.f32 %v1903, %v2085
        %2087 = vmatprep.mubr.f32.mxu0 0.0
        %v2088 = vand.u32 %v1869, 4294901760
        %v2089 = vsub.f32 %v1869, %v2088
        %v2090 = vand.u32 %v2089, 4294901760
        %v2091 = vsub.f32 %v2089, %v2090
        %v2092 = vand.u32 %v2091, 4294901760
        %2093 = vmatmul.mubr.f32.gmra.mrb[0].mxu0 %v2092
        %v2094 = vpop.f32.mrb[0].mxu0
        %v2095 = vadd.f32 %v1908, %v2094
        %v2096 = vpop.f32.mrb[0].mxu0
        %v2097 = vadd.f32 %v1908, %v2096
        %2098 = vmatprep.mubr.f32.mxu0 0.0
        %v2099 = vand.u32 %v1870, 4294901760
        %v2100 = vsub.f32 %v1870, %v2099
        %v2101 = vand.u32 %v2100, 4294901760
        %v2102 = vsub.f32 %v2100, %v2101
        %v2103 = vand.u32 %v2102, 4294901760
        %2104 = vmatmul.mubr.f32.gmra.mrb[0].mxu0 %v2103
        %v2105 = vpop.f32.mrb[0].mxu0
        %v2106 = vadd.f32 %v1913, %v2105
        %v2107 = vpop.f32.mrb[0].mxu0
        %v2108 = vadd.f32 %v1913, %v2107
        %2109 = vmatprep.mubr.f32.mxu0 0.0
        %v2110 = vand.u32 %v1871, 4294901760
        %v2111 = vsub.f32 %v1871, %v2110
        %v2112 = vand.u32 %v2111, 4294901760
        %v2113 = vsub.f32 %v2111, %v2112
        %v2114 = vand.u32 %v2113, 4294901760
        %2115 = vmatmul.mubr.f32.gmra.mrb[0].mxu0 %v2114
        %v2116 = vpop.f32.mrb[0].mxu0
        %v2117 = vadd.f32 %v1918, %v2116
        %v2118 = vpop.f32.mrb[0].mxu0
        %v2119 = vadd.f32 %v1918, %v2118
        %2120 = vmatprep.mubr.f32.mxu0 0.0
        %v2121 = vand.u32 %v1872, 4294901760
        %v2122 = vsub.f32 %v1872, %v2121
        %v2123 = vand.u32 %v2122, 4294901760
        %v2124 = vsub.f32 %v2122, %v2123
        %v2125 = vand.u32 %v2124, 4294901760
        %2126 = vmatmul.mubr.f32.gmra.mrb[0].mxu0 %v2125
        %v2127 = vpop.f32.mrb[0].mxu0
        %v2128 = vadd.f32 %v1923, %v2127
        %v2129 = vpop.f32.mrb[0].mxu0
        %v2130 = vadd.f32 %v1923, %v2129
        %2131 = vmatprep.mubr.f32.mxu0 0.0
        %v2132 = vand.u32 %v1873, 4294901760
        %v2133 = vsub.f32 %v1873, %v2132
        %v2134 = vand.u32 %v2133, 4294901760
        %v2135 = vsub.f32 %v2133, %v2134
        %v2136 = vand.u32 %v2135, 4294901760
        %2137 = vmatmul.mubr.f32.gmra.mrb[0].mxu0 %v2136
        %v2138 = vpop.f32.mrb[0].mxu0
        %v2139 = vadd.f32 %v1928, %v2138
        %v2140 = vpop.f32.mrb[0].mxu0
        %v2141 = vadd.f32 %v1928, %v2140
        %2142 = vmatprep.mubr.f32.mxu0 0.0
        %v2143 = vand.u32 %v1874, 4294901760
        %v2144 = vsub.f32 %v1874, %v2143
        %v2145 = vand.u32 %v2144, 4294901760
        %v2146 = vsub.f32 %v2144, %v2145
        %v2147 = vand.u32 %v2146, 4294901760
        %2148 = vmatmul.mubr.f32.gmra.mrb[0].mxu0 %v2147
        %v2149 = vpop.f32.mrb[0].mxu0
        %v2150 = vadd.f32 %v1933, %v2149
        %v2151 = vpop.f32.mrb[0].mxu0
        %v2152 = vadd.f32 %v1933, %v2151
        %2153 = vmatprep.mubr.f32.mxu0 0.0
        %v2154 = vand.u32 %v1875, 4294901760
        %v2155 = vsub.f32 %v1875, %v2154
        %v2156 = vand.u32 %v2155, 4294901760
        %v2157 = vsub.f32 %v2155, %v2156
        %v2158 = vand.u32 %v2157, 4294901760
        %2159 = vmatmul.mubr.f32.gmra.mrb[0].mxu0 %v2158
        %v2160 = vpop.f32.mrb[0].mxu0
        %v2161 = vadd.f32 %v1938, %v2160
        %v2162 = vpop.f32.mrb[0].mxu0
        %v2163 = vadd.f32 %v1938, %v2162
        %2164 = vmatprep.mubr.f32.mxu0 0.0
        %v2165 = vand.u32 %v1876, 4294901760
        %v2166 = vsub.f32 %v1876, %v2165
        %v2167 = vand.u32 %v2166, 4294901760
        %v2168 = vsub.f32 %v2166, %v2167
        %v2169 = vand.u32 %v2168, 4294901760
        %2170 = vmatmul.mubr.f32.gmra.mrb[0].mxu0 %v2169
        %v2171 = vpop.f32.mrb[0].mxu0
        %v2172 = vadd.f32 %v1943, %v2171
        %v2173 = vpop.f32.mrb[0].mxu0
        %v2174 = vadd.f32 %v1943, %v2173
        %2175 = vmatprep.mubr.f32.mxu0 0.0
        %v2176 = vand.u32 %v1877, 4294901760
        %v2177 = vsub.f32 %v1877, %v2176
        %v2178 = vand.u32 %v2177, 4294901760
        %v2179 = vsub.f32 %v2177, %v2178
        %v2180 = vand.u32 %v2179, 4294901760
        %2181 = vmatmul.mubr.f32.gmra.mrb[0].mxu0 %v2180
        %v2182 = vpop.f32.mrb[0].mxu0
        %v2183 = vadd.f32 %v1948, %v2182
        %v2184 = vpop.f32.mrb[0].mxu0
        %v2185 = vadd.f32 %v1948, %v2184
        %2186 = vmatprep.mubr.f32.mxu0 0.0
        %v2187 = vand.u32 %v1878, 4294901760
        %v2188 = vsub.f32 %v1878, %v2187
        %v2189 = vand.u32 %v2188, 4294901760
        %v2190 = vsub.f32 %v2188, %v2189
        %v2191 = vand.u32 %v2190, 4294901760
        %2192 = vmatmul.mubr.f32.gmra.mrb[0].mxu0 %v2191
        %v2193 = vpop.f32.mrb[0].mxu0
        %v2194 = vadd.f32 %v1953, %v2193
        %v2195 = vpop.f32.mrb[0].mxu0
        %v2196 = vadd.f32 %v1953, %v2195
        %2197 = vmatprep.mubr.f32.mxu0 0.0
        %v2198 = vand.u32 %v1879, 4294901760
        %v2199 = vsub.f32 %v1879, %v2198
        %v2200 = vand.u32 %v2199, 4294901760
        %v2201 = vsub.f32 %v2199, %v2200
        %v2202 = vand.u32 %v2201, 4294901760
        %2203 = vmatmul.mubr.f32.gmra.mrb[0].mxu0 %v2202
        %v2204 = vpop.f32.mrb[0].mxu0
        %v2205 = vadd.f32 %v1958, %v2204
        %v2206 = vpop.f32.mrb[0].mxu0
        %v2207 = vadd.f32 %v1958, %v2206
        %2208 = vmatprep.mubr.f32.mxu0 0.0
        %v2209 = vand.u32 %v1880, 4294901760
        %v2210 = vsub.f32 %v1880, %v2209
        %v2211 = vand.u32 %v2210, 4294901760
        %v2212 = vsub.f32 %v2210, %v2211
        %v2213 = vand.u32 %v2212, 4294901760
        %2214 = vmatmul.mubr.f32.gmra.mrb[0].mxu0 %v2213
        %v2215 = vpop.f32.mrb[0].mxu0
        %v2216 = vadd.f32 %v1963, %v2215
        %v2217 = vpop.f32.mrb[0].mxu0
        %v2218 = vadd.f32 %v1963, %v2217
        %2219 = vmatprep.mubr.f32.mxu0 0.0
        %v2220 = vand.u32 %v1881, 4294901760
        %v2221 = vsub.f32 %v1881, %v2220
        %v2222 = vand.u32 %v2221, 4294901760
        %v2223 = vsub.f32 %v2221, %v2222
        %v2224 = vand.u32 %v2223, 4294901760
        %2225 = vmatmul.mubr.f32.gmra.mrb[0].mxu0 %v2224
        %v2226 = vpop.f32.mrb[0].mxu0
        %v2227 = vadd.f32 %v1968, %v2226
        %v2228 = vpop.f32.mrb[0].mxu0
        %v2229 = vadd.f32 %v1968, %v2228
        %2230 = vmatprep.mubr.f32.mxu0 0.0
        %v2231 = vand.u32 %v1882, 4294901760
        %v2232 = vsub.f32 %v1882, %v2231
        %v2233 = vand.u32 %v2232, 4294901760
        %v2234 = vsub.f32 %v2232, %v2233
        %v2235 = vand.u32 %v2234, 4294901760
        %2236 = vmatmul.mubr.f32.gmra.mrb[0].mxu0 %v2235
        %v2237 = vpop.f32.mrb[0].mxu0
        %v2238 = vadd.f32 %v1973, %v2237
        %v2239 = vpop.f32.mrb[0].mxu0
        %v2240 = vadd.f32 %v1973, %v2239
        %2241 = vmatprep.mubr.f32.mxu0 0.0
        %v2242 = vand.u32 %v1883, 4294901760
        %v2243 = vsub.f32 %v1883, %v2242
        %v2244 = vand.u32 %v2243, 4294901760
        %v2245 = vsub.f32 %v2243, %v2244
        %v2246 = vand.u32 %v2245, 4294901760
        %2247 = vmatmul.mubr.f32.gmra.mrb[0].mxu0 %v2246
        %v2248 = vpop.f32.mrb[0].mxu0
        %v2249 = vadd.f32 %v1978, %v2248
        %v2250 = vpop.f32.mrb[0].mxu0
        %v2251 = vadd.f32 %v1978, %v2250
        %2252 = vdwg.mxu0
        %v2253 = vand.u32 %v1837, 4294901760
        %v2254 = vsub.f32 %v1837, %v2253
        %v2255 = vand.u32 %v2254, 4294901760
        %v2256 = vsub.f32 %v2254, %v2255
        %v2257 = vand.u32 %v2256, 4294901760
        %2258 = vmatprep.subr.mxu0 %v2257
        %v2259 = vand.u32 %v1836, 4294901760
        %v2260 = vsub.f32 %v1836, %v2259
        %v2261 = vand.u32 %v2260, 4294901760
        %v2262 = vsub.f32 %v2260, %v2261
        %v2263 = vand.u32 %v2262, 4294901760
        %2264 = vmatpush1.msra.mxu0 %v2263
        %v2265 = vand.u32 %v1839, 4294901760
        %v2266 = vsub.f32 %v1839, %v2265
        %v2267 = vand.u32 %v2266, 4294901760
        %v2268 = vsub.f32 %v2266, %v2267
        %v2269 = vand.u32 %v2268, 4294901760
        %2270 = vmatprep.subr.mxu0 %v2269
        %v2271 = vand.u32 %v1838, 4294901760
        %v2272 = vsub.f32 %v1838, %v2271
        %v2273 = vand.u32 %v2272, 4294901760
        %v2274 = vsub.f32 %v2272, %v2273
        %v2275 = vand.u32 %v2274, 4294901760
        %2276 = vmatpush1.msra.mxu0 %v2275
        %v2277 = vand.u32 %v1841, 4294901760
        %v2278 = vsub.f32 %v1841, %v2277
        %v2279 = vand.u32 %v2278, 4294901760
        %v2280 = vsub.f32 %v2278, %v2279
        %v2281 = vand.u32 %v2280, 4294901760
        %2282 = vmatprep.subr.mxu0 %v2281
        %v2283 = vand.u32 %v1840, 4294901760
        %v2284 = vsub.f32 %v1840, %v2283
        %v2285 = vand.u32 %v2284, 4294901760
        %v2286 = vsub.f32 %v2284, %v2285
        %v2287 = vand.u32 %v2286, 4294901760
        %2288 = vmatpush1.msra.mxu0 %v2287
        %v2289 = vand.u32 %v1843, 4294901760
        %v2290 = vsub.f32 %v1843, %v2289
        %v2291 = vand.u32 %v2290, 4294901760
        %v2292 = vsub.f32 %v2290, %v2291
        %v2293 = vand.u32 %v2292, 4294901760
        %2294 = vmatprep.subr.mxu0 %v2293
        %v2295 = vand.u32 %v1842, 4294901760
        %v2296 = vsub.f32 %v1842, %v2295
        %v2297 = vand.u32 %v2296, 4294901760
        %v2298 = vsub.f32 %v2296, %v2297
        %v2299 = vand.u32 %v2298, 4294901760
        %2300 = vmatpush1.msra.mxu0 %v2299
        %v2301 = vand.u32 %v1845, 4294901760
        %v2302 = vsub.f32 %v1845, %v2301
        %v2303 = vand.u32 %v2302, 4294901760
        %v2304 = vsub.f32 %v2302, %v2303
        %v2305 = vand.u32 %v2304, 4294901760
        %2306 = vmatprep.subr.mxu0 %v2305
        %v2307 = vand.u32 %v1844, 4294901760
        %v2308 = vsub.f32 %v1844, %v2307
        %v2309 = vand.u32 %v2308, 4294901760
        %v2310 = vsub.f32 %v2308, %v2309
        %v2311 = vand.u32 %v2310, 4294901760
        %2312 = vmatpush1.msra.mxu0 %v2311
        %v2313 = vand.u32 %v1847, 4294901760
        %v2314 = vsub.f32 %v1847, %v2313
        %v2315 = vand.u32 %v2314, 4294901760
        %v2316 = vsub.f32 %v2314, %v2315
        %v2317 = vand.u32 %v2316, 4294901760
        %2318 = vmatprep.subr.mxu0 %v2317
        %v2319 = vand.u32 %v1846, 4294901760
        %v2320 = vsub.f32 %v1846, %v2319
        %v2321 = vand.u32 %v2320, 4294901760
        %v2322 = vsub.f32 %v2320, %v2321
        %v2323 = vand.u32 %v2322, 4294901760
        %2324 = vmatpush1.msra.mxu0 %v2323
        %v2325 = vand.u32 %v1849, 4294901760
        %v2326 = vsub.f32 %v1849, %v2325
        %v2327 = vand.u32 %v2326, 4294901760
        %v2328 = vsub.f32 %v2326, %v2327
        %v2329 = vand.u32 %v2328, 4294901760
        %2330 = vmatprep.subr.mxu0 %v2329
        %v2331 = vand.u32 %v1848, 4294901760
        %v2332 = vsub.f32 %v1848, %v2331
        %v2333 = vand.u32 %v2332, 4294901760
        %v2334 = vsub.f32 %v2332, %v2333
        %v2335 = vand.u32 %v2334, 4294901760
        %2336 = vmatpush1.msra.mxu0 %v2335
        %v2337 = vand.u32 %v1851, 4294901760
        %v2338 = vsub.f32 %v1851, %v2337
        %v2339 = vand.u32 %v2338, 4294901760
        %v2340 = vsub.f32 %v2338, %v2339
        %v2341 = vand.u32 %v2340, 4294901760
        %2342 = vmatprep.subr.mxu0 %v2341
        %v2343 = vand.u32 %v1850, 4294901760
        %v2344 = vsub.f32 %v1850, %v2343
        %v2345 = vand.u32 %v2344, 4294901760
        %v2346 = vsub.f32 %v2344, %v2345
        %v2347 = vand.u32 %v2346, 4294901760
        %2348 = vmatpush1.msra.mxu0 %v2347
        %v2349 = vand.u32 %v1853, 4294901760
        %v2350 = vsub.f32 %v1853, %v2349
        %v2351 = vand.u32 %v2350, 4294901760
        %v2352 = vsub.f32 %v2350, %v2351
        %v2353 = vand.u32 %v2352, 4294901760
        %2354 = vmatprep.subr.mxu0 %v2353
        %v2355 = vand.u32 %v1852, 4294901760
        %v2356 = vsub.f32 %v1852, %v2355
        %v2357 = vand.u32 %v2356, 4294901760
        %v2358 = vsub.f32 %v2356, %v2357
        %v2359 = vand.u32 %v2358, 4294901760
        %2360 = vmatpush1.msra.mxu0 %v2359
        %v2361 = vand.u32 %v1855, 4294901760
        %v2362 = vsub.f32 %v1855, %v2361
        %v2363 = vand.u32 %v2362, 4294901760
        %v2364 = vsub.f32 %v2362, %v2363
        %v2365 = vand.u32 %v2364, 4294901760
        %2366 = vmatprep.subr.mxu0 %v2365
        %v2367 = vand.u32 %v1854, 4294901760
        %v2368 = vsub.f32 %v1854, %v2367
        %v2369 = vand.u32 %v2368, 4294901760
        %v2370 = vsub.f32 %v2368, %v2369
        %v2371 = vand.u32 %v2370, 4294901760
        %2372 = vmatpush1.msra.mxu0 %v2371
        %v2373 = vand.u32 %v1857, 4294901760
        %v2374 = vsub.f32 %v1857, %v2373
        %v2375 = vand.u32 %v2374, 4294901760
        %v2376 = vsub.f32 %v2374, %v2375
        %v2377 = vand.u32 %v2376, 4294901760
        %2378 = vmatprep.subr.mxu0 %v2377
        %v2379 = vand.u32 %v1856, 4294901760
        %v2380 = vsub.f32 %v1856, %v2379
        %v2381 = vand.u32 %v2380, 4294901760
        %v2382 = vsub.f32 %v2380, %v2381
        %v2383 = vand.u32 %v2382, 4294901760
        %2384 = vmatpush1.msra.mxu0 %v2383
        %v2385 = vand.u32 %v1859, 4294901760
        %v2386 = vsub.f32 %v1859, %v2385
        %v2387 = vand.u32 %v2386, 4294901760
        %v2388 = vsub.f32 %v2386, %v2387
        %v2389 = vand.u32 %v2388, 4294901760
        %2390 = vmatprep.subr.mxu0 %v2389
        %v2391 = vand.u32 %v1858, 4294901760
        %v2392 = vsub.f32 %v1858, %v2391
        %v2393 = vand.u32 %v2392, 4294901760
        %v2394 = vsub.f32 %v2392, %v2393
        %v2395 = vand.u32 %v2394, 4294901760
        %2396 = vmatpush1.msra.mxu0 %v2395
        %v2397 = vand.u32 %v1861, 4294901760
        %v2398 = vsub.f32 %v1861, %v2397
        %v2399 = vand.u32 %v2398, 4294901760
        %v2400 = vsub.f32 %v2398, %v2399
        %v2401 = vand.u32 %v2400, 4294901760
        %2402 = vmatprep.subr.mxu0 %v2401
        %v2403 = vand.u32 %v1860, 4294901760
        %v2404 = vsub.f32 %v1860, %v2403
        %v2405 = vand.u32 %v2404, 4294901760
        %v2406 = vsub.f32 %v2404, %v2405
        %v2407 = vand.u32 %v2406, 4294901760
        %2408 = vmatpush1.msra.mxu0 %v2407
        %v2409 = vand.u32 %v1863, 4294901760
        %v2410 = vsub.f32 %v1863, %v2409
        %v2411 = vand.u32 %v2410, 4294901760
        %v2412 = vsub.f32 %v2410, %v2411
        %v2413 = vand.u32 %v2412, 4294901760
        %2414 = vmatprep.subr.mxu0 %v2413
        %v2415 = vand.u32 %v1862, 4294901760
        %v2416 = vsub.f32 %v1862, %v2415
        %v2417 = vand.u32 %v2416, 4294901760
        %v2418 = vsub.f32 %v2416, %v2417
        %v2419 = vand.u32 %v2418, 4294901760
        %2420 = vmatpush1.msra.mxu0 %v2419
        %v2421 = vand.u32 %v1865, 4294901760
        %v2422 = vsub.f32 %v1865, %v2421
        %v2423 = vand.u32 %v2422, 4294901760
        %v2424 = vsub.f32 %v2422, %v2423
        %v2425 = vand.u32 %v2424, 4294901760
        %2426 = vmatprep.subr.mxu0 %v2425
        %v2427 = vand.u32 %v1864, 4294901760
        %v2428 = vsub.f32 %v1864, %v2427
        %v2429 = vand.u32 %v2428, 4294901760
        %v2430 = vsub.f32 %v2428, %v2429
        %v2431 = vand.u32 %v2430, 4294901760
        %2432 = vmatpush1.msra.mxu0 %v2431
        %v2433 = vand.u32 %v1867, 4294901760
        %v2434 = vsub.f32 %v1867, %v2433
        %v2435 = vand.u32 %v2434, 4294901760
        %v2436 = vsub.f32 %v2434, %v2435
        %v2437 = vand.u32 %v2436, 4294901760
        %2438 = vmatprep.subr.mxu0 %v2437
        %v2439 = vand.u32 %v1866, 4294901760
        %v2440 = vsub.f32 %v1866, %v2439
        %v2441 = vand.u32 %v2440, 4294901760
        %v2442 = vsub.f32 %v2440, %v2441
        %v2443 = vand.u32 %v2442, 4294901760
        %2444 = vmatpush1.msra.mxu0 %v2443
        %2445 = vmatprep.subr.mxu0 0.0
        %2446 = vmatpush1.msra.mxu0 0.0
        %2447 = vmatprep.subr.mxu0 0.0
        %2448 = vmatpush1.msra.mxu0 0.0
        %2449 = vmatprep.subr.mxu0 0.0
        %2450 = vmatpush1.msra.mxu0 0.0
        %2451 = vmatprep.subr.mxu0 0.0
        %2452 = vmatpush1.msra.mxu0 0.0
        %2453 = vmatprep.subr.mxu0 0.0
        %2454 = vmatpush1.msra.mxu0 0.0
        %2455 = vmatprep.subr.mxu0 0.0
        %2456 = vmatpush1.msra.mxu0 0.0
        %2457 = vmatprep.subr.mxu0 0.0
        %2458 = vmatpush1.msra.mxu0 0.0
        %2459 = vmatprep.subr.mxu0 0.0
        %2460 = vmatpush1.msra.mxu0 0.0
        %2461 = vmatprep.subr.mxu0 0.0
        %2462 = vmatpush1.msra.mxu0 0.0
        %2463 = vmatprep.subr.mxu0 0.0
        %2464 = vmatpush1.msra.mxu0 0.0
        %2465 = vmatprep.subr.mxu0 0.0
        %2466 = vmatpush1.msra.mxu0 0.0
        %2467 = vmatprep.subr.mxu0 0.0
        %2468 = vmatpush1.msra.mxu0 0.0
        %2469 = vmatprep.subr.mxu0 0.0
        %2470 = vmatpush1.msra.mxu0 0.0
        %2471 = vmatprep.subr.mxu0 0.0
        %2472 = vmatpush1.msra.mxu0 0.0
        %2473 = vmatprep.subr.mxu0 0.0
        %2474 = vmatpush1.msra.mxu0 0.0
        %2475 = vmatprep.subr.mxu0 0.0
        %2476 = vmatpush1.msra.mxu0 0.0
        %2477 = vmatprep.mubr.f32.mxu0 0.0
        %v2478 = vand.u32 %v1868, 4294901760
        %2479 = vmatmul.mubr.f32.gmra.mrb[0].mxu0 %v2478
        %v2480 = vpop.f32.mrb[0].mxu0
        %v2481 = vadd.f32 %v2084, %v2480
        %v2482 = vpop.f32.mrb[0].mxu0
        %v2483 = vadd.f32 %v2086, %v2482
        %2484 = vmatprep.mubr.f32.mxu0 0.0
        %v2485 = vand.u32 %v1869, 4294901760
        %2486 = vmatmul.mubr.f32.gmra.mrb[0].mxu0 %v2485
        %v2487 = vpop.f32.mrb[0].mxu0
        %v2488 = vadd.f32 %v2095, %v2487
        %v2489 = vpop.f32.mrb[0].mxu0
        %v2490 = vadd.f32 %v2097, %v2489
        %2491 = vmatprep.mubr.f32.mxu0 0.0
        %v2492 = vand.u32 %v1870, 4294901760
        %2493 = vmatmul.mubr.f32.gmra.mrb[0].mxu0 %v2492
        %v2494 = vpop.f32.mrb[0].mxu0
        %v2495 = vadd.f32 %v2106, %v2494
        %v2496 = vpop.f32.mrb[0].mxu0
        %v2497 = vadd.f32 %v2108, %v2496
        %2498 = vmatprep.mubr.f32.mxu0 0.0
        %v2499 = vand.u32 %v1871, 4294901760
        %2500 = vmatmul.mubr.f32.gmra.mrb[0].mxu0 %v2499
        %v2501 = vpop.f32.mrb[0].mxu0
        %v2502 = vadd.f32 %v2117, %v2501
        %v2503 = vpop.f32.mrb[0].mxu0
        %v2504 = vadd.f32 %v2119, %v2503
        %2505 = vmatprep.mubr.f32.mxu0 0.0
        %v2506 = vand.u32 %v1872, 4294901760
        %2507 = vmatmul.mubr.f32.gmra.mrb[0].mxu0 %v2506
        %v2508 = vpop.f32.mrb[0].mxu0
        %v2509 = vadd.f32 %v2128, %v2508
        %v2510 = vpop.f32.mrb[0].mxu0
        %v2511 = vadd.f32 %v2130, %v2510
        %2512 = vmatprep.mubr.f32.mxu0 0.0
        %v2513 = vand.u32 %v1873, 4294901760
        %2514 = vmatmul.mubr.f32.gmra.mrb[0].mxu0 %v2513
        %v2515 = vpop.f32.mrb[0].mxu0
        %v2516 = vadd.f32 %v2139, %v2515
        %v2517 = vpop.f32.mrb[0].mxu0
        %v2518 = vadd.f32 %v2141, %v2517
        %2519 = vmatprep.mubr.f32.mxu0 0.0
        %v2520 = vand.u32 %v1874, 4294901760
        %2521 = vmatmul.mubr.f32.gmra.mrb[0].mxu0 %v2520
        %v2522 = vpop.f32.mrb[0].mxu0
        %v2523 = vadd.f32 %v2150, %v2522
        %v2524 = vpop.f32.mrb[0].mxu0
        %v2525 = vadd.f32 %v2152, %v2524
        %2526 = vmatprep.mubr.f32.mxu0 0.0
        %v2527 = vand.u32 %v1875, 4294901760
        %2528 = vmatmul.mubr.f32.gmra.mrb[0].mxu0 %v2527
        %v2529 = vpop.f32.mrb[0].mxu0
        %v2530 = vadd.f32 %v2161, %v2529
        %v2531 = vpop.f32.mrb[0].mxu0
        %v2532 = vadd.f32 %v2163, %v2531
        %2533 = vmatprep.mubr.f32.mxu0 0.0
        %v2534 = vand.u32 %v1876, 4294901760
        %2535 = vmatmul.mubr.f32.gmra.mrb[0].mxu0 %v2534
        %v2536 = vpop.f32.mrb[0].mxu0
        %v2537 = vadd.f32 %v2172, %v2536
        %v2538 = vpop.f32.mrb[0].mxu0
        %v2539 = vadd.f32 %v2174, %v2538
        %2540 = vmatprep.mubr.f32.mxu0 0.0
        %v2541 = vand.u32 %v1877, 4294901760
        %2542 = vmatmul.mubr.f32.gmra.mrb[0].mxu0 %v2541
        %v2543 = vpop.f32.mrb[0].mxu0
        %v2544 = vadd.f32 %v2183, %v2543
        %v2545 = vpop.f32.mrb[0].mxu0
        %v2546 = vadd.f32 %v2185, %v2545
        %2547 = vmatprep.mubr.f32.mxu0 0.0
        %v2548 = vand.u32 %v1878, 4294901760
        %2549 = vmatmul.mubr.f32.gmra.mrb[0].mxu0 %v2548
        %v2550 = vpop.f32.mrb[0].mxu0
        %v2551 = vadd.f32 %v2194, %v2550
        %v2552 = vpop.f32.mrb[0].mxu0
        %v2553 = vadd.f32 %v2196, %v2552
        %2554 = vmatprep.mubr.f32.mxu0 0.0
        %v2555 = vand.u32 %v1879, 4294901760
        %2556 = vmatmul.mubr.f32.gmra.mrb[0].mxu0 %v2555
        %v2557 = vpop.f32.mrb[0].mxu0
        %v2558 = vadd.f32 %v2205, %v2557
        %v2559 = vpop.f32.mrb[0].mxu0
        %v2560 = vadd.f32 %v2207, %v2559
        %2561 = vmatprep.mubr.f32.mxu0 0.0
        %v2562 = vand.u32 %v1880, 4294901760
        %2563 = vmatmul.mubr.f32.gmra.mrb[0].mxu0 %v2562
        %v2564 = vpop.f32.mrb[0].mxu0
        %v2565 = vadd.f32 %v2216, %v2564
        %v2566 = vpop.f32.mrb[0].mxu0
        %v2567 = vadd.f32 %v2218, %v2566
        %2568 = vmatprep.mubr.f32.mxu0 0.0
        %v2569 = vand.u32 %v1881, 4294901760
        %2570 = vmatmul.mubr.f32.gmra.mrb[0].mxu0 %v2569
        %v2571 = vpop.f32.mrb[0].mxu0
        %v2572 = vadd.f32 %v2227, %v2571
        %v2573 = vpop.f32.mrb[0].mxu0
        %v2574 = vadd.f32 %v2229, %v2573
        %2575 = vmatprep.mubr.f32.mxu0 0.0
        %v2576 = vand.u32 %v1882, 4294901760
        %2577 = vmatmul.mubr.f32.gmra.mrb[0].mxu0 %v2576
        %v2578 = vpop.f32.mrb[0].mxu0
        %v2579 = vadd.f32 %v2238, %v2578
        %v2580 = vpop.f32.mrb[0].mxu0
        %v2581 = vadd.f32 %v2240, %v2580
        %2582 = vmatprep.mubr.f32.mxu0 0.0
        %v2583 = vand.u32 %v1883, 4294901760
        %2584 = vmatmul.mubr.f32.gmra.mrb[0].mxu0 %v2583
        %v2585 = vpop.f32.mrb[0].mxu0
        %v2586 = vadd.f32 %v2249, %v2585
        %v2587 = vpop.f32.mrb[0].mxu0
        %v2588 = vadd.f32 %v2251, %v2587
        %2589 = vdwg.mxu0
        %v2590 = vand.u32 %v1837, 4294901760
        %v2591 = vsub.f32 %v1837, %v2590
        %2592 = vmatprep.subr.mxu0 %v2591
        %v2593 = vand.u32 %v1836, 4294901760
        %v2594 = vsub.f32 %v1836, %v2593
        %2595 = vmatpush1.msra.mxu0 %v2594
        %v2596 = vand.u32 %v1839, 4294901760
        %v2597 = vsub.f32 %v1839, %v2596
        %2598 = vmatprep.subr.mxu0 %v2597
        %v2599 = vand.u32 %v1838, 4294901760
        %v2600 = vsub.f32 %v1838, %v2599
        %2601 = vmatpush1.msra.mxu0 %v2600
        %v2602 = vand.u32 %v1841, 4294901760
        %v2603 = vsub.f32 %v1841, %v2602
        %2604 = vmatprep.subr.mxu0 %v2603
        %v2605 = vand.u32 %v1840, 4294901760
        %v2606 = vsub.f32 %v1840, %v2605
        %2607 = vmatpush1.msra.mxu0 %v2606
        %v2608 = vand.u32 %v1843, 4294901760
        %v2609 = vsub.f32 %v1843, %v2608
        %2610 = vmatprep.subr.mxu0 %v2609
        %v2611 = vand.u32 %v1842, 4294901760
        %v2612 = vsub.f32 %v1842, %v2611
        %2613 = vmatpush1.msra.mxu0 %v2612
        %v2614 = vand.u32 %v1845, 4294901760
        %v2615 = vsub.f32 %v1845, %v2614
        %2616 = vmatprep.subr.mxu0 %v2615
        %v2617 = vand.u32 %v1844, 4294901760
        %v2618 = vsub.f32 %v1844, %v2617
        %2619 = vmatpush1.msra.mxu0 %v2618
        %v2620 = vand.u32 %v1847, 4294901760
        %v2621 = vsub.f32 %v1847, %v2620
        %2622 = vmatprep.subr.mxu0 %v2621
        %v2623 = vand.u32 %v1846, 4294901760
        %v2624 = vsub.f32 %v1846, %v2623
        %2625 = vmatpush1.msra.mxu0 %v2624
        %v2626 = vand.u32 %v1849, 4294901760
        %v2627 = vsub.f32 %v1849, %v2626
        %2628 = vmatprep.subr.mxu0 %v2627
        %v2629 = vand.u32 %v1848, 4294901760
        %v2630 = vsub.f32 %v1848, %v2629
        %2631 = vmatpush1.msra.mxu0 %v2630
        %v2632 = vand.u32 %v1851, 4294901760
        %v2633 = vsub.f32 %v1851, %v2632
        %2634 = vmatprep.subr.mxu0 %v2633
        %v2635 = vand.u32 %v1850, 4294901760
        %v2636 = vsub.f32 %v1850, %v2635
        %2637 = vmatpush1.msra.mxu0 %v2636
        %v2638 = vand.u32 %v1853, 4294901760
        %v2639 = vsub.f32 %v1853, %v2638
        %2640 = vmatprep.subr.mxu0 %v2639
        %v2641 = vand.u32 %v1852, 4294901760
        %v2642 = vsub.f32 %v1852, %v2641
        %2643 = vmatpush1.msra.mxu0 %v2642
        %v2644 = vand.u32 %v1855, 4294901760
        %v2645 = vsub.f32 %v1855, %v2644
        %2646 = vmatprep.subr.mxu0 %v2645
        %v2647 = vand.u32 %v1854, 4294901760
        %v2648 = vsub.f32 %v1854, %v2647
        %2649 = vmatpush1.msra.mxu0 %v2648
        %v2650 = vand.u32 %v1857, 4294901760
        %v2651 = vsub.f32 %v1857, %v2650
        %2652 = vmatprep.subr.mxu0 %v2651
        %v2653 = vand.u32 %v1856, 4294901760
        %v2654 = vsub.f32 %v1856, %v2653
        %2655 = vmatpush1.msra.mxu0 %v2654
        %v2656 = vand.u32 %v1859, 4294901760
        %v2657 = vsub.f32 %v1859, %v2656
        %2658 = vmatprep.subr.mxu0 %v2657
        %v2659 = vand.u32 %v1858, 4294901760
        %v2660 = vsub.f32 %v1858, %v2659
        %2661 = vmatpush1.msra.mxu0 %v2660
        %v2662 = vand.u32 %v1861, 4294901760
        %v2663 = vsub.f32 %v1861, %v2662
        %2664 = vmatprep.subr.mxu0 %v2663
        %v2665 = vand.u32 %v1860, 4294901760
        %v2666 = vsub.f32 %v1860, %v2665
        %2667 = vmatpush1.msra.mxu0 %v2666
        %v2668 = vand.u32 %v1863, 4294901760
        %v2669 = vsub.f32 %v1863, %v2668
        %2670 = vmatprep.subr.mxu0 %v2669
        %v2671 = vand.u32 %v1862, 4294901760
        %v2672 = vsub.f32 %v1862, %v2671
        %2673 = vmatpush1.msra.mxu0 %v2672
        %v2674 = vand.u32 %v1865, 4294901760
        %v2675 = vsub.f32 %v1865, %v2674
        %2676 = vmatprep.subr.mxu0 %v2675
        %v2677 = vand.u32 %v1864, 4294901760
        %v2678 = vsub.f32 %v1864, %v2677
        %2679 = vmatpush1.msra.mxu0 %v2678
        %v2680 = vand.u32 %v1867, 4294901760
        %v2681 = vsub.f32 %v1867, %v2680
        %2682 = vmatprep.subr.mxu0 %v2681
        %v2683 = vand.u32 %v1866, 4294901760
        %v2684 = vsub.f32 %v1866, %v2683
        %2685 = vmatpush1.msra.mxu0 %v2684
        %2686 = vmatprep.subr.mxu0 0.0
        %2687 = vmatpush1.msra.mxu0 0.0
        %2688 = vmatprep.subr.mxu0 0.0
        %2689 = vmatpush1.msra.mxu0 0.0
        %2690 = vmatprep.subr.mxu0 0.0
        %2691 = vmatpush1.msra.mxu0 0.0
        %2692 = vmatprep.subr.mxu0 0.0
        %2693 = vmatpush1.msra.mxu0 0.0
        %2694 = vmatprep.subr.mxu0 0.0
        %2695 = vmatpush1.msra.mxu0 0.0
        %2696 = vmatprep.subr.mxu0 0.0
        %2697 = vmatpush1.msra.mxu0 0.0
        %2698 = vmatprep.subr.mxu0 0.0
        %2699 = vmatpush1.msra.mxu0 0.0
        %2700 = vmatprep.subr.mxu0 0.0
        %2701 = vmatpush1.msra.mxu0 0.0
        %2702 = vmatprep.subr.mxu0 0.0
        %2703 = vmatpush1.msra.mxu0 0.0
        %2704 = vmatprep.subr.mxu0 0.0
        %2705 = vmatpush1.msra.mxu0 0.0
        %2706 = vmatprep.subr.mxu0 0.0
        %2707 = vmatpush1.msra.mxu0 0.0
        %2708 = vmatprep.subr.mxu0 0.0
        %2709 = vmatpush1.msra.mxu0 0.0
        %2710 = vmatprep.subr.mxu0 0.0
        %2711 = vmatpush1.msra.mxu0 0.0
        %2712 = vmatprep.subr.mxu0 0.0
        %2713 = vmatpush1.msra.mxu0 0.0
        %2714 = vmatprep.subr.mxu0 0.0
        %2715 = vmatpush1.msra.mxu0 0.0
        %2716 = vmatprep.subr.mxu0 0.0
        %2717 = vmatpush1.msra.mxu0 0.0
        %2718 = vmatprep.mubr.f32.mxu0 0.0
        %v2719 = vand.u32 %v1868, 4294901760
        %v2720 = vsub.f32 %v1868, %v2719
        %2721 = vmatmul.mubr.f32.gmra.mrb[0].mxu0 %v2720
        %v2722 = vpop.f32.mrb[0].mxu0
        %v2723 = vadd.f32 %v2481, %v2722
        %v2724 = vpop.f32.mrb[0].mxu0
        %v2725 = vadd.f32 %v2483, %v2724
        %2726 = vmatprep.mubr.f32.mxu0 0.0
        %v2727 = vand.u32 %v1869, 4294901760
        %v2728 = vsub.f32 %v1869, %v2727
        %2729 = vmatmul.mubr.f32.gmra.mrb[0].mxu0 %v2728
        %v2730 = vpop.f32.mrb[0].mxu0
        %v2731 = vadd.f32 %v2488, %v2730
        %v2732 = vpop.f32.mrb[0].mxu0
        %v2733 = vadd.f32 %v2490, %v2732
        %2734 = vmatprep.mubr.f32.mxu0 0.0
        %v2735 = vand.u32 %v1870, 4294901760
        %v2736 = vsub.f32 %v1870, %v2735
        %2737 = vmatmul.mubr.f32.gmra.mrb[0].mxu0 %v2736
        %v2738 = vpop.f32.mrb[0].mxu0
        %v2739 = vadd.f32 %v2495, %v2738
        %v2740 = vpop.f32.mrb[0].mxu0
        %v2741 = vadd.f32 %v2497, %v2740
        %2742 = vmatprep.mubr.f32.mxu0 0.0
        %v2743 = vand.u32 %v1871, 4294901760
        %v2744 = vsub.f32 %v1871, %v2743
        %2745 = vmatmul.mubr.f32.gmra.mrb[0].mxu0 %v2744
        %v2746 = vpop.f32.mrb[0].mxu0
        %v2747 = vadd.f32 %v2502, %v2746
        %v2748 = vpop.f32.mrb[0].mxu0
        %v2749 = vadd.f32 %v2504, %v2748
        %2750 = vmatprep.mubr.f32.mxu0 0.0
        %v2751 = vand.u32 %v1872, 4294901760
        %v2752 = vsub.f32 %v1872, %v2751
        %2753 = vmatmul.mubr.f32.gmra.mrb[0].mxu0 %v2752
        %v2754 = vpop.f32.mrb[0].mxu0
        %v2755 = vadd.f32 %v2509, %v2754
        %v2756 = vpop.f32.mrb[0].mxu0
        %v2757 = vadd.f32 %v2511, %v2756
        %2758 = vmatprep.mubr.f32.mxu0 0.0
        %v2759 = vand.u32 %v1873, 4294901760
        %v2760 = vsub.f32 %v1873, %v2759
        %2761 = vmatmul.mubr.f32.gmra.mrb[0].mxu0 %v2760
        %v2762 = vpop.f32.mrb[0].mxu0
        %v2763 = vadd.f32 %v2516, %v2762
        %v2764 = vpop.f32.mrb[0].mxu0
        %v2765 = vadd.f32 %v2518, %v2764
        %2766 = vmatprep.mubr.f32.mxu0 0.0
        %v2767 = vand.u32 %v1874, 4294901760
        %v2768 = vsub.f32 %v1874, %v2767
        %2769 = vmatmul.mubr.f32.gmra.mrb[0].mxu0 %v2768
        %v2770 = vpop.f32.mrb[0].mxu0
        %v2771 = vadd.f32 %v2523, %v2770
        %v2772 = vpop.f32.mrb[0].mxu0
        %v2773 = vadd.f32 %v2525, %v2772
        %2774 = vmatprep.mubr.f32.mxu0 0.0
        %v2775 = vand.u32 %v1875, 4294901760
        %v2776 = vsub.f32 %v1875, %v2775
        %2777 = vmatmul.mubr.f32.gmra.mrb[0].mxu0 %v2776
        %v2778 = vpop.f32.mrb[0].mxu0
        %v2779 = vadd.f32 %v2530, %v2778
        %v2780 = vpop.f32.mrb[0].mxu0
        %v2781 = vadd.f32 %v2532, %v2780
        %2782 = vmatprep.mubr.f32.mxu0 0.0
        %v2783 = vand.u32 %v1876, 4294901760
        %v2784 = vsub.f32 %v1876, %v2783
        %2785 = vmatmul.mubr.f32.gmra.mrb[0].mxu0 %v2784
        %v2786 = vpop.f32.mrb[0].mxu0
        %v2787 = vadd.f32 %v2537, %v2786
        %v2788 = vpop.f32.mrb[0].mxu0
        %v2789 = vadd.f32 %v2539, %v2788
        %2790 = vmatprep.mubr.f32.mxu0 0.0
        %v2791 = vand.u32 %v1877, 4294901760
        %v2792 = vsub.f32 %v1877, %v2791
        %2793 = vmatmul.mubr.f32.gmra.mrb[0].mxu0 %v2792
        %v2794 = vpop.f32.mrb[0].mxu0
        %v2795 = vadd.f32 %v2544, %v2794
        %v2796 = vpop.f32.mrb[0].mxu0
        %v2797 = vadd.f32 %v2546, %v2796
        %2798 = vmatprep.mubr.f32.mxu0 0.0
        %v2799 = vand.u32 %v1878, 4294901760
        %v2800 = vsub.f32 %v1878, %v2799
        %2801 = vmatmul.mubr.f32.gmra.mrb[0].mxu0 %v2800
        %v2802 = vpop.f32.mrb[0].mxu0
        %v2803 = vadd.f32 %v2551, %v2802
        %v2804 = vpop.f32.mrb[0].mxu0
        %v2805 = vadd.f32 %v2553, %v2804
        %2806 = vmatprep.mubr.f32.mxu0 0.0
        %v2807 = vand.u32 %v1879, 4294901760
        %v2808 = vsub.f32 %v1879, %v2807
        %2809 = vmatmul.mubr.f32.gmra.mrb[0].mxu0 %v2808
        %v2810 = vpop.f32.mrb[0].mxu0
        %v2811 = vadd.f32 %v2558, %v2810
        %v2812 = vpop.f32.mrb[0].mxu0
        %v2813 = vadd.f32 %v2560, %v2812
        %2814 = vmatprep.mubr.f32.mxu0 0.0
        %v2815 = vand.u32 %v1880, 4294901760
        %v2816 = vsub.f32 %v1880, %v2815
        %2817 = vmatmul.mubr.f32.gmra.mrb[0].mxu0 %v2816
        %v2818 = vpop.f32.mrb[0].mxu0
        %v2819 = vadd.f32 %v2565, %v2818
        %v2820 = vpop.f32.mrb[0].mxu0
        %v2821 = vadd.f32 %v2567, %v2820
        %2822 = vmatprep.mubr.f32.mxu0 0.0
        %v2823 = vand.u32 %v1881, 4294901760
        %v2824 = vsub.f32 %v1881, %v2823
        %2825 = vmatmul.mubr.f32.gmra.mrb[0].mxu0 %v2824
        %v2826 = vpop.f32.mrb[0].mxu0
        %v2827 = vadd.f32 %v2572, %v2826
        %v2828 = vpop.f32.mrb[0].mxu0
        %v2829 = vadd.f32 %v2574, %v2828
        %2830 = vmatprep.mubr.f32.mxu0 0.0
        %v2831 = vand.u32 %v1882, 4294901760
        %v2832 = vsub.f32 %v1882, %v2831
        %2833 = vmatmul.mubr.f32.gmra.mrb[0].mxu0 %v2832
        %v2834 = vpop.f32.mrb[0].mxu0
        %v2835 = vadd.f32 %v2579, %v2834
        %v2836 = vpop.f32.mrb[0].mxu0
        %v2837 = vadd.f32 %v2581, %v2836
        %2838 = vmatprep.mubr.f32.mxu0 0.0
        %v2839 = vand.u32 %v1883, 4294901760
        %v2840 = vsub.f32 %v1883, %v2839
        %2841 = vmatmul.mubr.f32.gmra.mrb[0].mxu0 %v2840
        %v2842 = vpop.f32.mrb[0].mxu0
        %v2843 = vadd.f32 %v2586, %v2842
        %v2844 = vpop.f32.mrb[0].mxu0
        %v2845 = vadd.f32 %v2588, %v2844
        %2846 = vdwg.mxu0
        %v2847 = vand.u32 %v1837, 4294901760
        %2848 = vmatprep.subr.mxu0 %v2847
        %v2849 = vand.u32 %v1836, 4294901760
        %2850 = vmatpush1.msra.mxu0 %v2849
        %v2851 = vand.u32 %v1839, 4294901760
        %2852 = vmatprep.subr.mxu0 %v2851
        %v2853 = vand.u32 %v1838, 4294901760
        %2854 = vmatpush1.msra.mxu0 %v2853
        %v2855 = vand.u32 %v1841, 4294901760
        %2856 = vmatprep.subr.mxu0 %v2855
        %v2857 = vand.u32 %v1840, 4294901760
        %2858 = vmatpush1.msra.mxu0 %v2857
        %v2859 = vand.u32 %v1843, 4294901760
        %2860 = vmatprep.subr.mxu0 %v2859
        %v2861 = vand.u32 %v1842, 4294901760
        %2862 = vmatpush1.msra.mxu0 %v2861
        %v2863 = vand.u32 %v1845, 4294901760
        %2864 = vmatprep.subr.mxu0 %v2863
        %v2865 = vand.u32 %v1844, 4294901760
        %2866 = vmatpush1.msra.mxu0 %v2865
        %v2867 = vand.u32 %v1847, 4294901760
        %2868 = vmatprep.subr.mxu0 %v2867
        %v2869 = vand.u32 %v1846, 4294901760
        %2870 = vmatpush1.msra.mxu0 %v2869
        %v2871 = vand.u32 %v1849, 4294901760
        %2872 = vmatprep.subr.mxu0 %v2871
        %v2873 = vand.u32 %v1848, 4294901760
        %2874 = vmatpush1.msra.mxu0 %v2873
        %v2875 = vand.u32 %v1851, 4294901760
        %2876 = vmatprep.subr.mxu0 %v2875
        %v2877 = vand.u32 %v1850, 4294901760
        %2878 = vmatpush1.msra.mxu0 %v2877
        %v2879 = vand.u32 %v1853, 4294901760
        %2880 = vmatprep.subr.mxu0 %v2879
        %v2881 = vand.u32 %v1852, 4294901760
        %2882 = vmatpush1.msra.mxu0 %v2881
        %v2883 = vand.u32 %v1855, 4294901760
        %2884 = vmatprep.subr.mxu0 %v2883
        %v2885 = vand.u32 %v1854, 4294901760
        %2886 = vmatpush1.msra.mxu0 %v2885
        %v2887 = vand.u32 %v1857, 4294901760
        %2888 = vmatprep.subr.mxu0 %v2887
        %v2889 = vand.u32 %v1856, 4294901760
        %2890 = vmatpush1.msra.mxu0 %v2889
        %v2891 = vand.u32 %v1859, 4294901760
        %2892 = vmatprep.subr.mxu0 %v2891
        %v2893 = vand.u32 %v1858, 4294901760
        %2894 = vmatpush1.msra.mxu0 %v2893
        %v2895 = vand.u32 %v1861, 4294901760
        %2896 = vmatprep.subr.mxu0 %v2895
        %v2897 = vand.u32 %v1860, 4294901760
        %2898 = vmatpush1.msra.mxu0 %v2897
        %v2899 = vand.u32 %v1863, 4294901760
        %2900 = vmatprep.subr.mxu0 %v2899
        %v2901 = vand.u32 %v1862, 4294901760
        %2902 = vmatpush1.msra.mxu0 %v2901
        %v2903 = vand.u32 %v1865, 4294901760
        %2904 = vmatprep.subr.mxu0 %v2903
        %v2905 = vand.u32 %v1864, 4294901760
        %2906 = vmatpush1.msra.mxu0 %v2905
        %v2907 = vand.u32 %v1867, 4294901760
        %2908 = vmatprep.subr.mxu0 %v2907
        %v2909 = vand.u32 %v1866, 4294901760
        %2910 = vmatpush1.msra.mxu0 %v2909
        %2911 = vmatprep.subr.mxu0 0.0
        %2912 = vmatpush1.msra.mxu0 0.0
        %2913 = vmatprep.subr.mxu0 0.0
        %2914 = vmatpush1.msra.mxu0 0.0
        %2915 = vmatprep.subr.mxu0 0.0
        %2916 = vmatpush1.msra.mxu0 0.0
        %2917 = vmatprep.subr.mxu0 0.0
        %2918 = vmatpush1.msra.mxu0 0.0
        %2919 = vmatprep.subr.mxu0 0.0
        %2920 = vmatpush1.msra.mxu0 0.0
        %2921 = vmatprep.subr.mxu0 0.0
        %2922 = vmatpush1.msra.mxu0 0.0
        %2923 = vmatprep.subr.mxu0 0.0
        %2924 = vmatpush1.msra.mxu0 0.0
        %2925 = vmatprep.subr.mxu0 0.0
        %2926 = vmatpush1.msra.mxu0 0.0
        %2927 = vmatprep.subr.mxu0 0.0
        %2928 = vmatpush1.msra.mxu0 0.0
        %2929 = vmatprep.subr.mxu0 0.0
        %2930 = vmatpush1.msra.mxu0 0.0
        %2931 = vmatprep.subr.mxu0 0.0
        %2932 = vmatpush1.msra.mxu0 0.0
        %2933 = vmatprep.subr.mxu0 0.0
        %2934 = vmatpush1.msra.mxu0 0.0
        %2935 = vmatprep.subr.mxu0 0.0
        %2936 = vmatpush1.msra.mxu0 0.0
        %2937 = vmatprep.subr.mxu0 0.0
        %2938 = vmatpush1.msra.mxu0 0.0
        %2939 = vmatprep.subr.mxu0 0.0
        %2940 = vmatpush1.msra.mxu0 0.0
        %2941 = vmatprep.subr.mxu0 0.0
        %2942 = vmatpush1.msra.mxu0 0.0
        %2943 = vmatprep.mubr.f32.mxu0 0.0
        %v2944 = vand.u32 %v1868, 4294901760
        %v2945 = vsub.f32 %v1868, %v2944
        %v2946 = vand.u32 %v2945, 4294901760
        %2947 = vmatmul.mubr.f32.gmra.mrb[0].mxu0 %v2946
        %v2948 = vpop.f32.mrb[0].mxu0
        %v2949 = vadd.f32 %v2723, %v2948
        %v2950 = vpop.f32.mrb[0].mxu0
        %v2951 = vadd.f32 %v2725, %v2950
        %2952 = vmatprep.mubr.f32.mxu0 0.0
        %v2953 = vand.u32 %v1869, 4294901760
        %v2954 = vsub.f32 %v1869, %v2953
        %v2955 = vand.u32 %v2954, 4294901760
        %2956 = vmatmul.mubr.f32.gmra.mrb[0].mxu0 %v2955
        %v2957 = vpop.f32.mrb[0].mxu0
        %v2958 = vadd.f32 %v2731, %v2957
        %v2959 = vpop.f32.mrb[0].mxu0
        %v2960 = vadd.f32 %v2733, %v2959
        %2961 = vmatprep.mubr.f32.mxu0 0.0
        %v2962 = vand.u32 %v1870, 4294901760
        %v2963 = vsub.f32 %v1870, %v2962
        %v2964 = vand.u32 %v2963, 4294901760
        %2965 = vmatmul.mubr.f32.gmra.mrb[0].mxu0 %v2964
        %v2966 = vpop.f32.mrb[0].mxu0
        %v2967 = vadd.f32 %v2739, %v2966
        %v2968 = vpop.f32.mrb[0].mxu0
        %v2969 = vadd.f32 %v2741, %v2968
        %2970 = vmatprep.mubr.f32.mxu0 0.0
        %v2971 = vand.u32 %v1871, 4294901760
        %v2972 = vsub.f32 %v1871, %v2971
        %v2973 = vand.u32 %v2972, 4294901760
        %2974 = vmatmul.mubr.f32.gmra.mrb[0].mxu0 %v2973
        %v2975 = vpop.f32.mrb[0].mxu0
        %v2976 = vadd.f32 %v2747, %v2975
        %v2977 = vpop.f32.mrb[0].mxu0
        %v2978 = vadd.f32 %v2749, %v2977
        %2979 = vmatprep.mubr.f32.mxu0 0.0
        %v2980 = vand.u32 %v1872, 4294901760
        %v2981 = vsub.f32 %v1872, %v2980
        %v2982 = vand.u32 %v2981, 4294901760
        %2983 = vmatmul.mubr.f32.gmra.mrb[0].mxu0 %v2982
        %v2984 = vpop.f32.mrb[0].mxu0
        %v2985 = vadd.f32 %v2755, %v2984
        %v2986 = vpop.f32.mrb[0].mxu0
        %v2987 = vadd.f32 %v2757, %v2986
        %2988 = vmatprep.mubr.f32.mxu0 0.0
        %v2989 = vand.u32 %v1873, 4294901760
        %v2990 = vsub.f32 %v1873, %v2989
        %v2991 = vand.u32 %v2990, 4294901760
        %2992 = vmatmul.mubr.f32.gmra.mrb[0].mxu0 %v2991
        %v2993 = vpop.f32.mrb[0].mxu0
        %v2994 = vadd.f32 %v2763, %v2993
        %v2995 = vpop.f32.mrb[0].mxu0
        %v2996 = vadd.f32 %v2765, %v2995
        %2997 = vmatprep.mubr.f32.mxu0 0.0
        %v2998 = vand.u32 %v1874, 4294901760
        %v2999 = vsub.f32 %v1874, %v2998
        %v3000 = vand.u32 %v2999, 4294901760
        %3001 = vmatmul.mubr.f32.gmra.mrb[0].mxu0 %v3000
        %v3002 = vpop.f32.mrb[0].mxu0
        %v3003 = vadd.f32 %v2771, %v3002
        %v3004 = vpop.f32.mrb[0].mxu0
        %v3005 = vadd.f32 %v2773, %v3004
        %3006 = vmatprep.mubr.f32.mxu0 0.0
        %v3007 = vand.u32 %v1875, 4294901760
        %v3008 = vsub.f32 %v1875, %v3007
        %v3009 = vand.u32 %v3008, 4294901760
        %3010 = vmatmul.mubr.f32.gmra.mrb[0].mxu0 %v3009
        %v3011 = vpop.f32.mrb[0].mxu0
        %v3012 = vadd.f32 %v2779, %v3011
        %v3013 = vpop.f32.mrb[0].mxu0
        %v3014 = vadd.f32 %v2781, %v3013
        %3015 = vmatprep.mubr.f32.mxu0 0.0
        %v3016 = vand.u32 %v1876, 4294901760
        %v3017 = vsub.f32 %v1876, %v3016
        %v3018 = vand.u32 %v3017, 4294901760
        %3019 = vmatmul.mubr.f32.gmra.mrb[0].mxu0 %v3018
        %v3020 = vpop.f32.mrb[0].mxu0
        %v3021 = vadd.f32 %v2787, %v3020
        %v3022 = vpop.f32.mrb[0].mxu0
        %v3023 = vadd.f32 %v2789, %v3022
        %3024 = vmatprep.mubr.f32.mxu0 0.0
        %v3025 = vand.u32 %v1877, 4294901760
        %v3026 = vsub.f32 %v1877, %v3025
        %v3027 = vand.u32 %v3026, 4294901760
        %3028 = vmatmul.mubr.f32.gmra.mrb[0].mxu0 %v3027
        %v3029 = vpop.f32.mrb[0].mxu0
        %v3030 = vadd.f32 %v2795, %v3029
        %v3031 = vpop.f32.mrb[0].mxu0
        %v3032 = vadd.f32 %v2797, %v3031
        %3033 = vmatprep.mubr.f32.mxu0 0.0
        %v3034 = vand.u32 %v1878, 4294901760
        %v3035 = vsub.f32 %v1878, %v3034
        %v3036 = vand.u32 %v3035, 4294901760
        %3037 = vmatmul.mubr.f32.gmra.mrb[0].mxu0 %v3036
        %v3038 = vpop.f32.mrb[0].mxu0
        %v3039 = vadd.f32 %v2803, %v3038
        %v3040 = vpop.f32.mrb[0].mxu0
        %v3041 = vadd.f32 %v2805, %v3040
        %3042 = vmatprep.mubr.f32.mxu0 0.0
        %v3043 = vand.u32 %v1879, 4294901760
        %v3044 = vsub.f32 %v1879, %v3043
        %v3045 = vand.u32 %v3044, 4294901760
        %3046 = vmatmul.mubr.f32.gmra.mrb[0].mxu0 %v3045
        %v3047 = vpop.f32.mrb[0].mxu0
        %v3048 = vadd.f32 %v2811, %v3047
        %v3049 = vpop.f32.mrb[0].mxu0
        %v3050 = vadd.f32 %v2813, %v3049
        %3051 = vmatprep.mubr.f32.mxu0 0.0
        %v3052 = vand.u32 %v1880, 4294901760
        %v3053 = vsub.f32 %v1880, %v3052
        %v3054 = vand.u32 %v3053, 4294901760
        %3055 = vmatmul.mubr.f32.gmra.mrb[0].mxu0 %v3054
        %v3056 = vpop.f32.mrb[0].mxu0
        %v3057 = vadd.f32 %v2819, %v3056
        %v3058 = vpop.f32.mrb[0].mxu0
        %v3059 = vadd.f32 %v2821, %v3058
        %3060 = vmatprep.mubr.f32.mxu0 0.0
        %v3061 = vand.u32 %v1881, 4294901760
        %v3062 = vsub.f32 %v1881, %v3061
        %v3063 = vand.u32 %v3062, 4294901760
        %3064 = vmatmul.mubr.f32.gmra.mrb[0].mxu0 %v3063
        %v3065 = vpop.f32.mrb[0].mxu0
        %v3066 = vadd.f32 %v2827, %v3065
        %v3067 = vpop.f32.mrb[0].mxu0
        %v3068 = vadd.f32 %v2829, %v3067
        %3069 = vmatprep.mubr.f32.mxu0 0.0
        %v3070 = vand.u32 %v1882, 4294901760
        %v3071 = vsub.f32 %v1882, %v3070
        %v3072 = vand.u32 %v3071, 4294901760
        %3073 = vmatmul.mubr.f32.gmra.mrb[0].mxu0 %v3072
        %v3074 = vpop.f32.mrb[0].mxu0
        %v3075 = vadd.f32 %v2835, %v3074
        %v3076 = vpop.f32.mrb[0].mxu0
        %v3077 = vadd.f32 %v2837, %v3076
        %3078 = vmatprep.mubr.f32.mxu0 0.0
        %v3079 = vand.u32 %v1883, 4294901760
        %v3080 = vsub.f32 %v1883, %v3079
        %v3081 = vand.u32 %v3080, 4294901760
        %3082 = vmatmul.mubr.f32.gmra.mrb[0].mxu0 %v3081
        %v3083 = vpop.f32.mrb[0].mxu0
        %v3084 = vadd.f32 %v2843, %v3083
        %v3085 = vpop.f32.mrb[0].mxu0
        %v3086 = vadd.f32 %v2845, %v3085
        %3087 = vdwg.mxu0
        %v3088 = vand.u32 %v1837, 4294901760
        %v3089 = vsub.f32 %v1837, %v3088
        %v3090 = vand.u32 %v3089, 4294901760
        %3091 = vmatprep.subr.mxu0 %v3090
        %v3092 = vand.u32 %v1836, 4294901760
        %v3093 = vsub.f32 %v1836, %v3092
        %v3094 = vand.u32 %v3093, 4294901760
        %3095 = vmatpush1.msra.mxu0 %v3094
        %v3096 = vand.u32 %v1839, 4294901760
        %v3097 = vsub.f32 %v1839, %v3096
        %v3098 = vand.u32 %v3097, 4294901760
        %3099 = vmatprep.subr.mxu0 %v3098
        %v3100 = vand.u32 %v1838, 4294901760
        %v3101 = vsub.f32 %v1838, %v3100
        %v3102 = vand.u32 %v3101, 4294901760
        %3103 = vmatpush1.msra.mxu0 %v3102
        %v3104 = vand.u32 %v1841, 4294901760
        %v3105 = vsub.f32 %v1841, %v3104
        %v3106 = vand.u32 %v3105, 4294901760
        %3107 = vmatprep.subr.mxu0 %v3106
        %v3108 = vand.u32 %v1840, 4294901760
        %v3109 = vsub.f32 %v1840, %v3108
        %v3110 = vand.u32 %v3109, 4294901760
        %3111 = vmatpush1.msra.mxu0 %v3110
        %v3112 = vand.u32 %v1843, 4294901760
        %v3113 = vsub.f32 %v1843, %v3112
        %v3114 = vand.u32 %v3113, 4294901760
        %3115 = vmatprep.subr.mxu0 %v3114
        %v3116 = vand.u32 %v1842, 4294901760
        %v3117 = vsub.f32 %v1842, %v3116
        %v3118 = vand.u32 %v3117, 4294901760
        %3119 = vmatpush1.msra.mxu0 %v3118
        %v3120 = vand.u32 %v1845, 4294901760
        %v3121 = vsub.f32 %v1845, %v3120
        %v3122 = vand.u32 %v3121, 4294901760
        %3123 = vmatprep.subr.mxu0 %v3122
        %v3124 = vand.u32 %v1844, 4294901760
        %v3125 = vsub.f32 %v1844, %v3124
        %v3126 = vand.u32 %v3125, 4294901760
        %3127 = vmatpush1.msra.mxu0 %v3126
        %v3128 = vand.u32 %v1847, 4294901760
        %v3129 = vsub.f32 %v1847, %v3128
        %v3130 = vand.u32 %v3129, 4294901760
        %3131 = vmatprep.subr.mxu0 %v3130
        %v3132 = vand.u32 %v1846, 4294901760
        %v3133 = vsub.f32 %v1846, %v3132
        %v3134 = vand.u32 %v3133, 4294901760
        %3135 = vmatpush1.msra.mxu0 %v3134
        %v3136 = vand.u32 %v1849, 4294901760
        %v3137 = vsub.f32 %v1849, %v3136
        %v3138 = vand.u32 %v3137, 4294901760
        %3139 = vmatprep.subr.mxu0 %v3138
        %v3140 = vand.u32 %v1848, 4294901760
        %v3141 = vsub.f32 %v1848, %v3140
        %v3142 = vand.u32 %v3141, 4294901760
        %3143 = vmatpush1.msra.mxu0 %v3142
        %v3144 = vand.u32 %v1851, 4294901760
        %v3145 = vsub.f32 %v1851, %v3144
        %v3146 = vand.u32 %v3145, 4294901760
        %3147 = vmatprep.subr.mxu0 %v3146
        %v3148 = vand.u32 %v1850, 4294901760
        %v3149 = vsub.f32 %v1850, %v3148
        %v3150 = vand.u32 %v3149, 4294901760
        %3151 = vmatpush1.msra.mxu0 %v3150
        %v3152 = vand.u32 %v1853, 4294901760
        %v3153 = vsub.f32 %v1853, %v3152
        %v3154 = vand.u32 %v3153, 4294901760
        %3155 = vmatprep.subr.mxu0 %v3154
        %v3156 = vand.u32 %v1852, 4294901760
        %v3157 = vsub.f32 %v1852, %v3156
        %v3158 = vand.u32 %v3157, 4294901760
        %3159 = vmatpush1.msra.mxu0 %v3158
        %v3160 = vand.u32 %v1855, 4294901760
        %v3161 = vsub.f32 %v1855, %v3160
        %v3162 = vand.u32 %v3161, 4294901760
        %3163 = vmatprep.subr.mxu0 %v3162
        %v3164 = vand.u32 %v1854, 4294901760
        %v3165 = vsub.f32 %v1854, %v3164
        %v3166 = vand.u32 %v3165, 4294901760
        %3167 = vmatpush1.msra.mxu0 %v3166
        %v3168 = vand.u32 %v1857, 4294901760
        %v3169 = vsub.f32 %v1857, %v3168
        %v3170 = vand.u32 %v3169, 4294901760
        %3171 = vmatprep.subr.mxu0 %v3170
        %v3172 = vand.u32 %v1856, 4294901760
        %v3173 = vsub.f32 %v1856, %v3172
        %v3174 = vand.u32 %v3173, 4294901760
        %3175 = vmatpush1.msra.mxu0 %v3174
        %v3176 = vand.u32 %v1859, 4294901760
        %v3177 = vsub.f32 %v1859, %v3176
        %v3178 = vand.u32 %v3177, 4294901760
        %3179 = vmatprep.subr.mxu0 %v3178
        %v3180 = vand.u32 %v1858, 4294901760
        %v3181 = vsub.f32 %v1858, %v3180
        %v3182 = vand.u32 %v3181, 4294901760
        %3183 = vmatpush1.msra.mxu0 %v3182
        %v3184 = vand.u32 %v1861, 4294901760
        %v3185 = vsub.f32 %v1861, %v3184
        %v3186 = vand.u32 %v3185, 4294901760
        %3187 = vmatprep.subr.mxu0 %v3186
        %v3188 = vand.u32 %v1860, 4294901760
        %v3189 = vsub.f32 %v1860, %v3188
        %v3190 = vand.u32 %v3189, 4294901760
        %3191 = vmatpush1.msra.mxu0 %v3190
        %v3192 = vand.u32 %v1863, 4294901760
        %v3193 = vsub.f32 %v1863, %v3192
        %v3194 = vand.u32 %v3193, 4294901760
        %3195 = vmatprep.subr.mxu0 %v3194
        %v3196 = vand.u32 %v1862, 4294901760
        %v3197 = vsub.f32 %v1862, %v3196
        %v3198 = vand.u32 %v3197, 4294901760
        %3199 = vmatpush1.msra.mxu0 %v3198
        %v3200 = vand.u32 %v1865, 4294901760
        %v3201 = vsub.f32 %v1865, %v3200
        %v3202 = vand.u32 %v3201, 4294901760
        %3203 = vmatprep.subr.mxu0 %v3202
        %v3204 = vand.u32 %v1864, 4294901760
        %v3205 = vsub.f32 %v1864, %v3204
        %v3206 = vand.u32 %v3205, 4294901760
        %3207 = vmatpush1.msra.mxu0 %v3206
        %v3208 = vand.u32 %v1867, 4294901760
        %v3209 = vsub.f32 %v1867, %v3208
        %v3210 = vand.u32 %v3209, 4294901760
        %3211 = vmatprep.subr.mxu0 %v3210
        %v3212 = vand.u32 %v1866, 4294901760
        %v3213 = vsub.f32 %v1866, %v3212
        %v3214 = vand.u32 %v3213, 4294901760
        %3215 = vmatpush1.msra.mxu0 %v3214
        %3216 = vmatprep.subr.mxu0 0.0
        %3217 = vmatpush1.msra.mxu0 0.0
        %3218 = vmatprep.subr.mxu0 0.0
        %3219 = vmatpush1.msra.mxu0 0.0
        %3220 = vmatprep.subr.mxu0 0.0
        %3221 = vmatpush1.msra.mxu0 0.0
        %3222 = vmatprep.subr.mxu0 0.0
        %3223 = vmatpush1.msra.mxu0 0.0
        %3224 = vmatprep.subr.mxu0 0.0
        %3225 = vmatpush1.msra.mxu0 0.0
        %3226 = vmatprep.subr.mxu0 0.0
        %3227 = vmatpush1.msra.mxu0 0.0
        %3228 = vmatprep.subr.mxu0 0.0
        %3229 = vmatpush1.msra.mxu0 0.0
        %3230 = vmatprep.subr.mxu0 0.0
        %3231 = vmatpush1.msra.mxu0 0.0
        %3232 = vmatprep.subr.mxu0 0.0
        %3233 = vmatpush1.msra.mxu0 0.0
        %3234 = vmatprep.subr.mxu0 0.0
        %3235 = vmatpush1.msra.mxu0 0.0
        %3236 = vmatprep.subr.mxu0 0.0
        %3237 = vmatpush1.msra.mxu0 0.0
        %3238 = vmatprep.subr.mxu0 0.0
        %3239 = vmatpush1.msra.mxu0 0.0
        %3240 = vmatprep.subr.mxu0 0.0
        %3241 = vmatpush1.msra.mxu0 0.0
        %3242 = vmatprep.subr.mxu0 0.0
        %3243 = vmatpush1.msra.mxu0 0.0
        %3244 = vmatprep.subr.mxu0 0.0
        %3245 = vmatpush1.msra.mxu0 0.0
        %3246 = vmatprep.subr.mxu0 0.0
        %3247 = vmatpush1.msra.mxu0 0.0
        %3248 = vmatprep.mubr.f32.mxu0 0.0
        %v3249 = vand.u32 %v1868, 4294901760
        %3250 = vmatmul.mubr.f32.gmra.mrb[0].mxu0 %v3249
        %v3251 = vpop.f32.mrb[0].mxu0
        %v3252 = vadd.f32 %v2949, %v3251
        %v3253 = vpop.f32.mrb[0].mxu0
        %v3254 = vadd.f32 %v2951, %v3253
        %3255 = vmatprep.mubr.f32.mxu0 0.0
        %v3256 = vand.u32 %v1869, 4294901760
        %3257 = vmatmul.mubr.f32.gmra.mrb[0].mxu0 %v3256
        %v3258 = vpop.f32.mrb[0].mxu0
        %v3259 = vadd.f32 %v2958, %v3258
        %v3260 = vpop.f32.mrb[0].mxu0
        %v3261 = vadd.f32 %v2960, %v3260
        %3262 = vmatprep.mubr.f32.mxu0 0.0
        %v3263 = vand.u32 %v1870, 4294901760
        %3264 = vmatmul.mubr.f32.gmra.mrb[0].mxu0 %v3263
        %v3265 = vpop.f32.mrb[0].mxu0
        %v3266 = vadd.f32 %v2967, %v3265
        %v3267 = vpop.f32.mrb[0].mxu0
        %v3268 = vadd.f32 %v2969, %v3267
        %3269 = vmatprep.mubr.f32.mxu0 0.0
        %v3270 = vand.u32 %v1871, 4294901760
        %3271 = vmatmul.mubr.f32.gmra.mrb[0].mxu0 %v3270
        %v3272 = vpop.f32.mrb[0].mxu0
        %v3273 = vadd.f32 %v2976, %v3272
        %v3274 = vpop.f32.mrb[0].mxu0
        %v3275 = vadd.f32 %v2978, %v3274
        %3276 = vmatprep.mubr.f32.mxu0 0.0
        %v3277 = vand.u32 %v1872, 4294901760
        %3278 = vmatmul.mubr.f32.gmra.mrb[0].mxu0 %v3277
        %v3279 = vpop.f32.mrb[0].mxu0
        %v3280 = vadd.f32 %v2985, %v3279
        %v3281 = vpop.f32.mrb[0].mxu0
        %v3282 = vadd.f32 %v2987, %v3281
        %3283 = vmatprep.mubr.f32.mxu0 0.0
        %v3284 = vand.u32 %v1873, 4294901760
        %3285 = vmatmul.mubr.f32.gmra.mrb[0].mxu0 %v3284
        %v3286 = vpop.f32.mrb[0].mxu0
        %v3287 = vadd.f32 %v2994, %v3286
        %v3288 = vpop.f32.mrb[0].mxu0
        %v3289 = vadd.f32 %v2996, %v3288
        %3290 = vmatprep.mubr.f32.mxu0 0.0
        %v3291 = vand.u32 %v1874, 4294901760
        %3292 = vmatmul.mubr.f32.gmra.mrb[0].mxu0 %v3291
        %v3293 = vpop.f32.mrb[0].mxu0
        %v3294 = vadd.f32 %v3003, %v3293
        %v3295 = vpop.f32.mrb[0].mxu0
        %v3296 = vadd.f32 %v3005, %v3295
        %3297 = vmatprep.mubr.f32.mxu0 0.0
        %v3298 = vand.u32 %v1875, 4294901760
        %3299 = vmatmul.mubr.f32.gmra.mrb[0].mxu0 %v3298
        %v3300 = vpop.f32.mrb[0].mxu0
        %v3301 = vadd.f32 %v3012, %v3300
        %v3302 = vpop.f32.mrb[0].mxu0
        %v3303 = vadd.f32 %v3014, %v3302
        %3304 = vmatprep.mubr.f32.mxu0 0.0
        %v3305 = vand.u32 %v1876, 4294901760
        %3306 = vmatmul.mubr.f32.gmra.mrb[0].mxu0 %v3305
        %v3307 = vpop.f32.mrb[0].mxu0
        %v3308 = vadd.f32 %v3021, %v3307
        %v3309 = vpop.f32.mrb[0].mxu0
        %v3310 = vadd.f32 %v3023, %v3309
        %3311 = vmatprep.mubr.f32.mxu0 0.0
        %v3312 = vand.u32 %v1877, 4294901760
        %3313 = vmatmul.mubr.f32.gmra.mrb[0].mxu0 %v3312
        %v3314 = vpop.f32.mrb[0].mxu0
        %v3315 = vadd.f32 %v3030, %v3314
        %v3316 = vpop.f32.mrb[0].mxu0
        %v3317 = vadd.f32 %v3032, %v3316
        %3318 = vmatprep.mubr.f32.mxu0 0.0
        %v3319 = vand.u32 %v1878, 4294901760
        %3320 = vmatmul.mubr.f32.gmra.mrb[0].mxu0 %v3319
        %v3321 = vpop.f32.mrb[0].mxu0
        %v3322 = vadd.f32 %v3039, %v3321
        %v3323 = vpop.f32.mrb[0].mxu0
        %v3324 = vadd.f32 %v3041, %v3323
        %3325 = vmatprep.mubr.f32.mxu0 0.0
        %v3326 = vand.u32 %v1879, 4294901760
        %3327 = vmatmul.mubr.f32.gmra.mrb[0].mxu0 %v3326
        %v3328 = vpop.f32.mrb[0].mxu0
        %v3329 = vadd.f32 %v3048, %v3328
        %v3330 = vpop.f32.mrb[0].mxu0
        %v3331 = vadd.f32 %v3050, %v3330
        %3332 = vmatprep.mubr.f32.mxu0 0.0
        %v3333 = vand.u32 %v1880, 4294901760
        %3334 = vmatmul.mubr.f32.gmra.mrb[0].mxu0 %v3333
        %v3335 = vpop.f32.mrb[0].mxu0
        %v3336 = vadd.f32 %v3057, %v3335
        %v3337 = vpop.f32.mrb[0].mxu0
        %v3338 = vadd.f32 %v3059, %v3337
        %3339 = vmatprep.mubr.f32.mxu0 0.0
        %v3340 = vand.u32 %v1881, 4294901760
        %3341 = vmatmul.mubr.f32.gmra.mrb[0].mxu0 %v3340
        %v3342 = vpop.f32.mrb[0].mxu0
        %v3343 = vadd.f32 %v3066, %v3342
        %v3344 = vpop.f32.mrb[0].mxu0
        %v3345 = vadd.f32 %v3068, %v3344
        %3346 = vmatprep.mubr.f32.mxu0 0.0
        %v3347 = vand.u32 %v1882, 4294901760
        %3348 = vmatmul.mubr.f32.gmra.mrb[0].mxu0 %v3347
        %v3349 = vpop.f32.mrb[0].mxu0
        %v3350 = vadd.f32 %v3075, %v3349
        %v3351 = vpop.f32.mrb[0].mxu0
        %v3352 = vadd.f32 %v3077, %v3351
        %3353 = vmatprep.mubr.f32.mxu0 0.0
        %v3354 = vand.u32 %v1883, 4294901760
        %3355 = vmatmul.mubr.f32.gmra.mrb[0].mxu0 %v3354
        %v3356 = vpop.f32.mrb[0].mxu0
        %v3357 = vadd.f32 %v3084, %v3356
        %v3358 = vpop.f32.mrb[0].mxu0
        %v3359 = vadd.f32 %v3086, %v3358
        %3360 = vdwg.mxu0
        %v3361 = vand.u32 %v1837, 4294901760
        %3362 = vmatprep.subr.mxu0 %v3361
        %v3363 = vand.u32 %v1836, 4294901760
        %3364 = vmatpush1.msra.mxu0 %v3363
        %v3365 = vand.u32 %v1839, 4294901760
        %3366 = vmatprep.subr.mxu0 %v3365
        %v3367 = vand.u32 %v1838, 4294901760
        %3368 = vmatpush1.msra.mxu0 %v3367
        %v3369 = vand.u32 %v1841, 4294901760
        %3370 = vmatprep.subr.mxu0 %v3369
        %v3371 = vand.u32 %v1840, 4294901760
        %3372 = vmatpush1.msra.mxu0 %v3371
        %v3373 = vand.u32 %v1843, 4294901760
        %3374 = vmatprep.subr.mxu0 %v3373
        %v3375 = vand.u32 %v1842, 4294901760
        %3376 = vmatpush1.msra.mxu0 %v3375
        %v3377 = vand.u32 %v1845, 4294901760
        %3378 = vmatprep.subr.mxu0 %v3377
        %v3379 = vand.u32 %v1844, 4294901760
        %3380 = vmatpush1.msra.mxu0 %v3379
        %v3381 = vand.u32 %v1847, 4294901760
        %3382 = vmatprep.subr.mxu0 %v3381
        %v3383 = vand.u32 %v1846, 4294901760
        %3384 = vmatpush1.msra.mxu0 %v3383
        %v3385 = vand.u32 %v1849, 4294901760
        %3386 = vmatprep.subr.mxu0 %v3385
        %v3387 = vand.u32 %v1848, 4294901760
        %3388 = vmatpush1.msra.mxu0 %v3387
        %v3389 = vand.u32 %v1851, 4294901760
        %3390 = vmatprep.subr.mxu0 %v3389
        %v3391 = vand.u32 %v1850, 4294901760
        %3392 = vmatpush1.msra.mxu0 %v3391
        %v3393 = vand.u32 %v1853, 4294901760
        %3394 = vmatprep.subr.mxu0 %v3393
        %v3395 = vand.u32 %v1852, 4294901760
        %3396 = vmatpush1.msra.mxu0 %v3395
        %v3397 = vand.u32 %v1855, 4294901760
        %3398 = vmatprep.subr.mxu0 %v3397
        %v3399 = vand.u32 %v1854, 4294901760
        %3400 = vmatpush1.msra.mxu0 %v3399
        %v3401 = vand.u32 %v1857, 4294901760
        %3402 = vmatprep.subr.mxu0 %v3401
        %v3403 = vand.u32 %v1856, 4294901760
        %3404 = vmatpush1.msra.mxu0 %v3403
        %v3405 = vand.u32 %v1859, 4294901760
        %3406 = vmatprep.subr.mxu0 %v3405
        %v3407 = vand.u32 %v1858, 4294901760
        %3408 = vmatpush1.msra.mxu0 %v3407
        %v3409 = vand.u32 %v1861, 4294901760
        %3410 = vmatprep.subr.mxu0 %v3409
        %v3411 = vand.u32 %v1860, 4294901760
        %3412 = vmatpush1.msra.mxu0 %v3411
        %v3413 = vand.u32 %v1863, 4294901760
        %3414 = vmatprep.subr.mxu0 %v3413
        %v3415 = vand.u32 %v1862, 4294901760
        %3416 = vmatpush1.msra.mxu0 %v3415
        %v3417 = vand.u32 %v1865, 4294901760
        %3418 = vmatprep.subr.mxu0 %v3417
        %v3419 = vand.u32 %v1864, 4294901760
        %3420 = vmatpush1.msra.mxu0 %v3419
        %v3421 = vand.u32 %v1867, 4294901760
        %3422 = vmatprep.subr.mxu0 %v3421
        %v3423 = vand.u32 %v1866, 4294901760
        %3424 = vmatpush1.msra.mxu0 %v3423
        %3425 = vmatprep.subr.mxu0 0.0
        %3426 = vmatpush1.msra.mxu0 0.0
        %3427 = vmatprep.subr.mxu0 0.0
        %3428 = vmatpush1.msra.mxu0 0.0
        %3429 = vmatprep.subr.mxu0 0.0
        %3430 = vmatpush1.msra.mxu0 0.0
        %3431 = vmatprep.subr.mxu0 0.0
        %3432 = vmatpush1.msra.mxu0 0.0
        %3433 = vmatprep.subr.mxu0 0.0
        %3434 = vmatpush1.msra.mxu0 0.0
        %3435 = vmatprep.subr.mxu0 0.0
        %3436 = vmatpush1.msra.mxu0 0.0
        %3437 = vmatprep.subr.mxu0 0.0
        %3438 = vmatpush1.msra.mxu0 0.0
        %3439 = vmatprep.subr.mxu0 0.0
        %3440 = vmatpush1.msra.mxu0 0.0
        %3441 = vmatprep.subr.mxu0 0.0
        %3442 = vmatpush1.msra.mxu0 0.0
        %3443 = vmatprep.subr.mxu0 0.0
        %3444 = vmatpush1.msra.mxu0 0.0
        %3445 = vmatprep.subr.mxu0 0.0
        %3446 = vmatpush1.msra.mxu0 0.0
        %3447 = vmatprep.subr.mxu0 0.0
        %3448 = vmatpush1.msra.mxu0 0.0
        %3449 = vmatprep.subr.mxu0 0.0
        %3450 = vmatpush1.msra.mxu0 0.0
        %3451 = vmatprep.subr.mxu0 0.0
        %3452 = vmatpush1.msra.mxu0 0.0
        %3453 = vmatprep.subr.mxu0 0.0
        %3454 = vmatpush1.msra.mxu0 0.0
        %3455 = vmatprep.subr.mxu0 0.0
        %3456 = vmatpush1.msra.mxu0 0.0
        %3457 = vmatprep.mubr.f32.mxu0 0.0
        %v3458 = vand.u32 %v1868, 4294901760
        %3459 = vmatmul.mubr.f32.gmra.mrb[0].mxu0 %v3458
        %v3460 = vpop.f32.mrb[0].mxu0
        %v3461 = vadd.f32 %v3252, %v3460
        %v3462 = vpop.f32.mrb[0].mxu0
        %v3463 = vadd.f32 %v3254, %v3462
        %3464 = vmatprep.mubr.f32.mxu0 0.0
        %v3465 = vand.u32 %v1869, 4294901760
        %3466 = vmatmul.mubr.f32.gmra.mrb[0].mxu0 %v3465
        %v3467 = vpop.f32.mrb[0].mxu0
        %v3468 = vadd.f32 %v3259, %v3467
        %v3469 = vpop.f32.mrb[0].mxu0
        %v3470 = vadd.f32 %v3261, %v3469
        %3471 = vmatprep.mubr.f32.mxu0 0.0
        %v3472 = vand.u32 %v1870, 4294901760
        %3473 = vmatmul.mubr.f32.gmra.mrb[0].mxu0 %v3472
        %v3474 = vpop.f32.mrb[0].mxu0
        %v3475 = vadd.f32 %v3266, %v3474
        %v3476 = vpop.f32.mrb[0].mxu0
        %v3477 = vadd.f32 %v3268, %v3476
        %3478 = vmatprep.mubr.f32.mxu0 0.0
        %v3479 = vand.u32 %v1871, 4294901760
        %3480 = vmatmul.mubr.f32.gmra.mrb[0].mxu0 %v3479
        %v3481 = vpop.f32.mrb[0].mxu0
        %v3482 = vadd.f32 %v3273, %v3481
        %v3483 = vpop.f32.mrb[0].mxu0
        %v3484 = vadd.f32 %v3275, %v3483
        %3485 = vmatprep.mubr.f32.mxu0 0.0
        %v3486 = vand.u32 %v1872, 4294901760
        %3487 = vmatmul.mubr.f32.gmra.mrb[0].mxu0 %v3486
        %v3488 = vpop.f32.mrb[0].mxu0
        %v3489 = vadd.f32 %v3280, %v3488
        %v3490 = vpop.f32.mrb[0].mxu0
        %v3491 = vadd.f32 %v3282, %v3490
        %3492 = vmatprep.mubr.f32.mxu0 0.0
        %v3493 = vand.u32 %v1873, 4294901760
        %3494 = vmatmul.mubr.f32.gmra.mrb[0].mxu0 %v3493
        %v3495 = vpop.f32.mrb[0].mxu0
        %v3496 = vadd.f32 %v3287, %v3495
        %v3497 = vpop.f32.mrb[0].mxu0
        %v3498 = vadd.f32 %v3289, %v3497
        %3499 = vmatprep.mubr.f32.mxu0 0.0
        %v3500 = vand.u32 %v1874, 4294901760
        %3501 = vmatmul.mubr.f32.gmra.mrb[0].mxu0 %v3500
        %v3502 = vpop.f32.mrb[0].mxu0
        %v3503 = vadd.f32 %v3294, %v3502
        %v3504 = vpop.f32.mrb[0].mxu0
        %v3505 = vadd.f32 %v3296, %v3504
        %3506 = vmatprep.mubr.f32.mxu0 0.0
        %v3507 = vand.u32 %v1875, 4294901760
        %3508 = vmatmul.mubr.f32.gmra.mrb[0].mxu0 %v3507
        %v3509 = vpop.f32.mrb[0].mxu0
        %v3510 = vadd.f32 %v3301, %v3509
        %v3511 = vpop.f32.mrb[0].mxu0
        %v3512 = vadd.f32 %v3303, %v3511
        %3513 = vmatprep.mubr.f32.mxu0 0.0
        %v3514 = vand.u32 %v1876, 4294901760
        %3515 = vmatmul.mubr.f32.gmra.mrb[0].mxu0 %v3514
        %v3516 = vpop.f32.mrb[0].mxu0
        %v3517 = vadd.f32 %v3308, %v3516
        %v3518 = vpop.f32.mrb[0].mxu0
        %v3519 = vadd.f32 %v3310, %v3518
        %3520 = vmatprep.mubr.f32.mxu0 0.0
        %v3521 = vand.u32 %v1877, 4294901760
        %3522 = vmatmul.mubr.f32.gmra.mrb[0].mxu0 %v3521
        %v3523 = vpop.f32.mrb[0].mxu0
        %v3524 = vadd.f32 %v3315, %v3523
        %v3525 = vpop.f32.mrb[0].mxu0
        %v3526 = vadd.f32 %v3317, %v3525
        %3527 = vmatprep.mubr.f32.mxu0 0.0
        %v3528 = vand.u32 %v1878, 4294901760
        %3529 = vmatmul.mubr.f32.gmra.mrb[0].mxu0 %v3528
        %v3530 = vpop.f32.mrb[0].mxu0
        %v3531 = vadd.f32 %v3322, %v3530
        %v3532 = vpop.f32.mrb[0].mxu0
        %v3533 = vadd.f32 %v3324, %v3532
        %3534 = vmatprep.mubr.f32.mxu0 0.0
        %v3535 = vand.u32 %v1879, 4294901760
        %3536 = vmatmul.mubr.f32.gmra.mrb[0].mxu0 %v3535
        %v3537 = vpop.f32.mrb[0].mxu0
        %v3538 = vadd.f32 %v3329, %v3537
        %v3539 = vpop.f32.mrb[0].mxu0
        %v3540 = vadd.f32 %v3331, %v3539
        %3541 = vmatprep.mubr.f32.mxu0 0.0
        %v3542 = vand.u32 %v1880, 4294901760
        %3543 = vmatmul.mubr.f32.gmra.mrb[0].mxu0 %v3542
        %v3544 = vpop.f32.mrb[0].mxu0
        %v3545 = vadd.f32 %v3336, %v3544
        %v3546 = vpop.f32.mrb[0].mxu0
        %v3547 = vadd.f32 %v3338, %v3546
        %3548 = vmatprep.mubr.f32.mxu0 0.0
        %v3549 = vand.u32 %v1881, 4294901760
        %3550 = vmatmul.mubr.f32.gmra.mrb[0].mxu0 %v3549
        %v3551 = vpop.f32.mrb[0].mxu0
        %v3552 = vadd.f32 %v3343, %v3551
        %v3553 = vpop.f32.mrb[0].mxu0
        %v3554 = vadd.f32 %v3345, %v3553
        %3555 = vmatprep.mubr.f32.mxu0 0.0
        %v3556 = vand.u32 %v1882, 4294901760
        %3557 = vmatmul.mubr.f32.gmra.mrb[0].mxu0 %v3556
        %v3558 = vpop.f32.mrb[0].mxu0
        %v3559 = vadd.f32 %v3350, %v3558
        %v3560 = vpop.f32.mrb[0].mxu0
        %v3561 = vadd.f32 %v3352, %v3560
        %3562 = vmatprep.mubr.f32.mxu0 0.0
        %v3563 = vand.u32 %v1883, 4294901760
        %3564 = vmatmul.mubr.f32.gmra.mrb[0].mxu0 %v3563
        %v3565 = vpop.f32.mrb[0].mxu0
        %v3566 = vadd.f32 %v3357, %v3565
        %v3567 = vpop.f32.mrb[0].mxu0
        %v3568 = vadd.f32 %v3359, %v3567
        %3569 = vdwg.mxu0
        %v3570 = vmax.f32 %v3461, 0.0
        %v3571 = vmax.f32 %v3463, 0.0
        %v3572 = vmax.f32 %v3468, 0.0
        %v3573 = vmax.f32 %v3470, 0.0
        %v3574 = vmax.f32 %v3475, 0.0
        %v3575 = vmax.f32 %v3477, 0.0
        %v3576 = vmax.f32 %v3482, 0.0
        %v3577 = vmax.f32 %v3484, 0.0
        %v3578 = vmax.f32 %v3489, 0.0
        %v3579 = vmax.f32 %v3491, 0.0
        %v3580 = vmax.f32 %v3496, 0.0
        %v3581 = vmax.f32 %v3498, 0.0
        %v3582 = vmax.f32 %v3503, 0.0
        %v3583 = vmax.f32 %v3505, 0.0
        %v3584 = vmax.f32 %v3510, 0.0
        %v3585 = vmax.f32 %v3512, 0.0
        %v3586 = vmax.f32 %v3517, 0.0
        %v3587 = vmax.f32 %v3519, 0.0
        %v3588 = vmax.f32 %v3524, 0.0
        %v3589 = vmax.f32 %v3526, 0.0
        %v3590 = vmax.f32 %v3531, 0.0
        %v3591 = vmax.f32 %v3533, 0.0
        %v3592 = vmax.f32 %v3538, 0.0
        %v3593 = vmax.f32 %v3540, 0.0
        %v3594 = vmax.f32 %v3545, 0.0
        %v3595 = vmax.f32 %v3547, 0.0
        %v3596 = vmax.f32 %v3552, 0.0
        %v3597 = vmax.f32 %v3554, 0.0
        %v3598 = vmax.f32 %v3559, 0.0
        %v3599 = vmax.f32 %v3561, 0.0
        %v3600 = vmax.f32 %v3566, 0.0
        %v3601 = vmax.f32 %v3568, 0.0
        %v3602 = vld [vmem:[%s7] sm:$0x3]
        %v3603 = vld [vmem:[%s8] sm:$0x3]
        %3605 = vset.pattern.permute.xlu0 0
        %3606 = vperm.xlu0 %3605, %v3603
        %v3607 = vpop.permute.xlu0 %3606
        %v3609 = vand.u32 %v3571, 4294901760
        %3610 = vmatprep.subr.mxu0 %v3609
        %v3611 = vand.u32 %v3570, 4294901760
        %3612 = vmatpush1.msra.mxu0 %v3611
        %v3613 = vand.u32 %v3573, 4294901760
        %3614 = vmatprep.subr.mxu0 %v3613
        %v3615 = vand.u32 %v3572, 4294901760
        %3616 = vmatpush1.msra.mxu0 %v3615
        %v3617 = vand.u32 %v3575, 4294901760
        %3618 = vmatprep.subr.mxu0 %v3617
        %v3619 = vand.u32 %v3574, 4294901760
        %3620 = vmatpush1.msra.mxu0 %v3619
        %v3621 = vand.u32 %v3577, 4294901760
        %3622 = vmatprep.subr.mxu0 %v3621
        %v3623 = vand.u32 %v3576, 4294901760
        %3624 = vmatpush1.msra.mxu0 %v3623
        %v3625 = vand.u32 %v3579, 4294901760
        %3626 = vmatprep.subr.mxu0 %v3625
        %v3627 = vand.u32 %v3578, 4294901760
        %3628 = vmatpush1.msra.mxu0 %v3627
        %v3629 = vand.u32 %v3581, 4294901760
        %3630 = vmatprep.subr.mxu0 %v3629
        %v3631 = vand.u32 %v3580, 4294901760
        %3632 = vmatpush1.msra.mxu0 %v3631
        %v3633 = vand.u32 %v3583, 4294901760
        %3634 = vmatprep.subr.mxu0 %v3633
        %v3635 = vand.u32 %v3582, 4294901760
        %3636 = vmatpush1.msra.mxu0 %v3635
        %v3637 = vand.u32 %v3585, 4294901760
        %3638 = vmatprep.subr.mxu0 %v3637
        %v3639 = vand.u32 %v3584, 4294901760
        %3640 = vmatpush1.msra.mxu0 %v3639
        %v3641 = vand.u32 %v3587, 4294901760
        %3642 = vmatprep.subr.mxu0 %v3641
        %v3643 = vand.u32 %v3586, 4294901760
        %3644 = vmatpush1.msra.mxu0 %v3643
        %v3645 = vand.u32 %v3589, 4294901760
        %3646 = vmatprep.subr.mxu0 %v3645
        %v3647 = vand.u32 %v3588, 4294901760
        %3648 = vmatpush1.msra.mxu0 %v3647
        %v3649 = vand.u32 %v3591, 4294901760
        %3650 = vmatprep.subr.mxu0 %v3649
        %v3651 = vand.u32 %v3590, 4294901760
        %3652 = vmatpush1.msra.mxu0 %v3651
        %v3653 = vand.u32 %v3593, 4294901760
        %3654 = vmatprep.subr.mxu0 %v3653
        %v3655 = vand.u32 %v3592, 4294901760
        %3656 = vmatpush1.msra.mxu0 %v3655
        %v3657 = vand.u32 %v3595, 4294901760
        %3658 = vmatprep.subr.mxu0 %v3657
        %v3659 = vand.u32 %v3594, 4294901760
        %3660 = vmatpush1.msra.mxu0 %v3659
        %v3661 = vand.u32 %v3597, 4294901760
        %3662 = vmatprep.subr.mxu0 %v3661
        %v3663 = vand.u32 %v3596, 4294901760
        %3664 = vmatpush1.msra.mxu0 %v3663
        %v3665 = vand.u32 %v3599, 4294901760
        %3666 = vmatprep.subr.mxu0 %v3665
        %v3667 = vand.u32 %v3598, 4294901760
        %3668 = vmatpush1.msra.mxu0 %v3667
        %v3669 = vand.u32 %v3601, 4294901760
        %3670 = vmatprep.subr.mxu0 %v3669
        %v3671 = vand.u32 %v3600, 4294901760
        %3672 = vmatpush1.msra.mxu0 %v3671
        %3673 = vmatprep.subr.mxu0 0.0
        %3674 = vmatpush1.msra.mxu0 0.0
        %3675 = vmatprep.subr.mxu0 0.0
        %3676 = vmatpush1.msra.mxu0 0.0
        %3677 = vmatprep.subr.mxu0 0.0
        %3678 = vmatpush1.msra.mxu0 0.0
        %3679 = vmatprep.subr.mxu0 0.0
        %3680 = vmatpush1.msra.mxu0 0.0
        %3681 = vmatprep.subr.mxu0 0.0
        %3682 = vmatpush1.msra.mxu0 0.0
        %3683 = vmatprep.subr.mxu0 0.0
        %3684 = vmatpush1.msra.mxu0 0.0
        %3685 = vmatprep.subr.mxu0 0.0
        %3686 = vmatpush1.msra.mxu0 0.0
        %3687 = vmatprep.subr.mxu0 0.0
        %3688 = vmatpush1.msra.mxu0 0.0
        %3689 = vmatprep.subr.mxu0 0.0
        %3690 = vmatpush1.msra.mxu0 0.0
        %3691 = vmatprep.subr.mxu0 0.0
        %3692 = vmatpush1.msra.mxu0 0.0
        %3693 = vmatprep.subr.mxu0 0.0
        %3694 = vmatpush1.msra.mxu0 0.0
        %3695 = vmatprep.subr.mxu0 0.0
        %3696 = vmatpush1.msra.mxu0 0.0
        %3697 = vmatprep.subr.mxu0 0.0
        %3698 = vmatpush1.msra.mxu0 0.0
        %3699 = vmatprep.subr.mxu0 0.0
        %3700 = vmatpush1.msra.mxu0 0.0
        %3701 = vmatprep.subr.mxu0 0.0
        %3702 = vmatpush1.msra.mxu0 0.0
        %3703 = vmatprep.subr.mxu0 0.0
        %3704 = vmatpush1.msra.mxu0 0.0
        %3705 = vmatprep.mubr.f32.mxu0 0.0
        %v3706 = vand.u32 %v3602, 4294901760
        %v3707 = vsub.f32 %v3602, %v3706
        %v3708 = vand.u32 %v3707, 4294901760
        %v3709 = vsub.f32 %v3707, %v3708
        %v3710 = vand.u32 %v3709, 4294901760
        %3711 = vmatmul.mubr.f32.gmra.mrb[0].mxu0 %v3710
        %v3712 = vpop.f32.mrb[0].mxu0
        %v3713 = vadd.f32 %v3607, %v3712
        %v3714 = vpop.f32.mrb[0].mxu0
        %v3715 = vadd.f32 %v3607, %v3714
        %3716 = vdwg.mxu0
        %v3717 = vand.u32 %v3571, 4294901760
        %v3718 = vsub.f32 %v3571, %v3717
        %v3719 = vand.u32 %v3718, 4294901760
        %v3720 = vsub.f32 %v3718, %v3719
        %v3721 = vand.u32 %v3720, 4294901760
        %3722 = vmatprep.subr.mxu0 %v3721
        %v3723 = vand.u32 %v3570, 4294901760
        %v3724 = vsub.f32 %v3570, %v3723
        %v3725 = vand.u32 %v3724, 4294901760
        %v3726 = vsub.f32 %v3724, %v3725
        %v3727 = vand.u32 %v3726, 4294901760
        %3728 = vmatpush1.msra.mxu0 %v3727
        %v3729 = vand.u32 %v3573, 4294901760
        %v3730 = vsub.f32 %v3573, %v3729
        %v3731 = vand.u32 %v3730, 4294901760
        %v3732 = vsub.f32 %v3730, %v3731
        %v3733 = vand.u32 %v3732, 4294901760
        %3734 = vmatprep.subr.mxu0 %v3733
        %v3735 = vand.u32 %v3572, 4294901760
        %v3736 = vsub.f32 %v3572, %v3735
        %v3737 = vand.u32 %v3736, 4294901760
        %v3738 = vsub.f32 %v3736, %v3737
        %v3739 = vand.u32 %v3738, 4294901760
        %3740 = vmatpush1.msra.mxu0 %v3739
        %v3741 = vand.u32 %v3575, 4294901760
        %v3742 = vsub.f32 %v3575, %v3741
        %v3743 = vand.u32 %v3742, 4294901760
        %v3744 = vsub.f32 %v3742, %v3743
        %v3745 = vand.u32 %v3744, 4294901760
        %3746 = vmatprep.subr.mxu0 %v3745
        %v3747 = vand.u32 %v3574, 4294901760
        %v3748 = vsub.f32 %v3574, %v3747
        %v3749 = vand.u32 %v3748, 4294901760
        %v3750 = vsub.f32 %v3748, %v3749
        %v3751 = vand.u32 %v3750, 4294901760
        %3752 = vmatpush1.msra.mxu0 %v3751
        %v3753 = vand.u32 %v3577, 4294901760
        %v3754 = vsub.f32 %v3577, %v3753
        %v3755 = vand.u32 %v3754, 4294901760
        %v3756 = vsub.f32 %v3754, %v3755
        %v3757 = vand.u32 %v3756, 4294901760
        %3758 = vmatprep.subr.mxu0 %v3757
        %v3759 = vand.u32 %v3576, 4294901760
        %v3760 = vsub.f32 %v3576, %v3759
        %v3761 = vand.u32 %v3760, 4294901760
        %v3762 = vsub.f32 %v3760, %v3761
        %v3763 = vand.u32 %v3762, 4294901760
        %3764 = vmatpush1.msra.mxu0 %v3763
        %v3765 = vand.u32 %v3579, 4294901760
        %v3766 = vsub.f32 %v3579, %v3765
        %v3767 = vand.u32 %v3766, 4294901760
        %v3768 = vsub.f32 %v3766, %v3767
        %v3769 = vand.u32 %v3768, 4294901760
        %3770 = vmatprep.subr.mxu0 %v3769
        %v3771 = vand.u32 %v3578, 4294901760
        %v3772 = vsub.f32 %v3578, %v3771
        %v3773 = vand.u32 %v3772, 4294901760
        %v3774 = vsub.f32 %v3772, %v3773
        %v3775 = vand.u32 %v3774, 4294901760
        %3776 = vmatpush1.msra.mxu0 %v3775
        %v3777 = vand.u32 %v3581, 4294901760
        %v3778 = vsub.f32 %v3581, %v3777
        %v3779 = vand.u32 %v3778, 4294901760
        %v3780 = vsub.f32 %v3778, %v3779
        %v3781 = vand.u32 %v3780, 4294901760
        %3782 = vmatprep.subr.mxu0 %v3781
        %v3783 = vand.u32 %v3580, 4294901760
        %v3784 = vsub.f32 %v3580, %v3783
        %v3785 = vand.u32 %v3784, 4294901760
        %v3786 = vsub.f32 %v3784, %v3785
        %v3787 = vand.u32 %v3786, 4294901760
        %3788 = vmatpush1.msra.mxu0 %v3787
        %v3789 = vand.u32 %v3583, 4294901760
        %v3790 = vsub.f32 %v3583, %v3789
        %v3791 = vand.u32 %v3790, 4294901760
        %v3792 = vsub.f32 %v3790, %v3791
        %v3793 = vand.u32 %v3792, 4294901760
        %3794 = vmatprep.subr.mxu0 %v3793
        %v3795 = vand.u32 %v3582, 4294901760
        %v3796 = vsub.f32 %v3582, %v3795
        %v3797 = vand.u32 %v3796, 4294901760
        %v3798 = vsub.f32 %v3796, %v3797
        %v3799 = vand.u32 %v3798, 4294901760
        %3800 = vmatpush1.msra.mxu0 %v3799
        %v3801 = vand.u32 %v3585, 4294901760
        %v3802 = vsub.f32 %v3585, %v3801
        %v3803 = vand.u32 %v3802, 4294901760
        %v3804 = vsub.f32 %v3802, %v3803
        %v3805 = vand.u32 %v3804, 4294901760
        %3806 = vmatprep.subr.mxu0 %v3805
        %v3807 = vand.u32 %v3584, 4294901760
        %v3808 = vsub.f32 %v3584, %v3807
        %v3809 = vand.u32 %v3808, 4294901760
        %v3810 = vsub.f32 %v3808, %v3809
        %v3811 = vand.u32 %v3810, 4294901760
        %3812 = vmatpush1.msra.mxu0 %v3811
        %v3813 = vand.u32 %v3587, 4294901760
        %v3814 = vsub.f32 %v3587, %v3813
        %v3815 = vand.u32 %v3814, 4294901760
        %v3816 = vsub.f32 %v3814, %v3815
        %v3817 = vand.u32 %v3816, 4294901760
        %3818 = vmatprep.subr.mxu0 %v3817
        %v3819 = vand.u32 %v3586, 4294901760
        %v3820 = vsub.f32 %v3586, %v3819
        %v3821 = vand.u32 %v3820, 4294901760
        %v3822 = vsub.f32 %v3820, %v3821
        %v3823 = vand.u32 %v3822, 4294901760
        %3824 = vmatpush1.msra.mxu0 %v3823
        %v3825 = vand.u32 %v3589, 4294901760
        %v3826 = vsub.f32 %v3589, %v3825
        %v3827 = vand.u32 %v3826, 4294901760
        %v3828 = vsub.f32 %v3826, %v3827
        %v3829 = vand.u32 %v3828, 4294901760
        %3830 = vmatprep.subr.mxu0 %v3829
        %v3831 = vand.u32 %v3588, 4294901760
        %v3832 = vsub.f32 %v3588, %v3831
        %v3833 = vand.u32 %v3832, 4294901760
        %v3834 = vsub.f32 %v3832, %v3833
        %v3835 = vand.u32 %v3834, 4294901760
        %3836 = vmatpush1.msra.mxu0 %v3835
        %v3837 = vand.u32 %v3591, 4294901760
        %v3838 = vsub.f32 %v3591, %v3837
        %v3839 = vand.u32 %v3838, 4294901760
        %v3840 = vsub.f32 %v3838, %v3839
        %v3841 = vand.u32 %v3840, 4294901760
        %3842 = vmatprep.subr.mxu0 %v3841
        %v3843 = vand.u32 %v3590, 4294901760
        %v3844 = vsub.f32 %v3590, %v3843
        %v3845 = vand.u32 %v3844, 4294901760
        %v3846 = vsub.f32 %v3844, %v3845
        %v3847 = vand.u32 %v3846, 4294901760
        %3848 = vmatpush1.msra.mxu0 %v3847
        %v3849 = vand.u32 %v3593, 4294901760
        %v3850 = vsub.f32 %v3593, %v3849
        %v3851 = vand.u32 %v3850, 4294901760
        %v3852 = vsub.f32 %v3850, %v3851
        %v3853 = vand.u32 %v3852, 4294901760
        %3854 = vmatprep.subr.mxu0 %v3853
        %v3855 = vand.u32 %v3592, 4294901760
        %v3856 = vsub.f32 %v3592, %v3855
        %v3857 = vand.u32 %v3856, 4294901760
        %v3858 = vsub.f32 %v3856, %v3857
        %v3859 = vand.u32 %v3858, 4294901760
        %3860 = vmatpush1.msra.mxu0 %v3859
        %v3861 = vand.u32 %v3595, 4294901760
        %v3862 = vsub.f32 %v3595, %v3861
        %v3863 = vand.u32 %v3862, 4294901760
        %v3864 = vsub.f32 %v3862, %v3863
        %v3865 = vand.u32 %v3864, 4294901760
        %3866 = vmatprep.subr.mxu0 %v3865
        %v3867 = vand.u32 %v3594, 4294901760
        %v3868 = vsub.f32 %v3594, %v3867
        %v3869 = vand.u32 %v3868, 4294901760
        %v3870 = vsub.f32 %v3868, %v3869
        %v3871 = vand.u32 %v3870, 4294901760
        %3872 = vmatpush1.msra.mxu0 %v3871
        %v3873 = vand.u32 %v3597, 4294901760
        %v3874 = vsub.f32 %v3597, %v3873
        %v3875 = vand.u32 %v3874, 4294901760
        %v3876 = vsub.f32 %v3874, %v3875
        %v3877 = vand.u32 %v3876, 4294901760
        %3878 = vmatprep.subr.mxu0 %v3877
        %v3879 = vand.u32 %v3596, 4294901760
        %v3880 = vsub.f32 %v3596, %v3879
        %v3881 = vand.u32 %v3880, 4294901760
        %v3882 = vsub.f32 %v3880, %v3881
        %v3883 = vand.u32 %v3882, 4294901760
        %3884 = vmatpush1.msra.mxu0 %v3883
        %v3885 = vand.u32 %v3599, 4294901760
        %v3886 = vsub.f32 %v3599, %v3885
        %v3887 = vand.u32 %v3886, 4294901760
        %v3888 = vsub.f32 %v3886, %v3887
        %v3889 = vand.u32 %v3888, 4294901760
        %3890 = vmatprep.subr.mxu0 %v3889
        %v3891 = vand.u32 %v3598, 4294901760
        %v3892 = vsub.f32 %v3598, %v3891
        %v3893 = vand.u32 %v3892, 4294901760
        %v3894 = vsub.f32 %v3892, %v3893
        %v3895 = vand.u32 %v3894, 4294901760
        %3896 = vmatpush1.msra.mxu0 %v3895
        %v3897 = vand.u32 %v3601, 4294901760
        %v3898 = vsub.f32 %v3601, %v3897
        %v3899 = vand.u32 %v3898, 4294901760
        %v3900 = vsub.f32 %v3898, %v3899
        %v3901 = vand.u32 %v3900, 4294901760
        %3902 = vmatprep.subr.mxu0 %v3901
        %v3903 = vand.u32 %v3600, 4294901760
        %v3904 = vsub.f32 %v3600, %v3903
        %v3905 = vand.u32 %v3904, 4294901760
        %v3906 = vsub.f32 %v3904, %v3905
        %v3907 = vand.u32 %v3906, 4294901760
        %3908 = vmatpush1.msra.mxu0 %v3907
        %3909 = vmatprep.subr.mxu0 0.0
        %3910 = vmatpush1.msra.mxu0 0.0
        %3911 = vmatprep.subr.mxu0 0.0
        %3912 = vmatpush1.msra.mxu0 0.0
        %3913 = vmatprep.subr.mxu0 0.0
        %3914 = vmatpush1.msra.mxu0 0.0
        %3915 = vmatprep.subr.mxu0 0.0
        %3916 = vmatpush1.msra.mxu0 0.0
        %3917 = vmatprep.subr.mxu0 0.0
        %3918 = vmatpush1.msra.mxu0 0.0
        %3919 = vmatprep.subr.mxu0 0.0
        %3920 = vmatpush1.msra.mxu0 0.0
        %3921 = vmatprep.subr.mxu0 0.0
        %3922 = vmatpush1.msra.mxu0 0.0
        %3923 = vmatprep.subr.mxu0 0.0
        %3924 = vmatpush1.msra.mxu0 0.0
        %3925 = vmatprep.subr.mxu0 0.0
        %3926 = vmatpush1.msra.mxu0 0.0
        %3927 = vmatprep.subr.mxu0 0.0
        %3928 = vmatpush1.msra.mxu0 0.0
        %3929 = vmatprep.subr.mxu0 0.0
        %3930 = vmatpush1.msra.mxu0 0.0
        %3931 = vmatprep.subr.mxu0 0.0
        %3932 = vmatpush1.msra.mxu0 0.0
        %3933 = vmatprep.subr.mxu0 0.0
        %3934 = vmatpush1.msra.mxu0 0.0
        %3935 = vmatprep.subr.mxu0 0.0
        %3936 = vmatpush1.msra.mxu0 0.0
        %3937 = vmatprep.subr.mxu0 0.0
        %3938 = vmatpush1.msra.mxu0 0.0
        %3939 = vmatprep.subr.mxu0 0.0
        %3940 = vmatpush1.msra.mxu0 0.0
        %3941 = vmatprep.mubr.f32.mxu0 0.0
        %v3942 = vand.u32 %v3602, 4294901760
        %3943 = vmatmul.mubr.f32.gmra.mrb[0].mxu0 %v3942
        %v3944 = vpop.f32.mrb[0].mxu0
        %v3945 = vadd.f32 %v3713, %v3944
        %v3946 = vpop.f32.mrb[0].mxu0
        %v3947 = vadd.f32 %v3715, %v3946
        %3948 = vdwg.mxu0
        %v3949 = vand.u32 %v3571, 4294901760
        %v3950 = vsub.f32 %v3571, %v3949
        %3951 = vmatprep.subr.mxu0 %v3950
        %v3952 = vand.u32 %v3570, 4294901760
        %v3953 = vsub.f32 %v3570, %v3952
        %3954 = vmatpush1.msra.mxu0 %v3953
        %v3955 = vand.u32 %v3573, 4294901760
        %v3956 = vsub.f32 %v3573, %v3955
        %3957 = vmatprep.subr.mxu0 %v3956
        %v3958 = vand.u32 %v3572, 4294901760
        %v3959 = vsub.f32 %v3572, %v3958
        %3960 = vmatpush1.msra.mxu0 %v3959
        %v3961 = vand.u32 %v3575, 4294901760
        %v3962 = vsub.f32 %v3575, %v3961
        %3963 = vmatprep.subr.mxu0 %v3962
        %v3964 = vand.u32 %v3574, 4294901760
        %v3965 = vsub.f32 %v3574, %v3964
        %3966 = vmatpush1.msra.mxu0 %v3965
        %v3967 = vand.u32 %v3577, 4294901760
        %v3968 = vsub.f32 %v3577, %v3967
        %3969 = vmatprep.subr.mxu0 %v3968
        %v3970 = vand.u32 %v3576, 4294901760
        %v3971 = vsub.f32 %v3576, %v3970
        %3972 = vmatpush1.msra.mxu0 %v3971
        %v3973 = vand.u32 %v3579, 4294901760
        %v3974 = vsub.f32 %v3579, %v3973
        %3975 = vmatprep.subr.mxu0 %v3974
        %v3976 = vand.u32 %v3578, 4294901760
        %v3977 = vsub.f32 %v3578, %v3976
        %3978 = vmatpush1.msra.mxu0 %v3977
        %v3979 = vand.u32 %v3581, 4294901760
        %v3980 = vsub.f32 %v3581, %v3979
        %3981 = vmatprep.subr.mxu0 %v3980
        %v3982 = vand.u32 %v3580, 4294901760
        %v3983 = vsub.f32 %v3580, %v3982
        %3984 = vmatpush1.msra.mxu0 %v3983
        %v3985 = vand.u32 %v3583, 4294901760
        %v3986 = vsub.f32 %v3583, %v3985
        %3987 = vmatprep.subr.mxu0 %v3986
        %v3988 = vand.u32 %v3582, 4294901760
        %v3989 = vsub.f32 %v3582, %v3988
        %3990 = vmatpush1.msra.mxu0 %v3989
        %v3991 = vand.u32 %v3585, 4294901760
        %v3992 = vsub.f32 %v3585, %v3991
        %3993 = vmatprep.subr.mxu0 %v3992
        %v3994 = vand.u32 %v3584, 4294901760
        %v3995 = vsub.f32 %v3584, %v3994
        %3996 = vmatpush1.msra.mxu0 %v3995
        %v3997 = vand.u32 %v3587, 4294901760
        %v3998 = vsub.f32 %v3587, %v3997
        %3999 = vmatprep.subr.mxu0 %v3998
        %v4000 = vand.u32 %v3586, 4294901760
        %v4001 = vsub.f32 %v3586, %v4000
        %4002 = vmatpush1.msra.mxu0 %v4001
        %v4003 = vand.u32 %v3589, 4294901760
        %v4004 = vsub.f32 %v3589, %v4003
        %4005 = vmatprep.subr.mxu0 %v4004
        %v4006 = vand.u32 %v3588, 4294901760
        %v4007 = vsub.f32 %v3588, %v4006
        %4008 = vmatpush1.msra.mxu0 %v4007
        %v4009 = vand.u32 %v3591, 4294901760
        %v4010 = vsub.f32 %v3591, %v4009
        %4011 = vmatprep.subr.mxu0 %v4010
        %v4012 = vand.u32 %v3590, 4294901760
        %v4013 = vsub.f32 %v3590, %v4012
        %4014 = vmatpush1.msra.mxu0 %v4013
        %v4015 = vand.u32 %v3593, 4294901760
        %v4016 = vsub.f32 %v3593, %v4015
        %4017 = vmatprep.subr.mxu0 %v4016
        %v4018 = vand.u32 %v3592, 4294901760
        %v4019 = vsub.f32 %v3592, %v4018
        %4020 = vmatpush1.msra.mxu0 %v4019
        %v4021 = vand.u32 %v3595, 4294901760
        %v4022 = vsub.f32 %v3595, %v4021
        %4023 = vmatprep.subr.mxu0 %v4022
        %v4024 = vand.u32 %v3594, 4294901760
        %v4025 = vsub.f32 %v3594, %v4024
        %4026 = vmatpush1.msra.mxu0 %v4025
        %v4027 = vand.u32 %v3597, 4294901760
        %v4028 = vsub.f32 %v3597, %v4027
        %4029 = vmatprep.subr.mxu0 %v4028
        %v4030 = vand.u32 %v3596, 4294901760
        %v4031 = vsub.f32 %v3596, %v4030
        %4032 = vmatpush1.msra.mxu0 %v4031
        %v4033 = vand.u32 %v3599, 4294901760
        %v4034 = vsub.f32 %v3599, %v4033
        %4035 = vmatprep.subr.mxu0 %v4034
        %v4036 = vand.u32 %v3598, 4294901760
        %v4037 = vsub.f32 %v3598, %v4036
        %4038 = vmatpush1.msra.mxu0 %v4037
        %v4039 = vand.u32 %v3601, 4294901760
        %v4040 = vsub.f32 %v3601, %v4039
        %4041 = vmatprep.subr.mxu0 %v4040
        %v4042 = vand.u32 %v3600, 4294901760
        %v4043 = vsub.f32 %v3600, %v4042
        %4044 = vmatpush1.msra.mxu0 %v4043
        %4045 = vmatprep.subr.mxu0 0.0
        %4046 = vmatpush1.msra.mxu0 0.0
        %4047 = vmatprep.subr.mxu0 0.0
        %4048 = vmatpush1.msra.mxu0 0.0
        %4049 = vmatprep.subr.mxu0 0.0
        %4050 = vmatpush1.msra.mxu0 0.0
        %4051 = vmatprep.subr.mxu0 0.0
        %4052 = vmatpush1.msra.mxu0 0.0
        %4053 = vmatprep.subr.mxu0 0.0
        %4054 = vmatpush1.msra.mxu0 0.0
        %4055 = vmatprep.subr.mxu0 0.0
        %4056 = vmatpush1.msra.mxu0 0.0
        %4057 = vmatprep.subr.mxu0 0.0
        %4058 = vmatpush1.msra.mxu0 0.0
        %4059 = vmatprep.subr.mxu0 0.0
        %4060 = vmatpush1.msra.mxu0 0.0
        %4061 = vmatprep.subr.mxu0 0.0
        %4062 = vmatpush1.msra.mxu0 0.0
        %4063 = vmatprep.subr.mxu0 0.0
        %4064 = vmatpush1.msra.mxu0 0.0
        %4065 = vmatprep.subr.mxu0 0.0
        %4066 = vmatpush1.msra.mxu0 0.0
        %4067 = vmatprep.subr.mxu0 0.0
        %4068 = vmatpush1.msra.mxu0 0.0
        %4069 = vmatprep.subr.mxu0 0.0
        %4070 = vmatpush1.msra.mxu0 0.0
        %4071 = vmatprep.subr.mxu0 0.0
        %4072 = vmatpush1.msra.mxu0 0.0
        %4073 = vmatprep.subr.mxu0 0.0
        %4074 = vmatpush1.msra.mxu0 0.0
        %4075 = vmatprep.subr.mxu0 0.0
        %4076 = vmatpush1.msra.mxu0 0.0
        %4077 = vmatprep.mubr.f32.mxu0 0.0
        %v4078 = vand.u32 %v3602, 4294901760
        %v4079 = vsub.f32 %v3602, %v4078
        %4080 = vmatmul.mubr.f32.gmra.mrb[0].mxu0 %v4079
        %v4081 = vpop.f32.mrb[0].mxu0
        %v4082 = vadd.f32 %v3945, %v4081
        %v4083 = vpop.f32.mrb[0].mxu0
        %v4084 = vadd.f32 %v3947, %v4083
        %4085 = vdwg.mxu0
        %v4086 = vand.u32 %v3571, 4294901760
        %4087 = vmatprep.subr.mxu0 %v4086
        %v4088 = vand.u32 %v3570, 4294901760
        %4089 = vmatpush1.msra.mxu0 %v4088
        %v4090 = vand.u32 %v3573, 4294901760
        %4091 = vmatprep.subr.mxu0 %v4090
        %v4092 = vand.u32 %v3572, 4294901760
        %4093 = vmatpush1.msra.mxu0 %v4092
        %v4094 = vand.u32 %v3575, 4294901760
        %4095 = vmatprep.subr.mxu0 %v4094
        %v4096 = vand.u32 %v3574, 4294901760
        %4097 = vmatpush1.msra.mxu0 %v4096
        %v4098 = vand.u32 %v3577, 4294901760
        %4099 = vmatprep.subr.mxu0 %v4098
        %v4100 = vand.u32 %v3576, 4294901760
        %4101 = vmatpush1.msra.mxu0 %v4100
        %v4102 = vand.u32 %v3579, 4294901760
        %4103 = vmatprep.subr.mxu0 %v4102
        %v4104 = vand.u32 %v3578, 4294901760
        %4105 = vmatpush1.msra.mxu0 %v4104
        %v4106 = vand.u32 %v3581, 4294901760
        %4107 = vmatprep.subr.mxu0 %v4106
        %v4108 = vand.u32 %v3580, 4294901760
        %4109 = vmatpush1.msra.mxu0 %v4108
        %v4110 = vand.u32 %v3583, 4294901760
        %4111 = vmatprep.subr.mxu0 %v4110
        %v4112 = vand.u32 %v3582, 4294901760
        %4113 = vmatpush1.msra.mxu0 %v4112
        %v4114 = vand.u32 %v3585, 4294901760
        %4115 = vmatprep.subr.mxu0 %v4114
        %v4116 = vand.u32 %v3584, 4294901760
        %4117 = vmatpush1.msra.mxu0 %v4116
        %v4118 = vand.u32 %v3587, 4294901760
        %4119 = vmatprep.subr.mxu0 %v4118
        %v4120 = vand.u32 %v3586, 4294901760
        %4121 = vmatpush1.msra.mxu0 %v4120
        %v4122 = vand.u32 %v3589, 4294901760
        %4123 = vmatprep.subr.mxu0 %v4122
        %v4124 = vand.u32 %v3588, 4294901760
        %4125 = vmatpush1.msra.mxu0 %v4124
        %v4126 = vand.u32 %v3591, 4294901760
        %4127 = vmatprep.subr.mxu0 %v4126
        %v4128 = vand.u32 %v3590, 4294901760
        %4129 = vmatpush1.msra.mxu0 %v4128
        %v4130 = vand.u32 %v3593, 4294901760
        %4131 = vmatprep.subr.mxu0 %v4130
        %v4132 = vand.u32 %v3592, 4294901760
        %4133 = vmatpush1.msra.mxu0 %v4132
        %v4134 = vand.u32 %v3595, 4294901760
        %4135 = vmatprep.subr.mxu0 %v4134
        %v4136 = vand.u32 %v3594, 4294901760
        %4137 = vmatpush1.msra.mxu0 %v4136
        %v4138 = vand.u32 %v3597, 4294901760
        %4139 = vmatprep.subr.mxu0 %v4138
        %v4140 = vand.u32 %v3596, 4294901760
        %4141 = vmatpush1.msra.mxu0 %v4140
        %v4142 = vand.u32 %v3599, 4294901760
        %4143 = vmatprep.subr.mxu0 %v4142
        %v4144 = vand.u32 %v3598, 4294901760
        %4145 = vmatpush1.msra.mxu0 %v4144
        %v4146 = vand.u32 %v3601, 4294901760
        %4147 = vmatprep.subr.mxu0 %v4146
        %v4148 = vand.u32 %v3600, 4294901760
        %4149 = vmatpush1.msra.mxu0 %v4148
        %4150 = vmatprep.subr.mxu0 0.0
        %4151 = vmatpush1.msra.mxu0 0.0
        %4152 = vmatprep.subr.mxu0 0.0
        %4153 = vmatpush1.msra.mxu0 0.0
        %4154 = vmatprep.subr.mxu0 0.0
        %4155 = vmatpush1.msra.mxu0 0.0
        %4156 = vmatprep.subr.mxu0 0.0
        %4157 = vmatpush1.msra.mxu0 0.0
        %4158 = vmatprep.subr.mxu0 0.0
        %4159 = vmatpush1.msra.mxu0 0.0
        %4160 = vmatprep.subr.mxu0 0.0
        %4161 = vmatpush1.msra.mxu0 0.0
        %4162 = vmatprep.subr.mxu0 0.0
        %4163 = vmatpush1.msra.mxu0 0.0
        %4164 = vmatprep.subr.mxu0 0.0
        %4165 = vmatpush1.msra.mxu0 0.0
        %4166 = vmatprep.subr.mxu0 0.0
        %4167 = vmatpush1.msra.mxu0 0.0
        %4168 = vmatprep.subr.mxu0 0.0
        %4169 = vmatpush1.msra.mxu0 0.0
        %4170 = vmatprep.subr.mxu0 0.0
        %4171 = vmatpush1.msra.mxu0 0.0
        %4172 = vmatprep.subr.mxu0 0.0
        %4173 = vmatpush1.msra.mxu0 0.0
        %4174 = vmatprep.subr.mxu0 0.0
        %4175 = vmatpush1.msra.mxu0 0.0
        %4176 = vmatprep.subr.mxu0 0.0
        %4177 = vmatpush1.msra.mxu0 0.0
        %4178 = vmatprep.subr.mxu0 0.0
        %4179 = vmatpush1.msra.mxu0 0.0
        %4180 = vmatprep.subr.mxu0 0.0
        %4181 = vmatpush1.msra.mxu0 0.0
        %4182 = vmatprep.mubr.f32.mxu0 0.0
        %v4183 = vand.u32 %v3602, 4294901760
        %v4184 = vsub.f32 %v3602, %v4183
        %v4185 = vand.u32 %v4184, 4294901760
        %4186 = vmatmul.mubr.f32.gmra.mrb[0].mxu0 %v4185
        %v4187 = vpop.f32.mrb[0].mxu0
        %v4188 = vadd.f32 %v4082, %v4187
        %v4189 = vpop.f32.mrb[0].mxu0
        %v4190 = vadd.f32 %v4084, %v4189
        %4191 = vdwg.mxu0
        %v4192 = vand.u32 %v3571, 4294901760
        %v4193 = vsub.f32 %v3571, %v4192
        %v4194 = vand.u32 %v4193, 4294901760
        %4195 = vmatprep.subr.mxu0 %v4194
        %v4196 = vand.u32 %v3570, 4294901760
        %v4197 = vsub.f32 %v3570, %v4196
        %v4198 = vand.u32 %v4197, 4294901760
        %4199 = vmatpush1.msra.mxu0 %v4198
        %v4200 = vand.u32 %v3573, 4294901760
        %v4201 = vsub.f32 %v3573, %v4200
        %v4202 = vand.u32 %v4201, 4294901760
        %4203 = vmatprep.subr.mxu0 %v4202
        %v4204 = vand.u32 %v3572, 4294901760
        %v4205 = vsub.f32 %v3572, %v4204
        %v4206 = vand.u32 %v4205, 4294901760
        %4207 = vmatpush1.msra.mxu0 %v4206
        %v4208 = vand.u32 %v3575, 4294901760
        %v4209 = vsub.f32 %v3575, %v4208
        %v4210 = vand.u32 %v4209, 4294901760
        %4211 = vmatprep.subr.mxu0 %v4210
        %v4212 = vand.u32 %v3574, 4294901760
        %v4213 = vsub.f32 %v3574, %v4212
        %v4214 = vand.u32 %v4213, 4294901760
        %4215 = vmatpush1.msra.mxu0 %v4214
        %v4216 = vand.u32 %v3577, 4294901760
        %v4217 = vsub.f32 %v3577, %v4216
        %v4218 = vand.u32 %v4217, 4294901760
        %4219 = vmatprep.subr.mxu0 %v4218
        %v4220 = vand.u32 %v3576, 4294901760
        %v4221 = vsub.f32 %v3576, %v4220
        %v4222 = vand.u32 %v4221, 4294901760
        %4223 = vmatpush1.msra.mxu0 %v4222
        %v4224 = vand.u32 %v3579, 4294901760
        %v4225 = vsub.f32 %v3579, %v4224
        %v4226 = vand.u32 %v4225, 4294901760
        %4227 = vmatprep.subr.mxu0 %v4226
        %v4228 = vand.u32 %v3578, 4294901760
        %v4229 = vsub.f32 %v3578, %v4228
        %v4230 = vand.u32 %v4229, 4294901760
        %4231 = vmatpush1.msra.mxu0 %v4230
        %v4232 = vand.u32 %v3581, 4294901760
        %v4233 = vsub.f32 %v3581, %v4232
        %v4234 = vand.u32 %v4233, 4294901760
        %4235 = vmatprep.subr.mxu0 %v4234
        %v4236 = vand.u32 %v3580, 4294901760
        %v4237 = vsub.f32 %v3580, %v4236
        %v4238 = vand.u32 %v4237, 4294901760
        %4239 = vmatpush1.msra.mxu0 %v4238
        %v4240 = vand.u32 %v3583, 4294901760
        %v4241 = vsub.f32 %v3583, %v4240
        %v4242 = vand.u32 %v4241, 4294901760
        %4243 = vmatprep.subr.mxu0 %v4242
        %v4244 = vand.u32 %v3582, 4294901760
        %v4245 = vsub.f32 %v3582, %v4244
        %v4246 = vand.u32 %v4245, 4294901760
        %4247 = vmatpush1.msra.mxu0 %v4246
        %v4248 = vand.u32 %v3585, 4294901760
        %v4249 = vsub.f32 %v3585, %v4248
        %v4250 = vand.u32 %v4249, 4294901760
        %4251 = vmatprep.subr.mxu0 %v4250
        %v4252 = vand.u32 %v3584, 4294901760
        %v4253 = vsub.f32 %v3584, %v4252
        %v4254 = vand.u32 %v4253, 4294901760
        %4255 = vmatpush1.msra.mxu0 %v4254
        %v4256 = vand.u32 %v3587, 4294901760
        %v4257 = vsub.f32 %v3587, %v4256
        %v4258 = vand.u32 %v4257, 4294901760
        %4259 = vmatprep.subr.mxu0 %v4258
        %v4260 = vand.u32 %v3586, 4294901760
        %v4261 = vsub.f32 %v3586, %v4260
        %v4262 = vand.u32 %v4261, 4294901760
        %4263 = vmatpush1.msra.mxu0 %v4262
        %v4264 = vand.u32 %v3589, 4294901760
        %v4265 = vsub.f32 %v3589, %v4264
        %v4266 = vand.u32 %v4265, 4294901760
        %4267 = vmatprep.subr.mxu0 %v4266
        %v4268 = vand.u32 %v3588, 4294901760
        %v4269 = vsub.f32 %v3588, %v4268
        %v4270 = vand.u32 %v4269, 4294901760
        %4271 = vmatpush1.msra.mxu0 %v4270
        %v4272 = vand.u32 %v3591, 4294901760
        %v4273 = vsub.f32 %v3591, %v4272
        %v4274 = vand.u32 %v4273, 4294901760
        %4275 = vmatprep.subr.mxu0 %v4274
        %v4276 = vand.u32 %v3590, 4294901760
        %v4277 = vsub.f32 %v3590, %v4276
        %v4278 = vand.u32 %v4277, 4294901760
        %4279 = vmatpush1.msra.mxu0 %v4278
        %v4280 = vand.u32 %v3593, 4294901760
        %v4281 = vsub.f32 %v3593, %v4280
        %v4282 = vand.u32 %v4281, 4294901760
        %4283 = vmatprep.subr.mxu0 %v4282
        %v4284 = vand.u32 %v3592, 4294901760
        %v4285 = vsub.f32 %v3592, %v4284
        %v4286 = vand.u32 %v4285, 4294901760
        %4287 = vmatpush1.msra.mxu0 %v4286
        %v4288 = vand.u32 %v3595, 4294901760
        %v4289 = vsub.f32 %v3595, %v4288
        %v4290 = vand.u32 %v4289, 4294901760
        %4291 = vmatprep.subr.mxu0 %v4290
        %v4292 = vand.u32 %v3594, 4294901760
        %v4293 = vsub.f32 %v3594, %v4292
        %v4294 = vand.u32 %v4293, 4294901760
        %4295 = vmatpush1.msra.mxu0 %v4294
        %v4296 = vand.u32 %v3597, 4294901760
        %v4297 = vsub.f32 %v3597, %v4296
        %v4298 = vand.u32 %v4297, 4294901760
        %4299 = vmatprep.subr.mxu0 %v4298
        %v4300 = vand.u32 %v3596, 4294901760
        %v4301 = vsub.f32 %v3596, %v4300
        %v4302 = vand.u32 %v4301, 4294901760
        %4303 = vmatpush1.msra.mxu0 %v4302
        %v4304 = vand.u32 %v3599, 4294901760
        %v4305 = vsub.f32 %v3599, %v4304
        %v4306 = vand.u32 %v4305, 4294901760
        %4307 = vmatprep.subr.mxu0 %v4306
        %v4308 = vand.u32 %v3598, 4294901760
        %v4309 = vsub.f32 %v3598, %v4308
        %v4310 = vand.u32 %v4309, 4294901760
        %4311 = vmatpush1.msra.mxu0 %v4310
        %v4312 = vand.u32 %v3601, 4294901760
        %v4313 = vsub.f32 %v3601, %v4312
        %v4314 = vand.u32 %v4313, 4294901760
        %4315 = vmatprep.subr.mxu0 %v4314
        %v4316 = vand.u32 %v3600, 4294901760
        %v4317 = vsub.f32 %v3600, %v4316
        %v4318 = vand.u32 %v4317, 4294901760
        %4319 = vmatpush1.msra.mxu0 %v4318
        %4320 = vmatprep.subr.mxu0 0.0
        %4321 = vmatpush1.msra.mxu0 0.0
        %4322 = vmatprep.subr.mxu0 0.0
        %4323 = vmatpush1.msra.mxu0 0.0
        %4324 = vmatprep.subr.mxu0 0.0
        %4325 = vmatpush1.msra.mxu0 0.0
        %4326 = vmatprep.subr.mxu0 0.0
        %4327 = vmatpush1.msra.mxu0 0.0
        %4328 = vmatprep.subr.mxu0 0.0
        %4329 = vmatpush1.msra.mxu0 0.0
        %4330 = vmatprep.subr.mxu0 0.0
        %4331 = vmatpush1.msra.mxu0 0.0
        %4332 = vmatprep.subr.mxu0 0.0
        %4333 = vmatpush1.msra.mxu0 0.0
        %4334 = vmatprep.subr.mxu0 0.0
        %4335 = vmatpush1.msra.mxu0 0.0
        %4336 = vmatprep.subr.mxu0 0.0
        %4337 = vmatpush1.msra.mxu0 0.0
        %4338 = vmatprep.subr.mxu0 0.0
        %4339 = vmatpush1.msra.mxu0 0.0
        %4340 = vmatprep.subr.mxu0 0.0
        %4341 = vmatpush1.msra.mxu0 0.0
        %4342 = vmatprep.subr.mxu0 0.0
        %4343 = vmatpush1.msra.mxu0 0.0
        %4344 = vmatprep.subr.mxu0 0.0
        %4345 = vmatpush1.msra.mxu0 0.0
        %4346 = vmatprep.subr.mxu0 0.0
        %4347 = vmatpush1.msra.mxu0 0.0
        %4348 = vmatprep.subr.mxu0 0.0
        %4349 = vmatpush1.msra.mxu0 0.0
        %4350 = vmatprep.subr.mxu0 0.0
        %4351 = vmatpush1.msra.mxu0 0.0
        %4352 = vmatprep.mubr.f32.mxu0 0.0
        %v4353 = vand.u32 %v3602, 4294901760
        %4354 = vmatmul.mubr.f32.gmra.mrb[0].mxu0 %v4353
        %v4355 = vpop.f32.mrb[0].mxu0
        %v4356 = vadd.f32 %v4188, %v4355
        %v4357 = vpop.f32.mrb[0].mxu0
        %v4358 = vadd.f32 %v4190, %v4357
        %4359 = vdwg.mxu0
        %v4360 = vand.u32 %v3571, 4294901760
        %4361 = vmatprep.subr.mxu0 %v4360
        %v4362 = vand.u32 %v3570, 4294901760
        %4363 = vmatpush1.msra.mxu0 %v4362
        %v4364 = vand.u32 %v3573, 4294901760
        %4365 = vmatprep.subr.mxu0 %v4364
        %v4366 = vand.u32 %v3572, 4294901760
        %4367 = vmatpush1.msra.mxu0 %v4366
        %v4368 = vand.u32 %v3575, 4294901760
        %4369 = vmatprep.subr.mxu0 %v4368
        %v4370 = vand.u32 %v3574, 4294901760
        %4371 = vmatpush1.msra.mxu0 %v4370
        %v4372 = vand.u32 %v3577, 4294901760
        %4373 = vmatprep.subr.mxu0 %v4372
        %v4374 = vand.u32 %v3576, 4294901760
        %4375 = vmatpush1.msra.mxu0 %v4374
        %v4376 = vand.u32 %v3579, 4294901760
        %4377 = vmatprep.subr.mxu0 %v4376
        %v4378 = vand.u32 %v3578, 4294901760
        %4379 = vmatpush1.msra.mxu0 %v4378
        %v4380 = vand.u32 %v3581, 4294901760
        %4381 = vmatprep.subr.mxu0 %v4380
        %v4382 = vand.u32 %v3580, 4294901760
        %4383 = vmatpush1.msra.mxu0 %v4382
        %v4384 = vand.u32 %v3583, 4294901760
        %4385 = vmatprep.subr.mxu0 %v4384
        %v4386 = vand.u32 %v3582, 4294901760
        %4387 = vmatpush1.msra.mxu0 %v4386
        %v4388 = vand.u32 %v3585, 4294901760
        %4389 = vmatprep.subr.mxu0 %v4388
        %v4390 = vand.u32 %v3584, 4294901760
        %4391 = vmatpush1.msra.mxu0 %v4390
        %v4392 = vand.u32 %v3587, 4294901760
        %4393 = vmatprep.subr.mxu0 %v4392
        %v4394 = vand.u32 %v3586, 4294901760
        %4395 = vmatpush1.msra.mxu0 %v4394
        %v4396 = vand.u32 %v3589, 4294901760
        %4397 = vmatprep.subr.mxu0 %v4396
        %v4398 = vand.u32 %v3588, 4294901760
        %4399 = vmatpush1.msra.mxu0 %v4398
        %v4400 = vand.u32 %v3591, 4294901760
        %4401 = vmatprep.subr.mxu0 %v4400
        %v4402 = vand.u32 %v3590, 4294901760
        %4403 = vmatpush1.msra.mxu0 %v4402
        %v4404 = vand.u32 %v3593, 4294901760
        %4405 = vmatprep.subr.mxu0 %v4404
        %v4406 = vand.u32 %v3592, 4294901760
        %4407 = vmatpush1.msra.mxu0 %v4406
        %v4408 = vand.u32 %v3595, 4294901760
        %4409 = vmatprep.subr.mxu0 %v4408
        %v4410 = vand.u32 %v3594, 4294901760
        %4411 = vmatpush1.msra.mxu0 %v4410
        %v4412 = vand.u32 %v3597, 4294901760
        %4413 = vmatprep.subr.mxu0 %v4412
        %v4414 = vand.u32 %v3596, 4294901760
        %4415 = vmatpush1.msra.mxu0 %v4414
        %v4416 = vand.u32 %v3599, 4294901760
        %4417 = vmatprep.subr.mxu0 %v4416
        %v4418 = vand.u32 %v3598, 4294901760
        %4419 = vmatpush1.msra.mxu0 %v4418
        %v4420 = vand.u32 %v3601, 4294901760
        %4421 = vmatprep.subr.mxu0 %v4420
        %v4422 = vand.u32 %v3600, 4294901760
        %4423 = vmatpush1.msra.mxu0 %v4422
        %4424 = vmatprep.subr.mxu0 0.0
        %4425 = vmatpush1.msra.mxu0 0.0
        %4426 = vmatprep.subr.mxu0 0.0
        %4427 = vmatpush1.msra.mxu0 0.0
        %4428 = vmatprep.subr.mxu0 0.0
        %4429 = vmatpush1.msra.mxu0 0.0
        %4430 = vmatprep.subr.mxu0 0.0
        %4431 = vmatpush1.msra.mxu0 0.0
        %4432 = vmatprep.subr.mxu0 0.0
        %4433 = vmatpush1.msra.mxu0 0.0
        %4434 = vmatprep.subr.mxu0 0.0
        %4435 = vmatpush1.msra.mxu0 0.0
        %4436 = vmatprep.subr.mxu0 0.0
        %4437 = vmatpush1.msra.mxu0 0.0
        %4438 = vmatprep.subr.mxu0 0.0
        %4439 = vmatpush1.msra.mxu0 0.0
        %4440 = vmatprep.subr.mxu0 0.0
        %4441 = vmatpush1.msra.mxu0 0.0
        %4442 = vmatprep.subr.mxu0 0.0
        %4443 = vmatpush1.msra.mxu0 0.0
        %4444 = vmatprep.subr.mxu0 0.0
        %4445 = vmatpush1.msra.mxu0 0.0
        %4446 = vmatprep.subr.mxu0 0.0
        %4447 = vmatpush1.msra.mxu0 0.0
        %4448 = vmatprep.subr.mxu0 0.0
        %4449 = vmatpush1.msra.mxu0 0.0
        %4450 = vmatprep.subr.mxu0 0.0
        %4451 = vmatpush1.msra.mxu0 0.0
        %4452 = vmatprep.subr.mxu0 0.0
        %4453 = vmatpush1.msra.mxu0 0.0
        %4454 = vmatprep.subr.mxu0 0.0
        %4455 = vmatpush1.msra.mxu0 0.0
        %4456 = vmatprep.mubr.f32.mxu0 0.0
        %v4457 = vand.u32 %v3602, 4294901760
        %4458 = vmatmul.mubr.f32.gmra.mrb[0].mxu0 %v4457
        %v4459 = vpop.f32.mrb[0].mxu0
        %v4460 = vadd.f32 %v4356, %v4459
        %v4461 = vpop.f32.mrb[0].mxu0
        %v4462 = vadd.f32 %v4358, %v4461
        %4463 = vdwg.mxu0
        %v4465 = vrot.slane %v4462, 1
        %v4467 = vmul.f32 %v447, %v4465
        %v4468 = vadd.f32 %v4460, %v4467
        %v4469 = vsub.f32 %v4468, %v448
        %4470 = vst [vmem:[%s438] sm:$0x1] %v4469
        %s4471 = sand.u32 %s235, 1
        %s4472 = scalar_lea.sflag [#allocation5], %s4471
        %s4473 = sand.u32 %s235, 1
        %s4474 = scalar_lea.vmem [#allocation4], %s4473
        // Predicated region
        $region133: #{tpu_custom_call.1} parent=123 // pred_check
          %p4475 = pneg %p245
        $region134: #{tpu_custom_call.1} parent=123 // pred_check_branch
          %4477 = sbr.rel (%p4475) target = $region136
        $region135: #{tpu_custom_call.1} parent=123 // pred_region
          %s4479 = ssub.s32 16, 16
          %4480 = vsyncadd %s4472, %s4479
          %s4481 = smul.addr %s23, 16
          %s4482 = scalar_lea.hbm %s9, %s4481
          %s4484 = sshll.u32 %s4474, 4
          %s4485 = int_to_ptr.vmem [resolvable:$true] %s4484
          %4487 = dma.vmem_to_hbm [thread:$0]  %s4485, 16, %s4482, %s4472
        $region136: #{tpu_custom_call.1} parent=123 // pred_fallthru
          _
      $region124: #{tpu_custom_call.1} parent=5 // pred_fallthru
        _
      %p4488 = scmp.le.s32.totalorder 2, %s18
      // Predicated region
      $region137: #{tpu_custom_call.1} parent=5 // pred_check
        %p4489 = pneg %p4488
      $region138: #{tpu_custom_call.1} parent=5 // pred_check_branch
        %4491 = sbr.rel (%p4489) target = $region140
      $region139: #{tpu_custom_call.1} parent=5 // pred_region
        %s4492 = ssub.s32 %s18, 2
        // Predicated region
        $region141: #{tpu_custom_call.1} parent=139 // pred_check
          %p4493 = pneg %p251
        $region142: #{tpu_custom_call.1} parent=139 // pred_check_branch
          %4495 = sbr.rel (%p4493) target = $region144
        $region143: #{tpu_custom_call.1} parent=139 // pred_region
          %s4496 = sand.u32 %s236, 1
          %s4497 = scalar_lea.sflag [#allocation5], %s4496
          %s4498 = sand.u32 %s236, 1
          %s4499 = scalar_lea.vmem [#allocation4], %s4498
          %4500 = dma.done %s4497, 16
        $region144: #{tpu_custom_call.1} parent=139 // pred_fallthru
          _
      $region140: #{tpu_custom_call.1} parent=5 // pred_fallthru
        _
    $region6: #{tpu_custom_call.1} parent=1 // loop_footer
      %s22 = sadd.s32 1, %s18
    $region7: #{tpu_custom_call.1} parent=1 // loop_footer_branch
      %17 = sbr.rel target = $region3
    $region8: #{tpu_custom_call.1} parent=1 // loop_exit
      _
    %4501 = vsyncpa [#allocation5], 1
    %s4502 = scalar_lea.sflag [#allocation5], 1
    %4503 = vsyncpa %s4502, 1

</llo_original>
